<compile_context>
chip_gen: v6e
topology: v6e:2x2x1
jax: 0.10.0
libtpu: 0.0.40
codegen_flags: <defaults>
</compile_context>

<pallas_src>
import functools

import numpy as np

import jax
import jax.numpy as jnp
from jax import lax
from jax.experimental import pallas as pl
from jax.experimental.pallas import tpu as pltpu


def _round_up(x, m):
    return (x + m - 1) // m * m


# ----------------------------------------------------------------------------
# Fused kernel: (Conv3d 3x3x3 pad=1 no-bias + ReLU + GroupNorm) x 2, whole
# batch in one invocation (batch folded into the lane axis).
# ----------------------------------------------------------------------------
def _encoder_kernel(x_ref, tmask_ref, bmask_ref,
                    w1_ref, g1_ref, b1_ref, w2_ref, g2_ref, b2_ref,
                    o_ref, col_ref, *, N, D, H, W, G1, G2, eps):
    """x_ref : (Cin, N*S) pooled input, lane l = n*S + s (S = D*H*W).
    tmask_ref: (27, N*S) f32 per-tap boundary masks (precomputed, tiled over N).
    bmask_ref: (N, N*S)  f32 per-sample lane masks (for GroupNorm stats).
    wX_ref  : (CoutX, kpadX) im2col-packed weights, row-major taps, zero-padded.
    gX/bX   : (CoutX, 1) GroupNorm affine parameters.
    o_ref   : (Cout, N*S) lane-dense output.
    col_ref : (Kmax, N*S) VMEM scratch holding the im2col matrix."""
    S = D * H * W
    NS = N * S

    def conv3x3x3(xin, w_ref):
        cin = xin.shape[0]
        kpad = w_ref.shape[1]
        # Build the im2col matrix: 27 rolled+masked copies of xin stacked along
        # the sublane (K) axis.  Rolls run on the XLU; masks are a single
        # broadcast multiply per tap (precomputed in the wrapper).
        for t in range(27):
            dd, dh, dw = t // 9 - 1, (t // 3) % 3 - 1, t % 3 - 1
            if dd == 0 and dh == 0 and dw == 0:
                xs = xin                                   # center tap: no mask
            else:
                off = dd * H * W + dh * W + dw
                # xs[:, l] = xin[:, (l + off) % NS]; wraps / batch-seam
                # crossings are exactly the lanes tmask zeroes (see header).
                xs = pltpu.roll(xin, (-off) % NS, axis=1) * tmask_ref[t:t + 1, :]
            col_ref[t * cin:(t + 1) * cin, :] = xs
        if kpad > 27 * cin:
            # Zero the padded K rows (their weights are zero; MXU must not see
            # uninitialized VMEM, 0 * NaN would poison the accumulator).
            col_ref[27 * cin:kpad, :] = jnp.zeros((kpad - 27 * cin, NS),
                                                  jnp.float32)
        # Single MXU push per conv: (cout, kpad) @ (kpad, NS).
        return jnp.dot(w_ref[...], col_ref[0:kpad, :],
                       preferred_element_type=jnp.float32)

    def relu_groupnorm(y, g_ref, b_ref, groups):
        cout = y.shape[0]
        gsz = cout // groups
        inv_cnt = 1.0 / float(S * gsz)
        y = jnp.maximum(y, 0.0)                            # ReLU
        ysq = y * y
        gamma = g_ref[...]                                 # (cout, 1)
        beta = b_ref[...]
        if gsz > 1:
            # Group-membership matrix (built once per conv; dead when gsz == 1,
            # as in this configuration).
            gi = lax.broadcasted_iota(jnp.int32, (cout, cout), 0) // gsz
            gj = lax.broadcasted_iota(jnp.int32, (cout, cout), 1) // gsz
            gmat = (gi == gj).astype(jnp.float32)
        scale = jnp.zeros((cout, NS), jnp.float32)
        shift = jnp.zeros((cout, NS), jnp.float32)
        for n in range(N):                                 # per-sample stats
            bm = bmask_ref[n:n + 1, :]                     # (1, NS)
            ch_sum = jnp.sum(y * bm, axis=1, keepdims=True)    # (cout, 1)
            ch_sq = jnp.sum(ysq * bm, axis=1, keepdims=True)
            if gsz > 1:
                ch_sum = jnp.dot(gmat, ch_sum,
                                 preferred_element_type=jnp.float32)
                ch_sq = jnp.dot(gmat, ch_sq,
                                preferred_element_type=jnp.float32)
            mean = ch_sum * inv_cnt
            var = jnp.maximum(ch_sq * inv_cnt - mean * mean, 0.0)
            a = lax.rsqrt(var + eps) * gamma               # (cout, 1)
            scale = scale + a * bm
            shift = shift + (beta - mean * a) * bm
        return y * scale + shift

    x0 = x_ref[...]                                        # (Cin, NS)
    y1 = relu_groupnorm(conv3x3x3(x0, w1_ref), g1_ref, b1_ref, G1)
    y2 = relu_groupnorm(conv3x3x3(y1, w2_ref), g2_ref, b2_ref, G2)
    o_ref[...] = y2


# ----------------------------------------------------------------------------
# Wrapper
# ----------------------------------------------------------------------------
def _tap_masks(D, H, W, N):
    """(27, N*S) f32: 1 where the tap stays inside the (D,H,W) volume."""
    S = D * H * W
    s = np.arange(S)
    d_c, h_c, w_c = s // (H * W), (s // W) % H, s % W
    m = np.zeros((27, S), np.float32)
    for t in range(27):
        dd, dh, dw = t // 9 - 1, (t // 3) % 3 - 1, t % 3 - 1
        m[t] = (((d_c + dd) >= 0) & ((d_c + dd) < D) &
                ((h_c + dh) >= 0) & ((h_c + dh) < H) &
                ((w_c + dw) >= 0) & ((w_c + dw) < W)).astype(np.float32)
    return np.tile(m, (1, N))


def _batch_masks(N, S):
    """(N, N*S) f32: 1 on the lanes belonging to sample n."""
    bm = np.zeros((N, N * S), np.float32)
    for n in range(N):
        bm[n, n * S:(n + 1) * S] = 1.0
    return bm


def _pack_weight(w, kpad):
    """(Co, Ci, 3, 3, 3) OIDHW -> (Co, kpad) with row t*Ci + ci, t = kd*9+kh*3+kw."""
    co, ci = w.shape[0], w.shape[1]
    wf = jnp.transpose(w, (0, 2, 3, 4, 1)).reshape(co, 27 * ci)
    return jnp.pad(wf, ((0, 0), (0, kpad - 27 * ci)))


@functools.partial(jax.jit, static_argnames=("groups1", "groups2"))
def _encoder_impl(x, w1, g1, b1, w2, g2, b2, *, groups1, groups2):
    N, Cin, D, H, W = x.shape
    Do, Ho, Wo = D // 2, H // 2, W // 2
    S = Do * Ho * Wo
    NS = N * S
    Cmid, Cout = w1.shape[0], w2.shape[0]
    kpad1 = _round_up(27 * Cin, 8)
    kpad2 = _round_up(27 * Cmid, 8)
    kmax = max(kpad1, kpad2)

    # MaxPool3d(2,2,2): one cheap XLA reshape+max pass over the only
    # full-resolution tensor.
    pooled = x.reshape(N, Cin, Do, 2, Ho, 2, Wo, 2).max(axis=(3, 5, 7))
    # Fold batch into the lane axis: (Cin, N*S), lane = n*S + s.
    x_cs = jnp.transpose(pooled.reshape(N, Cin, S), (1, 0, 2)).reshape(Cin, NS)

    tmask = jnp.asarray(_tap_masks(Do, Ho, Wo, N))         # compile-time const
    bmask = jnp.asarray(_batch_masks(N, S))                # compile-time const
    w1f = _pack_weight(w1, kpad1)
    w2f = _pack_weight(w2, kpad2)

    kern = functools.partial(_encoder_kernel, N=N, D=Do, H=Ho, W=Wo,
                             G1=groups1, G2=groups2, eps=1e-5)

    out = pl.pallas_call(
        kern,
        out_shape=jax.ShapeDtypeStruct((Cout, NS), jnp.float32),
        in_specs=[pl.BlockSpec(memory_space=pltpu.MemorySpace.VMEM)] * 9,
        out_specs=pl.BlockSpec(memory_space=pltpu.MemorySpace.VMEM),
        scratch_shapes=[pltpu.VMEM((kmax, NS), jnp.float32)],   # im2col scratch
    )(x_cs, tmask, bmask,
      w1f, g1.reshape(Cmid, 1), b1.reshape(Cmid, 1),
      w2f, g2.reshape(Cout, 1), b2.reshape(Cout, 1))

    return jnp.transpose(out.reshape(Cout, N, S), (1, 0, 2)).reshape(
        N, Cout, Do, Ho, Wo)


def encoder_forward(x_ncdhw, p):
    return _encoder_impl(
        x_ncdhw, p["w1"], p["g1"], p["b1"], p["w2"], p["g2"], p["b2"],
        groups1=int(p["groups1"]), groups2=int(p["groups2"]))


# ----------------------------------------------------------------------------
# Pure-JAX reference (for correctness check)
# ----------------------------------------------------------------------------
def _ref_groupnorm(y, gamma, beta, G, eps=1e-5):
    N, C, D, H, W = y.shape
    gs = C // G
    yg = y.reshape(N, G, gs * D * H * W)
    mean = yg.mean(axis=2, keepdims=True)
    var = ((yg - mean) ** 2).mean(axis=2, keepdims=True)
    yn = ((yg - mean) / jnp.sqrt(var + eps)).reshape(N, C, D, H, W)
    return yn * gamma.reshape(1, C, 1, 1, 1) + beta.reshape(1, C, 1, 1, 1)


def encoder_reference(x, p):
    y = lax.reduce_window(x, -jnp.inf, lax.max,
                          (1, 1, 2, 2, 2), (1, 1, 2, 2, 2), "VALID")
    for w, g, b, G in ((p["w1"], p["g1"], p["b1"], p["groups1"]),
                       (p["w2"], p["g2"], p["b2"], p["groups2"])):
        y = lax.conv_general_dilated(
            y, w, (1, 1, 1), ((1, 1), (1, 1), (1, 1)),
            dimension_numbers=("NCDHW", "OIDHW", "NCDHW"))
        y = jnp.maximum(y, 0.0)
        y = _ref_groupnorm(y, g, b, G)
    return y


if __name__ == "__main__":
    # Module config: Encoder(in_channels=4, out_channels=8,
    #                        conv_layer_order='crg', num_groups=8,
    #                        apply_pooling=True)
    N, Cin, D, H, W = 2, 4, 16, 16, 16
    Cout = 8
    Cmid = max(Cout // 2, Cin)           # DoubleConv encoder path -> 4
    groups1 = Cmid if Cmid < 8 else 8    # GroupNorm group clamping -> 4
    groups2 = Cout if Cout < 8 else 8    # -> 8

    key = jax.random.PRNGKey(0)
    ks = jax.random.split(key, 8)
    x = jax.random.normal(ks[0], (N, Cin, D, H, W), jnp.float32)

    params = {
        # PyTorch-native OIDHW conv weights (no bias: order contains 'g').
        "w1": jax.random.normal(ks[1], (Cmid, Cin, 3, 3, 3), jnp.float32)
              * (1.0 / (27 * Cin)) ** 0.5,
        "g1": 1.0 + 0.1 * jax.random.normal(ks[2], (Cmid,), jnp.float32),
        "b1": 0.1 * jax.random.normal(ks[3], (Cmid,), jnp.float32),
        "groups1": groups1,
        "w2": jax.random.normal(ks[4], (Cout, Cmid, 3, 3, 3), jnp.float32)
              * (1.0 / (27 * Cmid)) ** 0.5,
        "g2": 1.0 + 0.1 * jax.random.normal(ks[5], (Cout,), jnp.float32),
        "b2": 0.1 * jax.random.normal(ks[6], (Cout,), jnp.float32),
        "groups2": groups2,
    }

    out = jax.block_until_ready(encoder_forward(x, params))
    assert out.shape == (N, Cout, D // 2, H // 2, W // 2), out.shape

    ref = jax.block_until_ready(encoder_reference(x, params))
    err = float(jnp.max(jnp.abs(out - ref)))
    assert bool(jnp.allclose(out, ref, atol=2e-3, rtol=2e-3)), f"max abs err = {err}"

    print("KERNEL_OK")
</pallas_src>

<mosaic_0001>
module attributes {stable_mosaic.version = 11 : i64} {
  func.func @_encoder_kernel(%arg0: memref<4x1024xf32, #tpu.memory_space<vmem>>, %arg1: memref<27x1024xf32, #tpu.memory_space<vmem>>, %arg2: memref<2x1024xf32, #tpu.memory_space<vmem>>, %arg3: memref<4x112xf32, #tpu.memory_space<vmem>>, %arg4: memref<4x1xf32, #tpu.memory_space<vmem>>, %arg5: memref<4x1xf32, #tpu.memory_space<vmem>>, %arg6: memref<8x112xf32, #tpu.memory_space<vmem>>, %arg7: memref<8x1xf32, #tpu.memory_space<vmem>>, %arg8: memref<8x1xf32, #tpu.memory_space<vmem>>, %arg9: memref<8x1024xf32, #tpu.memory_space<vmem>>, %arg10: memref<112x1024xf32, #tpu.memory_space<vmem>>) attributes {dimension_semantics = [], scalar_prefetch = 0 : i64, scratch_operands = 1 : i64, tpu.core_type = #tpu.core_type<tc>} {
    %c0 = arith.constant 0 : index
    %c0_0 = arith.constant 0 : index
    %0 = vector.load %arg0[%c0, %c0_0] : memref<4x1024xf32, #tpu.memory_space<vmem>>, vector<4x1024xf32>
    %c73_i32 = arith.constant 73 : i32
    %1 = tpu.dynamic_rotate %0 by %c73_i32 dim 1 : vector<4x1024xf32>, i32 -> vector<4x1024xf32>
    %c0_1 = arith.constant 0 : index
    %c0_2 = arith.constant 0 : index
    %2 = vector.load %arg1[%c0_1, %c0_2] : memref<27x1024xf32, #tpu.memory_space<vmem>>, vector<1x1024xf32>
    %3 = vector.broadcast %2 : vector<1x1024xf32> to vector<4x1024xf32>
    %4 = arith.mulf %1, %3 : vector<4x1024xf32>
    %c0_3 = arith.constant 0 : index
    %c0_4 = arith.constant 0 : index
    %5 = vector.load %arg10[%c0_3, %c0_4] : memref<112x1024xf32, #tpu.memory_space<vmem>>, vector<4x1024xf32>
    tpu.vector_store %arg10[%c0_3, %c0_4], %4 {strides = array<i32>} : memref<112x1024xf32, #tpu.memory_space<vmem>>, vector<4x1024xf32>,
    %c72_i32 = arith.constant 72 : i32
    %6 = tpu.dynamic_rotate %0 by %c72_i32 dim 1 : vector<4x1024xf32>, i32 -> vector<4x1024xf32>
    %c1 = arith.constant 1 : index
    %c0_5 = arith.constant 0 : index
    %7 = vector.load %arg1[%c1, %c0_5] : memref<27x1024xf32, #tpu.memory_space<vmem>>, vector<1x1024xf32>
    %8 = vector.broadcast %7 : vector<1x1024xf32> to vector<4x1024xf32>
    %9 = arith.mulf %6, %8 : vector<4x1024xf32>
    %c4 = arith.constant 4 : index
    %c0_6 = arith.constant 0 : index
    %10 = vector.load %arg10[%c4, %c0_6] : memref<112x1024xf32, #tpu.memory_space<vmem>>, vector<4x1024xf32>
    tpu.vector_store %arg10[%c4, %c0_6], %9 {strides = array<i32>} : memref<112x1024xf32, #tpu.memory_space<vmem>>, vector<4x1024xf32>,
    %c71_i32 = arith.constant 71 : i32
    %11 = tpu.dynamic_rotate %0 by %c71_i32 dim 1 : vector<4x1024xf32>, i32 -> vector<4x1024xf32>
    %c2 = arith.constant 2 : index
    %c0_7 = arith.constant 0 : index
    %12 = vector.load %arg1[%c2, %c0_7] : memref<27x1024xf32, #tpu.memory_space<vmem>>, vector<1x1024xf32>
    %13 = vector.broadcast %12 : vector<1x1024xf32> to vector<4x1024xf32>
    %14 = arith.mulf %11, %13 : vector<4x1024xf32>
    %c8 = arith.constant 8 : index
    %c0_8 = arith.constant 0 : index
    %15 = vector.load %arg10[%c8, %c0_8] : memref<112x1024xf32, #tpu.memory_space<vmem>>, vector<4x1024xf32>
    tpu.vector_store %arg10[%c8, %c0_8], %14 {strides = array<i32>} : memref<112x1024xf32, #tpu.memory_space<vmem>>, vector<4x1024xf32>,
    %c65_i32 = arith.constant 65 : i32
    %16 = tpu.dynamic_rotate %0 by %c65_i32 dim 1 : vector<4x1024xf32>, i32 -> vector<4x1024xf32>
    %c3 = arith.constant 3 : index
    %c0_9 = arith.constant 0 : index
    %17 = vector.load %arg1[%c3, %c0_9] : memref<27x1024xf32, #tpu.memory_space<vmem>>, vector<1x1024xf32>
    %18 = vector.broadcast %17 : vector<1x1024xf32> to vector<4x1024xf32>
    %19 = arith.mulf %16, %18 : vector<4x1024xf32>
    %c12 = arith.constant 12 : index
    %c0_10 = arith.constant 0 : index
    %20 = vector.load %arg10[%c12, %c0_10] : memref<112x1024xf32, #tpu.memory_space<vmem>>, vector<4x1024xf32>
    tpu.vector_store %arg10[%c12, %c0_10], %19 {strides = array<i32>} : memref<112x1024xf32, #tpu.memory_space<vmem>>, vector<4x1024xf32>,
    %c64_i32 = arith.constant 64 : i32
    %21 = tpu.dynamic_rotate %0 by %c64_i32 dim 1 : vector<4x1024xf32>, i32 -> vector<4x1024xf32>
    %c4_11 = arith.constant 4 : index
    %c0_12 = arith.constant 0 : index
    %22 = vector.load %arg1[%c4_11, %c0_12] : memref<27x1024xf32, #tpu.memory_space<vmem>>, vector<1x1024xf32>
    %23 = vector.broadcast %22 : vector<1x1024xf32> to vector<4x1024xf32>
    %24 = arith.mulf %21, %23 : vector<4x1024xf32>
    %c16 = arith.constant 16 : index
    %c0_13 = arith.constant 0 : index
    %25 = vector.load %arg10[%c16, %c0_13] : memref<112x1024xf32, #tpu.memory_space<vmem>>, vector<4x1024xf32>
    tpu.vector_store %arg10[%c16, %c0_13], %24 {strides = array<i32>} : memref<112x1024xf32, #tpu.memory_space<vmem>>, vector<4x1024xf32>,
    %c63_i32 = arith.constant 63 : i32
    %26 = tpu.dynamic_rotate %0 by %c63_i32 dim 1 : vector<4x1024xf32>, i32 -> vector<4x1024xf32>
    %c5 = arith.constant 5 : index
    %c0_14 = arith.constant 0 : index
    %27 = vector.load %arg1[%c5, %c0_14] : memref<27x1024xf32, #tpu.memory_space<vmem>>, vector<1x1024xf32>
    %28 = vector.broadcast %27 : vector<1x1024xf32> to vector<4x1024xf32>
    %29 = arith.mulf %26, %28 : vector<4x1024xf32>
    %c20 = arith.constant 20 : index
    %c0_15 = arith.constant 0 : index
    %30 = vector.load %arg10[%c20, %c0_15] : memref<112x1024xf32, #tpu.memory_space<vmem>>, vector<4x1024xf32>
    tpu.vector_store %arg10[%c20, %c0_15], %29 {strides = array<i32>} : memref<112x1024xf32, #tpu.memory_space<vmem>>, vector<4x1024xf32>,
    %c57_i32 = arith.constant 57 : i32
    %31 = tpu.dynamic_rotate %0 by %c57_i32 dim 1 : vector<4x1024xf32>, i32 -> vector<4x1024xf32>
    %c6 = arith.constant 6 : index
    %c0_16 = arith.constant 0 : index
    %32 = vector.load %arg1[%c6, %c0_16] : memref<27x1024xf32, #tpu.memory_space<vmem>>, vector<1x1024xf32>
    %33 = vector.broadcast %32 : vector<1x1024xf32> to vector<4x1024xf32>
    %34 = arith.mulf %31, %33 : vector<4x1024xf32>
    %c24 = arith.constant 24 : index
    %c0_17 = arith.constant 0 : index
    %35 = vector.load %arg10[%c24, %c0_17] : memref<112x1024xf32, #tpu.memory_space<vmem>>, vector<4x1024xf32>
    tpu.vector_store %arg10[%c24, %c0_17], %34 {strides = array<i32>} : memref<112x1024xf32, #tpu.memory_space<vmem>>, vector<4x1024xf32>,
    %c56_i32 = arith.constant 56 : i32
    %36 = tpu.dynamic_rotate %0 by %c56_i32 dim 1 : vector<4x1024xf32>, i32 -> vector<4x1024xf32>
    %c7 = arith.constant 7 : index
    %c0_18 = arith.constant 0 : index
    %37 = vector.load %arg1[%c7, %c0_18] : memref<27x1024xf32, #tpu.memory_space<vmem>>, vector<1x1024xf32>
    %38 = vector.broadcast %37 : vector<1x1024xf32> to vector<4x1024xf32>
    %39 = arith.mulf %36, %38 : vector<4x1024xf32>
    %c28 = arith.constant 28 : index
    %c0_19 = arith.constant 0 : index
    %40 = vector.load %arg10[%c28, %c0_19] : memref<112x1024xf32, #tpu.memory_space<vmem>>, vector<4x1024xf32>
    tpu.vector_store %arg10[%c28, %c0_19], %39 {strides = array<i32>} : memref<112x1024xf32, #tpu.memory_space<vmem>>, vector<4x1024xf32>,
    %c55_i32 = arith.constant 55 : i32
    %41 = tpu.dynamic_rotate %0 by %c55_i32 dim 1 : vector<4x1024xf32>, i32 -> vector<4x1024xf32>
    %c8_20 = arith.constant 8 : index
    %c0_21 = arith.constant 0 : index
    %42 = vector.load %arg1[%c8_20, %c0_21] : memref<27x1024xf32, #tpu.memory_space<vmem>>, vector<1x1024xf32>
    %43 = vector.broadcast %42 : vector<1x1024xf32> to vector<4x1024xf32>
    %44 = arith.mulf %41, %43 : vector<4x1024xf32>
    %c32 = arith.constant 32 : index
    %c0_22 = arith.constant 0 : index
    %45 = vector.load %arg10[%c32, %c0_22] : memref<112x1024xf32, #tpu.memory_space<vmem>>, vector<4x1024xf32>
    tpu.vector_store %arg10[%c32, %c0_22], %44 {strides = array<i32>} : memref<112x1024xf32, #tpu.memory_space<vmem>>, vector<4x1024xf32>,
    %c9_i32 = arith.constant 9 : i32
    %46 = tpu.dynamic_rotate %0 by %c9_i32 dim 1 : vector<4x1024xf32>, i32 -> vector<4x1024xf32>
    %c9 = arith.constant 9 : index
    %c0_23 = arith.constant 0 : index
    %47 = vector.load %arg1[%c9, %c0_23] : memref<27x1024xf32, #tpu.memory_space<vmem>>, vector<1x1024xf32>
    %48 = vector.broadcast %47 : vector<1x1024xf32> to vector<4x1024xf32>
    %49 = arith.mulf %46, %48 : vector<4x1024xf32>
    %c36 = arith.constant 36 : index
    %c0_24 = arith.constant 0 : index
    %50 = vector.load %arg10[%c36, %c0_24] : memref<112x1024xf32, #tpu.memory_space<vmem>>, vector<4x1024xf32>
    tpu.vector_store %arg10[%c36, %c0_24], %49 {strides = array<i32>} : memref<112x1024xf32, #tpu.memory_space<vmem>>, vector<4x1024xf32>,
    %c8_i32 = arith.constant 8 : i32
    %51 = tpu.dynamic_rotate %0 by %c8_i32 dim 1 : vector<4x1024xf32>, i32 -> vector<4x1024xf32>
    %c10 = arith.constant 10 : index
    %c0_25 = arith.constant 0 : index
    %52 = vector.load %arg1[%c10, %c0_25] : memref<27x1024xf32, #tpu.memory_space<vmem>>, vector<1x1024xf32>
    %53 = vector.broadcast %52 : vector<1x1024xf32> to vector<4x1024xf32>
    %54 = arith.mulf %51, %53 : vector<4x1024xf32>
    %c40 = arith.constant 40 : index
    %c0_26 = arith.constant 0 : index
    %55 = vector.load %arg10[%c40, %c0_26] : memref<112x1024xf32, #tpu.memory_space<vmem>>, vector<4x1024xf32>
    tpu.vector_store %arg10[%c40, %c0_26], %54 {strides = array<i32>} : memref<112x1024xf32, #tpu.memory_space<vmem>>, vector<4x1024xf32>,
    %c7_i32 = arith.constant 7 : i32
    %56 = tpu.dynamic_rotate %0 by %c7_i32 dim 1 : vector<4x1024xf32>, i32 -> vector<4x1024xf32>
    %c11 = arith.constant 11 : index
    %c0_27 = arith.constant 0 : index
    %57 = vector.load %arg1[%c11, %c0_27] : memref<27x1024xf32, #tpu.memory_space<vmem>>, vector<1x1024xf32>
    %58 = vector.broadcast %57 : vector<1x1024xf32> to vector<4x1024xf32>
    %59 = arith.mulf %56, %58 : vector<4x1024xf32>
    %c44 = arith.constant 44 : index
    %c0_28 = arith.constant 0 : index
    %60 = vector.load %arg10[%c44, %c0_28] : memref<112x1024xf32, #tpu.memory_space<vmem>>, vector<4x1024xf32>
    tpu.vector_store %arg10[%c44, %c0_28], %59 {strides = array<i32>} : memref<112x1024xf32, #tpu.memory_space<vmem>>, vector<4x1024xf32>,
    %c1_i32 = arith.constant 1 : i32
    %61 = tpu.dynamic_rotate %0 by %c1_i32 dim 1 : vector<4x1024xf32>, i32 -> vector<4x1024xf32>
    %c12_29 = arith.constant 12 : index
    %c0_30 = arith.constant 0 : index
    %62 = vector.load %arg1[%c12_29, %c0_30] : memref<27x1024xf32, #tpu.memory_space<vmem>>, vector<1x1024xf32>
    %63 = vector.broadcast %62 : vector<1x1024xf32> to vector<4x1024xf32>
    %64 = arith.mulf %61, %63 : vector<4x1024xf32>
    %c48 = arith.constant 48 : index
    %c0_31 = arith.constant 0 : index
    %65 = vector.load %arg10[%c48, %c0_31] : memref<112x1024xf32, #tpu.memory_space<vmem>>, vector<4x1024xf32>
    tpu.vector_store %arg10[%c48, %c0_31], %64 {strides = array<i32>} : memref<112x1024xf32, #tpu.memory_space<vmem>>, vector<4x1024xf32>,
    %c52 = arith.constant 52 : index
    %c0_32 = arith.constant 0 : index
    %66 = vector.load %arg10[%c52, %c0_32] : memref<112x1024xf32, #tpu.memory_space<vmem>>, vector<4x1024xf32>
    tpu.vector_store %arg10[%c52, %c0_32], %0 {strides = array<i32>} : memref<112x1024xf32, #tpu.memory_space<vmem>>, vector<4x1024xf32>,
    %c1023_i32 = arith.constant 1023 : i32
    %67 = tpu.dynamic_rotate %0 by %c1023_i32 dim 1 : vector<4x1024xf32>, i32 -> vector<4x1024xf32>
    %c14 = arith.constant 14 : index
    %c0_33 = arith.constant 0 : index
    %68 = vector.load %arg1[%c14, %c0_33] : memref<27x1024xf32, #tpu.memory_space<vmem>>, vector<1x1024xf32>
    %69 = vector.broadcast %68 : vector<1x1024xf32> to vector<4x1024xf32>
    %70 = arith.mulf %67, %69 : vector<4x1024xf32>
    %c56 = arith.constant 56 : index
    %c0_34 = arith.constant 0 : index
    %71 = vector.load %arg10[%c56, %c0_34] : memref<112x1024xf32, #tpu.memory_space<vmem>>, vector<4x1024xf32>
    tpu.vector_store %arg10[%c56, %c0_34], %70 {strides = array<i32>} : memref<112x1024xf32, #tpu.memory_space<vmem>>, vector<4x1024xf32>,
    %c1017_i32 = arith.constant 1017 : i32
    %72 = tpu.dynamic_rotate %0 by %c1017_i32 dim 1 : vector<4x1024xf32>, i32 -> vector<4x1024xf32>
    %c15 = arith.constant 15 : index
    %c0_35 = arith.constant 0 : index
    %73 = vector.load %arg1[%c15, %c0_35] : memref<27x1024xf32, #tpu.memory_space<vmem>>, vector<1x1024xf32>
    %74 = vector.broadcast %73 : vector<1x1024xf32> to vector<4x1024xf32>
    %75 = arith.mulf %72, %74 : vector<4x1024xf32>
    %c60 = arith.constant 60 : index
    %c0_36 = arith.constant 0 : index
    %76 = vector.load %arg10[%c60, %c0_36] : memref<112x1024xf32, #tpu.memory_space<vmem>>, vector<4x1024xf32>
    tpu.vector_store %arg10[%c60, %c0_36], %75 {strides = array<i32>} : memref<112x1024xf32, #tpu.memory_space<vmem>>, vector<4x1024xf32>,
    %c1016_i32 = arith.constant 1016 : i32
    %77 = tpu.dynamic_rotate %0 by %c1016_i32 dim 1 : vector<4x1024xf32>, i32 -> vector<4x1024xf32>
    %c16_37 = arith.constant 16 : index
    %c0_38 = arith.constant 0 : index
    %78 = vector.load %arg1[%c16_37, %c0_38] : memref<27x1024xf32, #tpu.memory_space<vmem>>, vector<1x1024xf32>
    %79 = vector.broadcast %78 : vector<1x1024xf32> to vector<4x1024xf32>
    %80 = arith.mulf %77, %79 : vector<4x1024xf32>
    %c64 = arith.constant 64 : index
    %c0_39 = arith.constant 0 : index
    %81 = vector.load %arg10[%c64, %c0_39] : memref<112x1024xf32, #tpu.memory_space<vmem>>, vector<4x1024xf32>
    tpu.vector_store %arg10[%c64, %c0_39], %80 {strides = array<i32>} : memref<112x1024xf32, #tpu.memory_space<vmem>>, vector<4x1024xf32>,
    %c1015_i32 = arith.constant 1015 : i32
    %82 = tpu.dynamic_rotate %0 by %c1015_i32 dim 1 : vector<4x1024xf32>, i32 -> vector<4x1024xf32>
    %c17 = arith.constant 17 : index
    %c0_40 = arith.constant 0 : index
    %83 = vector.load %arg1[%c17, %c0_40] : memref<27x1024xf32, #tpu.memory_space<vmem>>, vector<1x1024xf32>
    %84 = vector.broadcast %83 : vector<1x1024xf32> to vector<4x1024xf32>
    %85 = arith.mulf %82, %84 : vector<4x1024xf32>
    %c68 = arith.constant 68 : index
    %c0_41 = arith.constant 0 : index
    %86 = vector.load %arg10[%c68, %c0_41] : memref<112x1024xf32, #tpu.memory_space<vmem>>, vector<4x1024xf32>
    tpu.vector_store %arg10[%c68, %c0_41], %85 {strides = array<i32>} : memref<112x1024xf32, #tpu.memory_space<vmem>>, vector<4x1024xf32>,
    %c969_i32 = arith.constant 969 : i32
    %87 = tpu.dynamic_rotate %0 by %c969_i32 dim 1 : vector<4x1024xf32>, i32 -> vector<4x1024xf32>
    %c18 = arith.constant 18 : index
    %c0_42 = arith.constant 0 : index
    %88 = vector.load %arg1[%c18, %c0_42] : memref<27x1024xf32, #tpu.memory_space<vmem>>, vector<1x1024xf32>
    %89 = vector.broadcast %88 : vector<1x1024xf32> to vector<4x1024xf32>
    %90 = arith.mulf %87, %89 : vector<4x1024xf32>
    %c72 = arith.constant 72 : index
    %c0_43 = arith.constant 0 : index
    %91 = vector.load %arg10[%c72, %c0_43] : memref<112x1024xf32, #tpu.memory_space<vmem>>, vector<4x1024xf32>
    tpu.vector_store %arg10[%c72, %c0_43], %90 {strides = array<i32>} : memref<112x1024xf32, #tpu.memory_space<vmem>>, vector<4x1024xf32>,
    %c968_i32 = arith.constant 968 : i32
    %92 = tpu.dynamic_rotate %0 by %c968_i32 dim 1 : vector<4x1024xf32>, i32 -> vector<4x1024xf32>
    %c19 = arith.constant 19 : index
    %c0_44 = arith.constant 0 : index
    %93 = vector.load %arg1[%c19, %c0_44] : memref<27x1024xf32, #tpu.memory_space<vmem>>, vector<1x1024xf32>
    %94 = vector.broadcast %93 : vector<1x1024xf32> to vector<4x1024xf32>
    %95 = arith.mulf %92, %94 : vector<4x1024xf32>
    %c76 = arith.constant 76 : index
    %c0_45 = arith.constant 0 : index
    %96 = vector.load %arg10[%c76, %c0_45] : memref<112x1024xf32, #tpu.memory_space<vmem>>, vector<4x1024xf32>
    tpu.vector_store %arg10[%c76, %c0_45], %95 {strides = array<i32>} : memref<112x1024xf32, #tpu.memory_space<vmem>>, vector<4x1024xf32>,
    %c967_i32 = arith.constant 967 : i32
    %97 = tpu.dynamic_rotate %0 by %c967_i32 dim 1 : vector<4x1024xf32>, i32 -> vector<4x1024xf32>
    %c20_46 = arith.constant 20 : index
    %c0_47 = arith.constant 0 : index
    %98 = vector.load %arg1[%c20_46, %c0_47] : memref<27x1024xf32, #tpu.memory_space<vmem>>, vector<1x1024xf32>
    %99 = vector.broadcast %98 : vector<1x1024xf32> to vector<4x1024xf32>
    %100 = arith.mulf %97, %99 : vector<4x1024xf32>
    %c80 = arith.constant 80 : index
    %c0_48 = arith.constant 0 : index
    %101 = vector.load %arg10[%c80, %c0_48] : memref<112x1024xf32, #tpu.memory_space<vmem>>, vector<4x1024xf32>
    tpu.vector_store %arg10[%c80, %c0_48], %100 {strides = array<i32>} : memref<112x1024xf32, #tpu.memory_space<vmem>>, vector<4x1024xf32>,
    %c961_i32 = arith.constant 961 : i32
    %102 = tpu.dynamic_rotate %0 by %c961_i32 dim 1 : vector<4x1024xf32>, i32 -> vector<4x1024xf32>
    %c21 = arith.constant 21 : index
    %c0_49 = arith.constant 0 : index
    %103 = vector.load %arg1[%c21, %c0_49] : memref<27x1024xf32, #tpu.memory_space<vmem>>, vector<1x1024xf32>
    %104 = vector.broadcast %103 : vector<1x1024xf32> to vector<4x1024xf32>
    %105 = arith.mulf %102, %104 : vector<4x1024xf32>
    %c84 = arith.constant 84 : index
    %c0_50 = arith.constant 0 : index
    %106 = vector.load %arg10[%c84, %c0_50] : memref<112x1024xf32, #tpu.memory_space<vmem>>, vector<4x1024xf32>
    tpu.vector_store %arg10[%c84, %c0_50], %105 {strides = array<i32>} : memref<112x1024xf32, #tpu.memory_space<vmem>>, vector<4x1024xf32>,
    %c960_i32 = arith.constant 960 : i32
    %107 = tpu.dynamic_rotate %0 by %c960_i32 dim 1 : vector<4x1024xf32>, i32 -> vector<4x1024xf32>
    %c22 = arith.constant 22 : index
    %c0_51 = arith.constant 0 : index
    %108 = vector.load %arg1[%c22, %c0_51] : memref<27x1024xf32, #tpu.memory_space<vmem>>, vector<1x1024xf32>
    %109 = vector.broadcast %108 : vector<1x1024xf32> to vector<4x1024xf32>
    %110 = arith.mulf %107, %109 : vector<4x1024xf32>
    %c88 = arith.constant 88 : index
    %c0_52 = arith.constant 0 : index
    %111 = vector.load %arg10[%c88, %c0_52] : memref<112x1024xf32, #tpu.memory_space<vmem>>, vector<4x1024xf32>
    tpu.vector_store %arg10[%c88, %c0_52], %110 {strides = array<i32>} : memref<112x1024xf32, #tpu.memory_space<vmem>>, vector<4x1024xf32>,
    %c959_i32 = arith.constant 959 : i32
    %112 = tpu.dynamic_rotate %0 by %c959_i32 dim 1 : vector<4x1024xf32>, i32 -> vector<4x1024xf32>
    %c23 = arith.constant 23 : index
    %c0_53 = arith.constant 0 : index
    %113 = vector.load %arg1[%c23, %c0_53] : memref<27x1024xf32, #tpu.memory_space<vmem>>, vector<1x1024xf32>
    %114 = vector.broadcast %113 : vector<1x1024xf32> to vector<4x1024xf32>
    %115 = arith.mulf %112, %114 : vector<4x1024xf32>
    %c92 = arith.constant 92 : index
    %c0_54 = arith.constant 0 : index
    %116 = vector.load %arg10[%c92, %c0_54] : memref<112x1024xf32, #tpu.memory_space<vmem>>, vector<4x1024xf32>
    tpu.vector_store %arg10[%c92, %c0_54], %115 {strides = array<i32>} : memref<112x1024xf32, #tpu.memory_space<vmem>>, vector<4x1024xf32>,
    %c953_i32 = arith.constant 953 : i32
    %117 = tpu.dynamic_rotate %0 by %c953_i32 dim 1 : vector<4x1024xf32>, i32 -> vector<4x1024xf32>
    %c24_55 = arith.constant 24 : index
    %c0_56 = arith.constant 0 : index
    %118 = vector.load %arg1[%c24_55, %c0_56] : memref<27x1024xf32, #tpu.memory_space<vmem>>, vector<1x1024xf32>
    %119 = vector.broadcast %118 : vector<1x1024xf32> to vector<4x1024xf32>
    %120 = arith.mulf %117, %119 : vector<4x1024xf32>
    %c96 = arith.constant 96 : index
    %c0_57 = arith.constant 0 : index
    %121 = vector.load %arg10[%c96, %c0_57] : memref<112x1024xf32, #tpu.memory_space<vmem>>, vector<4x1024xf32>
    tpu.vector_store %arg10[%c96, %c0_57], %120 {strides = array<i32>} : memref<112x1024xf32, #tpu.memory_space<vmem>>, vector<4x1024xf32>,
    %c952_i32 = arith.constant 952 : i32
    %122 = tpu.dynamic_rotate %0 by %c952_i32 dim 1 : vector<4x1024xf32>, i32 -> vector<4x1024xf32>
    %c25 = arith.constant 25 : index
    %c0_58 = arith.constant 0 : index
    %123 = vector.load %arg1[%c25, %c0_58] : memref<27x1024xf32, #tpu.memory_space<vmem>>, vector<1x1024xf32>
    %124 = vector.broadcast %123 : vector<1x1024xf32> to vector<4x1024xf32>
    %125 = arith.mulf %122, %124 : vector<4x1024xf32>
    %c100 = arith.constant 100 : index
    %c0_59 = arith.constant 0 : index
    %126 = vector.load %arg10[%c100, %c0_59] : memref<112x1024xf32, #tpu.memory_space<vmem>>, vector<4x1024xf32>
    tpu.vector_store %arg10[%c100, %c0_59], %125 {strides = array<i32>} : memref<112x1024xf32, #tpu.memory_space<vmem>>, vector<4x1024xf32>,
    %c951_i32 = arith.constant 951 : i32
    %127 = tpu.dynamic_rotate %0 by %c951_i32 dim 1 : vector<4x1024xf32>, i32 -> vector<4x1024xf32>
    %c26 = arith.constant 26 : index
    %c0_60 = arith.constant 0 : index
    %128 = vector.load %arg1[%c26, %c0_60] : memref<27x1024xf32, #tpu.memory_space<vmem>>, vector<1x1024xf32>
    %129 = vector.broadcast %128 : vector<1x1024xf32> to vector<4x1024xf32>
    %130 = arith.mulf %127, %129 : vector<4x1024xf32>
    %c104 = arith.constant 104 : index
    %c0_61 = arith.constant 0 : index
    %131 = vector.load %arg10[%c104, %c0_61] : memref<112x1024xf32, #tpu.memory_space<vmem>>, vector<4x1024xf32>
    tpu.vector_store %arg10[%c104, %c0_61], %130 {strides = array<i32>} : memref<112x1024xf32, #tpu.memory_space<vmem>>, vector<4x1024xf32>,
    %cst = arith.constant 0.000000e+00 : f32
    %132 = vector.broadcast %cst : f32 to vector<4x1024xf32>
    %c108 = arith.constant 108 : index
    %c0_62 = arith.constant 0 : index
    %133 = vector.load %arg10[%c108, %c0_62] : memref<112x1024xf32, #tpu.memory_space<vmem>>, vector<4x1024xf32>
    tpu.vector_store %arg10[%c108, %c0_62], %132 {strides = array<i32>} : memref<112x1024xf32, #tpu.memory_space<vmem>>, vector<4x1024xf32>,
    %c0_63 = arith.constant 0 : index
    %c0_64 = arith.constant 0 : index
    %134 = vector.load %arg3[%c0_63, %c0_64] : memref<4x112xf32, #tpu.memory_space<vmem>>, vector<4x112xf32>
    %c0_65 = arith.constant 0 : index
    %c0_66 = arith.constant 0 : index
    %135 = vector.load %arg10[%c0_65, %c0_66] : memref<112x1024xf32, #tpu.memory_space<vmem>>, vector<112x1024xf32>
    %cst_67 = arith.constant dense<0.000000e+00> : vector<4x1024xf32>
    %136 = tpu.matmul %134, %135, %cst_67 {dimension_numbers = #tpu.dot_dimension_numbers<[1], [0], [0], [1], [0, 0, 1, 1], [], []>} : vector<4x112xf32>, vector<112x1024xf32>, vector<4x1024xf32> -> vector<4x1024xf32>
    %cst_68 = arith.constant 0.000000e+00 : f32
    %137 = vector.broadcast %cst_68 : f32 to vector<4x1024xf32>
    %138 = arith.maximumf %136, %137 : vector<4x1024xf32>
    %139 = arith.mulf %138, %138 : vector<4x1024xf32>
    %c0_69 = arith.constant 0 : index
    %c0_70 = arith.constant 0 : index
    %140 = vector.load %arg4[%c0_69, %c0_70] : memref<4x1xf32, #tpu.memory_space<vmem>>, vector<4x1xf32>
    %c0_71 = arith.constant 0 : index
    %c0_72 = arith.constant 0 : index
    %141 = vector.load %arg5[%c0_71, %c0_72] : memref<4x1xf32, #tpu.memory_space<vmem>>, vector<4x1xf32>
    %cst_73 = arith.constant 0.000000e+00 : f32
    %142 = vector.broadcast %cst_73 : f32 to vector<4x1024xf32>
    %cst_74 = arith.constant 0.000000e+00 : f32
    %143 = vector.broadcast %cst_74 : f32 to vector<4x1024xf32>
    %c0_75 = arith.constant 0 : index
    %c0_76 = arith.constant 0 : index
    %144 = vector.load %arg2[%c0_75, %c0_76] : memref<2x1024xf32, #tpu.memory_space<vmem>>, vector<1x1024xf32>
    %145 = vector.broadcast %144 : vector<1x1024xf32> to vector<4x1024xf32>
    %146 = arith.mulf %138, %145 : vector<4x1024xf32>
    %cst_77 = arith.constant dense<0.000000e+00> : vector<4xf32>
    %147 = vector.multi_reduction <add>, %146, %cst_77 [1] : vector<4x1024xf32> to vector<4xf32>
    %148 = vector.shape_cast %147 : vector<4xf32> to vector<4x1xf32>
    %149 = vector.broadcast %144 : vector<1x1024xf32> to vector<4x1024xf32>
    %150 = arith.mulf %139, %149 : vector<4x1024xf32>
    %cst_78 = arith.constant dense<0.000000e+00> : vector<4xf32>
    %151 = vector.multi_reduction <add>, %150, %cst_78 [1] : vector<4x1024xf32> to vector<4xf32>
    %152 = vector.shape_cast %151 : vector<4xf32> to vector<4x1xf32>
    %cst_79 = arith.constant 0.001953125 : f32
    %153 = vector.broadcast %cst_79 : f32 to vector<4x1xf32>
    %154 = arith.mulf %148, %153 : vector<4x1xf32>
    %cst_80 = arith.constant 0.001953125 : f32
    %155 = vector.broadcast %cst_80 : f32 to vector<4x1xf32>
    %156 = arith.mulf %152, %155 : vector<4x1xf32>
    %157 = arith.mulf %154, %154 : vector<4x1xf32>
    %158 = arith.subf %156, %157 : vector<4x1xf32>
    %cst_81 = arith.constant 0.000000e+00 : f32
    %159 = vector.broadcast %cst_81 : f32 to vector<4x1xf32>
    %160 = arith.maximumf %158, %159 : vector<4x1xf32>
    %cst_82 = arith.constant 9.99999974E-6 : f32
    %161 = vector.broadcast %cst_82 : f32 to vector<4x1xf32>
    %162 = arith.addf %160, %161 : vector<4x1xf32>
    %163 = math.rsqrt %162 : vector<4x1xf32>
    %164 = arith.mulf %163, %140 : vector<4x1xf32>
    %165 = vector.broadcast %164 : vector<4x1xf32> to vector<4x1024xf32>
    %166 = vector.broadcast %144 : vector<1x1024xf32> to vector<4x1024xf32>
    %167 = arith.mulf %165, %166 : vector<4x1024xf32>
    %168 = arith.addf %142, %167 : vector<4x1024xf32>
    %169 = arith.mulf %154, %164 : vector<4x1xf32>
    %170 = arith.subf %141, %169 : vector<4x1xf32>
    %171 = vector.broadcast %170 : vector<4x1xf32> to vector<4x1024xf32>
    %172 = vector.broadcast %144 : vector<1x1024xf32> to vector<4x1024xf32>
    %173 = arith.mulf %171, %172 : vector<4x1024xf32>
    %174 = arith.addf %143, %173 : vector<4x1024xf32>
    %c1_83 = arith.constant 1 : index
    %c0_84 = arith.constant 0 : index
    %175 = vector.load %arg2[%c1_83, %c0_84] : memref<2x1024xf32, #tpu.memory_space<vmem>>, vector<1x1024xf32>
    %176 = vector.broadcast %175 : vector<1x1024xf32> to vector<4x1024xf32>
    %177 = arith.mulf %138, %176 : vector<4x1024xf32>
    %cst_85 = arith.constant dense<0.000000e+00> : vector<4xf32>
    %178 = vector.multi_reduction <add>, %177, %cst_85 [1] : vector<4x1024xf32> to vector<4xf32>
    %179 = vector.shape_cast %178 : vector<4xf32> to vector<4x1xf32>
    %180 = vector.broadcast %175 : vector<1x1024xf32> to vector<4x1024xf32>
    %181 = arith.mulf %139, %180 : vector<4x1024xf32>
    %cst_86 = arith.constant dense<0.000000e+00> : vector<4xf32>
    %182 = vector.multi_reduction <add>, %181, %cst_86 [1] : vector<4x1024xf32> to vector<4xf32>
    %183 = vector.shape_cast %182 : vector<4xf32> to vector<4x1xf32>
    %cst_87 = arith.constant 0.001953125 : f32
    %184 = vector.broadcast %cst_87 : f32 to vector<4x1xf32>
    %185 = arith.mulf %179, %184 : vector<4x1xf32>
    %cst_88 = arith.constant 0.001953125 : f32
    %186 = vector.broadcast %cst_88 : f32 to vector<4x1xf32>
    %187 = arith.mulf %183, %186 : vector<4x1xf32>
    %188 = arith.mulf %185, %185 : vector<4x1xf32>
    %189 = arith.subf %187, %188 : vector<4x1xf32>
    %cst_89 = arith.constant 0.000000e+00 : f32
    %190 = vector.broadcast %cst_89 : f32 to vector<4x1xf32>
    %191 = arith.maximumf %189, %190 : vector<4x1xf32>
    %cst_90 = arith.constant 9.99999974E-6 : f32
    %192 = vector.broadcast %cst_90 : f32 to vector<4x1xf32>
    %193 = arith.addf %191, %192 : vector<4x1xf32>
    %194 = math.rsqrt %193 : vector<4x1xf32>
    %195 = arith.mulf %194, %140 : vector<4x1xf32>
    %196 = vector.broadcast %195 : vector<4x1xf32> to vector<4x1024xf32>
    %197 = vector.broadcast %175 : vector<1x1024xf32> to vector<4x1024xf32>
    %198 = arith.mulf %196, %197 : vector<4x1024xf32>
    %199 = arith.addf %168, %198 : vector<4x1024xf32>
    %200 = arith.mulf %185, %195 : vector<4x1xf32>
    %201 = arith.subf %141, %200 : vector<4x1xf32>
    %202 = vector.broadcast %201 : vector<4x1xf32> to vector<4x1024xf32>
    %203 = vector.broadcast %175 : vector<1x1024xf32> to vector<4x1024xf32>
    %204 = arith.mulf %202, %203 : vector<4x1024xf32>
    %205 = arith.addf %174, %204 : vector<4x1024xf32>
    %206 = arith.mulf %138, %199 : vector<4x1024xf32>
    %207 = arith.addf %206, %205 : vector<4x1024xf32>
    %c73_i32_91 = arith.constant 73 : i32
    %208 = tpu.dynamic_rotate %207 by %c73_i32_91 dim 1 : vector<4x1024xf32>, i32 -> vector<4x1024xf32>
    %c0_92 = arith.constant 0 : index
    %c0_93 = arith.constant 0 : index
    %209 = vector.load %arg1[%c0_92, %c0_93] : memref<27x1024xf32, #tpu.memory_space<vmem>>, vector<1x1024xf32>
    %210 = vector.broadcast %209 : vector<1x1024xf32> to vector<4x1024xf32>
    %211 = arith.mulf %208, %210 : vector<4x1024xf32>
    %c0_94 = arith.constant 0 : index
    %c0_95 = arith.constant 0 : index
    %212 = vector.load %arg10[%c0_94, %c0_95] : memref<112x1024xf32, #tpu.memory_space<vmem>>, vector<4x1024xf32>
    tpu.vector_store %arg10[%c0_94, %c0_95], %211 {strides = array<i32>} : memref<112x1024xf32, #tpu.memory_space<vmem>>, vector<4x1024xf32>,
    %c72_i32_96 = arith.constant 72 : i32
    %213 = tpu.dynamic_rotate %207 by %c72_i32_96 dim 1 : vector<4x1024xf32>, i32 -> vector<4x1024xf32>
    %c1_97 = arith.constant 1 : index
    %c0_98 = arith.constant 0 : index
    %214 = vector.load %arg1[%c1_97, %c0_98] : memref<27x1024xf32, #tpu.memory_space<vmem>>, vector<1x1024xf32>
    %215 = vector.broadcast %214 : vector<1x1024xf32> to vector<4x1024xf32>
    %216 = arith.mulf %213, %215 : vector<4x1024xf32>
    %c4_99 = arith.constant 4 : index
    %c0_100 = arith.constant 0 : index
    %217 = vector.load %arg10[%c4_99, %c0_100] : memref<112x1024xf32, #tpu.memory_space<vmem>>, vector<4x1024xf32>
    tpu.vector_store %arg10[%c4_99, %c0_100], %216 {strides = array<i32>} : memref<112x1024xf32, #tpu.memory_space<vmem>>, vector<4x1024xf32>,
    %c71_i32_101 = arith.constant 71 : i32
    %218 = tpu.dynamic_rotate %207 by %c71_i32_101 dim 1 : vector<4x1024xf32>, i32 -> vector<4x1024xf32>
    %c2_102 = arith.constant 2 : index
    %c0_103 = arith.constant 0 : index
    %219 = vector.load %arg1[%c2_102, %c0_103] : memref<27x1024xf32, #tpu.memory_space<vmem>>, vector<1x1024xf32>
    %220 = vector.broadcast %219 : vector<1x1024xf32> to vector<4x1024xf32>
    %221 = arith.mulf %218, %220 : vector<4x1024xf32>
    %c8_104 = arith.constant 8 : index
    %c0_105 = arith.constant 0 : index
    %222 = vector.load %arg10[%c8_104, %c0_105] : memref<112x1024xf32, #tpu.memory_space<vmem>>, vector<4x1024xf32>
    tpu.vector_store %arg10[%c8_104, %c0_105], %221 {strides = array<i32>} : memref<112x1024xf32, #tpu.memory_space<vmem>>, vector<4x1024xf32>,
    %c65_i32_106 = arith.constant 65 : i32
    %223 = tpu.dynamic_rotate %207 by %c65_i32_106 dim 1 : vector<4x1024xf32>, i32 -> vector<4x1024xf32>
    %c3_107 = arith.constant 3 : index
    %c0_108 = arith.constant 0 : index
    %224 = vector.load %arg1[%c3_107, %c0_108] : memref<27x1024xf32, #tpu.memory_space<vmem>>, vector<1x1024xf32>
    %225 = vector.broadcast %224 : vector<1x1024xf32> to vector<4x1024xf32>
    %226 = arith.mulf %223, %225 : vector<4x1024xf32>
    %c12_109 = arith.constant 12 : index
    %c0_110 = arith.constant 0 : index
    %227 = vector.load %arg10[%c12_109, %c0_110] : memref<112x1024xf32, #tpu.memory_space<vmem>>, vector<4x1024xf32>
    tpu.vector_store %arg10[%c12_109, %c0_110], %226 {strides = array<i32>} : memref<112x1024xf32, #tpu.memory_space<vmem>>, vector<4x1024xf32>,
    %c64_i32_111 = arith.constant 64 : i32
    %228 = tpu.dynamic_rotate %207 by %c64_i32_111 dim 1 : vector<4x1024xf32>, i32 -> vector<4x1024xf32>
    %c4_112 = arith.constant 4 : index
    %c0_113 = arith.constant 0 : index
    %229 = vector.load %arg1[%c4_112, %c0_113] : memref<27x1024xf32, #tpu.memory_space<vmem>>, vector<1x1024xf32>
    %230 = vector.broadcast %229 : vector<1x1024xf32> to vector<4x1024xf32>
    %231 = arith.mulf %228, %230 : vector<4x1024xf32>
    %c16_114 = arith.constant 16 : index
    %c0_115 = arith.constant 0 : index
    %232 = vector.load %arg10[%c16_114, %c0_115] : memref<112x1024xf32, #tpu.memory_space<vmem>>, vector<4x1024xf32>
    tpu.vector_store %arg10[%c16_114, %c0_115], %231 {strides = array<i32>} : memref<112x1024xf32, #tpu.memory_space<vmem>>, vector<4x1024xf32>,
    %c63_i32_116 = arith.constant 63 : i32
    %233 = tpu.dynamic_rotate %207 by %c63_i32_116 dim 1 : vector<4x1024xf32>, i32 -> vector<4x1024xf32>
    %c5_117 = arith.constant 5 : index
    %c0_118 = arith.constant 0 : index
    %234 = vector.load %arg1[%c5_117, %c0_118] : memref<27x1024xf32, #tpu.memory_space<vmem>>, vector<1x1024xf32>
    %235 = vector.broadcast %234 : vector<1x1024xf32> to vector<4x1024xf32>
    %236 = arith.mulf %233, %235 : vector<4x1024xf32>
    %c20_119 = arith.constant 20 : index
    %c0_120 = arith.constant 0 : index
    %237 = vector.load %arg10[%c20_119, %c0_120] : memref<112x1024xf32, #tpu.memory_space<vmem>>, vector<4x1024xf32>
    tpu.vector_store %arg10[%c20_119, %c0_120], %236 {strides = array<i32>} : memref<112x1024xf32, #tpu.memory_space<vmem>>, vector<4x1024xf32>,
    %c57_i32_121 = arith.constant 57 : i32
    %238 = tpu.dynamic_rotate %207 by %c57_i32_121 dim 1 : vector<4x1024xf32>, i32 -> vector<4x1024xf32>
    %c6_122 = arith.constant 6 : index
    %c0_123 = arith.constant 0 : index
    %239 = vector.load %arg1[%c6_122, %c0_123] : memref<27x1024xf32, #tpu.memory_space<vmem>>, vector<1x1024xf32>
    %240 = vector.broadcast %239 : vector<1x1024xf32> to vector<4x1024xf32>
    %241 = arith.mulf %238, %240 : vector<4x1024xf32>
    %c24_124 = arith.constant 24 : index
    %c0_125 = arith.constant 0 : index
    %242 = vector.load %arg10[%c24_124, %c0_125] : memref<112x1024xf32, #tpu.memory_space<vmem>>, vector<4x1024xf32>
    tpu.vector_store %arg10[%c24_124, %c0_125], %241 {strides = array<i32>} : memref<112x1024xf32, #tpu.memory_space<vmem>>, vector<4x1024xf32>,
    %c56_i32_126 = arith.constant 56 : i32
    %243 = tpu.dynamic_rotate %207 by %c56_i32_126 dim 1 : vector<4x1024xf32>, i32 -> vector<4x1024xf32>
    %c7_127 = arith.constant 7 : index
    %c0_128 = arith.constant 0 : index
    %244 = vector.load %arg1[%c7_127, %c0_128] : memref<27x1024xf32, #tpu.memory_space<vmem>>, vector<1x1024xf32>
    %245 = vector.broadcast %244 : vector<1x1024xf32> to vector<4x1024xf32>
    %246 = arith.mulf %243, %245 : vector<4x1024xf32>
    %c28_129 = arith.constant 28 : index
    %c0_130 = arith.constant 0 : index
    %247 = vector.load %arg10[%c28_129, %c0_130] : memref<112x1024xf32, #tpu.memory_space<vmem>>, vector<4x1024xf32>
    tpu.vector_store %arg10[%c28_129, %c0_130], %246 {strides = array<i32>} : memref<112x1024xf32, #tpu.memory_space<vmem>>, vector<4x1024xf32>,
    %c55_i32_131 = arith.constant 55 : i32
    %248 = tpu.dynamic_rotate %207 by %c55_i32_131 dim 1 : vector<4x1024xf32>, i32 -> vector<4x1024xf32>
    %c8_132 = arith.constant 8 : index
    %c0_133 = arith.constant 0 : index
    %249 = vector.load %arg1[%c8_132, %c0_133] : memref<27x1024xf32, #tpu.memory_space<vmem>>, vector<1x1024xf32>
    %250 = vector.broadcast %249 : vector<1x1024xf32> to vector<4x1024xf32>
    %251 = arith.mulf %248, %250 : vector<4x1024xf32>
    %c32_134 = arith.constant 32 : index
    %c0_135 = arith.constant 0 : index
    %252 = vector.load %arg10[%c32_134, %c0_135] : memref<112x1024xf32, #tpu.memory_space<vmem>>, vector<4x1024xf32>
    tpu.vector_store %arg10[%c32_134, %c0_135], %251 {strides = array<i32>} : memref<112x1024xf32, #tpu.memory_space<vmem>>, vector<4x1024xf32>,
    %c9_i32_136 = arith.constant 9 : i32
    %253 = tpu.dynamic_rotate %207 by %c9_i32_136 dim 1 : vector<4x1024xf32>, i32 -> vector<4x1024xf32>
    %c9_137 = arith.constant 9 : index
    %c0_138 = arith.constant 0 : index
    %254 = vector.load %arg1[%c9_137, %c0_138] : memref<27x1024xf32, #tpu.memory_space<vmem>>, vector<1x1024xf32>
    %255 = vector.broadcast %254 : vector<1x1024xf32> to vector<4x1024xf32>
    %256 = arith.mulf %253, %255 : vector<4x1024xf32>
    %c36_139 = arith.constant 36 : index
    %c0_140 = arith.constant 0 : index
    %257 = vector.load %arg10[%c36_139, %c0_140] : memref<112x1024xf32, #tpu.memory_space<vmem>>, vector<4x1024xf32>
    tpu.vector_store %arg10[%c36_139, %c0_140], %256 {strides = array<i32>} : memref<112x1024xf32, #tpu.memory_space<vmem>>, vector<4x1024xf32>,
    %c8_i32_141 = arith.constant 8 : i32
    %258 = tpu.dynamic_rotate %207 by %c8_i32_141 dim 1 : vector<4x1024xf32>, i32 -> vector<4x1024xf32>
    %c10_142 = arith.constant 10 : index
    %c0_143 = arith.constant 0 : index
    %259 = vector.load %arg1[%c10_142, %c0_143] : memref<27x1024xf32, #tpu.memory_space<vmem>>, vector<1x1024xf32>
    %260 = vector.broadcast %259 : vector<1x1024xf32> to vector<4x1024xf32>
    %261 = arith.mulf %258, %260 : vector<4x1024xf32>
    %c40_144 = arith.constant 40 : index
    %c0_145 = arith.constant 0 : index
    %262 = vector.load %arg10[%c40_144, %c0_145] : memref<112x1024xf32, #tpu.memory_space<vmem>>, vector<4x1024xf32>
    tpu.vector_store %arg10[%c40_144, %c0_145], %261 {strides = array<i32>} : memref<112x1024xf32, #tpu.memory_space<vmem>>, vector<4x1024xf32>,
    %c7_i32_146 = arith.constant 7 : i32
    %263 = tpu.dynamic_rotate %207 by %c7_i32_146 dim 1 : vector<4x1024xf32>, i32 -> vector<4x1024xf32>
    %c11_147 = arith.constant 11 : index
    %c0_148 = arith.constant 0 : index
    %264 = vector.load %arg1[%c11_147, %c0_148] : memref<27x1024xf32, #tpu.memory_space<vmem>>, vector<1x1024xf32>
    %265 = vector.broadcast %264 : vector<1x1024xf32> to vector<4x1024xf32>
    %266 = arith.mulf %263, %265 : vector<4x1024xf32>
    %c44_149 = arith.constant 44 : index
    %c0_150 = arith.constant 0 : index
    %267 = vector.load %arg10[%c44_149, %c0_150] : memref<112x1024xf32, #tpu.memory_space<vmem>>, vector<4x1024xf32>
    tpu.vector_store %arg10[%c44_149, %c0_150], %266 {strides = array<i32>} : memref<112x1024xf32, #tpu.memory_space<vmem>>, vector<4x1024xf32>,
    %c1_i32_151 = arith.constant 1 : i32
    %268 = tpu.dynamic_rotate %207 by %c1_i32_151 dim 1 : vector<4x1024xf32>, i32 -> vector<4x1024xf32>
    %c12_152 = arith.constant 12 : index
    %c0_153 = arith.constant 0 : index
    %269 = vector.load %arg1[%c12_152, %c0_153] : memref<27x1024xf32, #tpu.memory_space<vmem>>, vector<1x1024xf32>
    %270 = vector.broadcast %269 : vector<1x1024xf32> to vector<4x1024xf32>
    %271 = arith.mulf %268, %270 : vector<4x1024xf32>
    %c48_154 = arith.constant 48 : index
    %c0_155 = arith.constant 0 : index
    %272 = vector.load %arg10[%c48_154, %c0_155] : memref<112x1024xf32, #tpu.memory_space<vmem>>, vector<4x1024xf32>
    tpu.vector_store %arg10[%c48_154, %c0_155], %271 {strides = array<i32>} : memref<112x1024xf32, #tpu.memory_space<vmem>>, vector<4x1024xf32>,
    %c52_156 = arith.constant 52 : index
    %c0_157 = arith.constant 0 : index
    %273 = vector.load %arg10[%c52_156, %c0_157] : memref<112x1024xf32, #tpu.memory_space<vmem>>, vector<4x1024xf32>
    tpu.vector_store %arg10[%c52_156, %c0_157], %207 {strides = array<i32>} : memref<112x1024xf32, #tpu.memory_space<vmem>>, vector<4x1024xf32>,
    %c1023_i32_158 = arith.constant 1023 : i32
    %274 = tpu.dynamic_rotate %207 by %c1023_i32_158 dim 1 : vector<4x1024xf32>, i32 -> vector<4x1024xf32>
    %c14_159 = arith.constant 14 : index
    %c0_160 = arith.constant 0 : index
    %275 = vector.load %arg1[%c14_159, %c0_160] : memref<27x1024xf32, #tpu.memory_space<vmem>>, vector<1x1024xf32>
    %276 = vector.broadcast %275 : vector<1x1024xf32> to vector<4x1024xf32>
    %277 = arith.mulf %274, %276 : vector<4x1024xf32>
    %c56_161 = arith.constant 56 : index
    %c0_162 = arith.constant 0 : index
    %278 = vector.load %arg10[%c56_161, %c0_162] : memref<112x1024xf32, #tpu.memory_space<vmem>>, vector<4x1024xf32>
    tpu.vector_store %arg10[%c56_161, %c0_162], %277 {strides = array<i32>} : memref<112x1024xf32, #tpu.memory_space<vmem>>, vector<4x1024xf32>,
    %c1017_i32_163 = arith.constant 1017 : i32
    %279 = tpu.dynamic_rotate %207 by %c1017_i32_163 dim 1 : vector<4x1024xf32>, i32 -> vector<4x1024xf32>
    %c15_164 = arith.constant 15 : index
    %c0_165 = arith.constant 0 : index
    %280 = vector.load %arg1[%c15_164, %c0_165] : memref<27x1024xf32, #tpu.memory_space<vmem>>, vector<1x1024xf32>
    %281 = vector.broadcast %280 : vector<1x1024xf32> to vector<4x1024xf32>
    %282 = arith.mulf %279, %281 : vector<4x1024xf32>
    %c60_166 = arith.constant 60 : index
    %c0_167 = arith.constant 0 : index
    %283 = vector.load %arg10[%c60_166, %c0_167] : memref<112x1024xf32, #tpu.memory_space<vmem>>, vector<4x1024xf32>
    tpu.vector_store %arg10[%c60_166, %c0_167], %282 {strides = array<i32>} : memref<112x1024xf32, #tpu.memory_space<vmem>>, vector<4x1024xf32>,
    %c1016_i32_168 = arith.constant 1016 : i32
    %284 = tpu.dynamic_rotate %207 by %c1016_i32_168 dim 1 : vector<4x1024xf32>, i32 -> vector<4x1024xf32>
    %c16_169 = arith.constant 16 : index
    %c0_170 = arith.constant 0 : index
    %285 = vector.load %arg1[%c16_169, %c0_170] : memref<27x1024xf32, #tpu.memory_space<vmem>>, vector<1x1024xf32>
    %286 = vector.broadcast %285 : vector<1x1024xf32> to vector<4x1024xf32>
    %287 = arith.mulf %284, %286 : vector<4x1024xf32>
    %c64_171 = arith.constant 64 : index
    %c0_172 = arith.constant 0 : index
    %288 = vector.load %arg10[%c64_171, %c0_172] : memref<112x1024xf32, #tpu.memory_space<vmem>>, vector<4x1024xf32>
    tpu.vector_store %arg10[%c64_171, %c0_172], %287 {strides = array<i32>} : memref<112x1024xf32, #tpu.memory_space<vmem>>, vector<4x1024xf32>,
    %c1015_i32_173 = arith.constant 1015 : i32
    %289 = tpu.dynamic_rotate %207 by %c1015_i32_173 dim 1 : vector<4x1024xf32>, i32 -> vector<4x1024xf32>
    %c17_174 = arith.constant 17 : index
    %c0_175 = arith.constant 0 : index
    %290 = vector.load %arg1[%c17_174, %c0_175] : memref<27x1024xf32, #tpu.memory_space<vmem>>, vector<1x1024xf32>
    %291 = vector.broadcast %290 : vector<1x1024xf32> to vector<4x1024xf32>
    %292 = arith.mulf %289, %291 : vector<4x1024xf32>
    %c68_176 = arith.constant 68 : index
    %c0_177 = arith.constant 0 : index
    %293 = vector.load %arg10[%c68_176, %c0_177] : memref<112x1024xf32, #tpu.memory_space<vmem>>, vector<4x1024xf32>
    tpu.vector_store %arg10[%c68_176, %c0_177], %292 {strides = array<i32>} : memref<112x1024xf32, #tpu.memory_space<vmem>>, vector<4x1024xf32>,
    %c969_i32_178 = arith.constant 969 : i32
    %294 = tpu.dynamic_rotate %207 by %c969_i32_178 dim 1 : vector<4x1024xf32>, i32 -> vector<4x1024xf32>
    %c18_179 = arith.constant 18 : index
    %c0_180 = arith.constant 0 : index
    %295 = vector.load %arg1[%c18_179, %c0_180] : memref<27x1024xf32, #tpu.memory_space<vmem>>, vector<1x1024xf32>
    %296 = vector.broadcast %295 : vector<1x1024xf32> to vector<4x1024xf32>
    %297 = arith.mulf %294, %296 : vector<4x1024xf32>
    %c72_181 = arith.constant 72 : index
    %c0_182 = arith.constant 0 : index
    %298 = vector.load %arg10[%c72_181, %c0_182] : memref<112x1024xf32, #tpu.memory_space<vmem>>, vector<4x1024xf32>
    tpu.vector_store %arg10[%c72_181, %c0_182], %297 {strides = array<i32>} : memref<112x1024xf32, #tpu.memory_space<vmem>>, vector<4x1024xf32>,
    %c968_i32_183 = arith.constant 968 : i32
    %299 = tpu.dynamic_rotate %207 by %c968_i32_183 dim 1 : vector<4x1024xf32>, i32 -> vector<4x1024xf32>
    %c19_184 = arith.constant 19 : index
    %c0_185 = arith.constant 0 : index
    %300 = vector.load %arg1[%c19_184, %c0_185] : memref<27x1024xf32, #tpu.memory_space<vmem>>, vector<1x1024xf32>
    %301 = vector.broadcast %300 : vector<1x1024xf32> to vector<4x1024xf32>
    %302 = arith.mulf %299, %301 : vector<4x1024xf32>
    %c76_186 = arith.constant 76 : index
    %c0_187 = arith.constant 0 : index
    %303 = vector.load %arg10[%c76_186, %c0_187] : memref<112x1024xf32, #tpu.memory_space<vmem>>, vector<4x1024xf32>
    tpu.vector_store %arg10[%c76_186, %c0_187], %302 {strides = array<i32>} : memref<112x1024xf32, #tpu.memory_space<vmem>>, vector<4x1024xf32>,
    %c967_i32_188 = arith.constant 967 : i32
    %304 = tpu.dynamic_rotate %207 by %c967_i32_188 dim 1 : vector<4x1024xf32>, i32 -> vector<4x1024xf32>
    %c20_189 = arith.constant 20 : index
    %c0_190 = arith.constant 0 : index
    %305 = vector.load %arg1[%c20_189, %c0_190] : memref<27x1024xf32, #tpu.memory_space<vmem>>, vector<1x1024xf32>
    %306 = vector.broadcast %305 : vector<1x1024xf32> to vector<4x1024xf32>
    %307 = arith.mulf %304, %306 : vector<4x1024xf32>
    %c80_191 = arith.constant 80 : index
    %c0_192 = arith.constant 0 : index
    %308 = vector.load %arg10[%c80_191, %c0_192] : memref<112x1024xf32, #tpu.memory_space<vmem>>, vector<4x1024xf32>
    tpu.vector_store %arg10[%c80_191, %c0_192], %307 {strides = array<i32>} : memref<112x1024xf32, #tpu.memory_space<vmem>>, vector<4x1024xf32>,
    %c961_i32_193 = arith.constant 961 : i32
    %309 = tpu.dynamic_rotate %207 by %c961_i32_193 dim 1 : vector<4x1024xf32>, i32 -> vector<4x1024xf32>
    %c21_194 = arith.constant 21 : index
    %c0_195 = arith.constant 0 : index
    %310 = vector.load %arg1[%c21_194, %c0_195] : memref<27x1024xf32, #tpu.memory_space<vmem>>, vector<1x1024xf32>
    %311 = vector.broadcast %310 : vector<1x1024xf32> to vector<4x1024xf32>
    %312 = arith.mulf %309, %311 : vector<4x1024xf32>
    %c84_196 = arith.constant 84 : index
    %c0_197 = arith.constant 0 : index
    %313 = vector.load %arg10[%c84_196, %c0_197] : memref<112x1024xf32, #tpu.memory_space<vmem>>, vector<4x1024xf32>
    tpu.vector_store %arg10[%c84_196, %c0_197], %312 {strides = array<i32>} : memref<112x1024xf32, #tpu.memory_space<vmem>>, vector<4x1024xf32>,
    %c960_i32_198 = arith.constant 960 : i32
    %314 = tpu.dynamic_rotate %207 by %c960_i32_198 dim 1 : vector<4x1024xf32>, i32 -> vector<4x1024xf32>
    %c22_199 = arith.constant 22 : index
    %c0_200 = arith.constant 0 : index
    %315 = vector.load %arg1[%c22_199, %c0_200] : memref<27x1024xf32, #tpu.memory_space<vmem>>, vector<1x1024xf32>
    %316 = vector.broadcast %315 : vector<1x1024xf32> to vector<4x1024xf32>
    %317 = arith.mulf %314, %316 : vector<4x1024xf32>
    %c88_201 = arith.constant 88 : index
    %c0_202 = arith.constant 0 : index
    %318 = vector.load %arg10[%c88_201, %c0_202] : memref<112x1024xf32, #tpu.memory_space<vmem>>, vector<4x1024xf32>
    tpu.vector_store %arg10[%c88_201, %c0_202], %317 {strides = array<i32>} : memref<112x1024xf32, #tpu.memory_space<vmem>>, vector<4x1024xf32>,
    %c959_i32_203 = arith.constant 959 : i32
    %319 = tpu.dynamic_rotate %207 by %c959_i32_203 dim 1 : vector<4x1024xf32>, i32 -> vector<4x1024xf32>
    %c23_204 = arith.constant 23 : index
    %c0_205 = arith.constant 0 : index
    %320 = vector.load %arg1[%c23_204, %c0_205] : memref<27x1024xf32, #tpu.memory_space<vmem>>, vector<1x1024xf32>
    %321 = vector.broadcast %320 : vector<1x1024xf32> to vector<4x1024xf32>
    %322 = arith.mulf %319, %321 : vector<4x1024xf32>
    %c92_206 = arith.constant 92 : index
    %c0_207 = arith.constant 0 : index
    %323 = vector.load %arg10[%c92_206, %c0_207] : memref<112x1024xf32, #tpu.memory_space<vmem>>, vector<4x1024xf32>
    tpu.vector_store %arg10[%c92_206, %c0_207], %322 {strides = array<i32>} : memref<112x1024xf32, #tpu.memory_space<vmem>>, vector<4x1024xf32>,
    %c953_i32_208 = arith.constant 953 : i32
    %324 = tpu.dynamic_rotate %207 by %c953_i32_208 dim 1 : vector<4x1024xf32>, i32 -> vector<4x1024xf32>
    %c24_209 = arith.constant 24 : index
    %c0_210 = arith.constant 0 : index
    %325 = vector.load %arg1[%c24_209, %c0_210] : memref<27x1024xf32, #tpu.memory_space<vmem>>, vector<1x1024xf32>
    %326 = vector.broadcast %325 : vector<1x1024xf32> to vector<4x1024xf32>
    %327 = arith.mulf %324, %326 : vector<4x1024xf32>
    %c96_211 = arith.constant 96 : index
    %c0_212 = arith.constant 0 : index
    %328 = vector.load %arg10[%c96_211, %c0_212] : memref<112x1024xf32, #tpu.memory_space<vmem>>, vector<4x1024xf32>
    tpu.vector_store %arg10[%c96_211, %c0_212], %327 {strides = array<i32>} : memref<112x1024xf32, #tpu.memory_space<vmem>>, vector<4x1024xf32>,
    %c952_i32_213 = arith.constant 952 : i32
    %329 = tpu.dynamic_rotate %207 by %c952_i32_213 dim 1 : vector<4x1024xf32>, i32 -> vector<4x1024xf32>
    %c25_214 = arith.constant 25 : index
    %c0_215 = arith.constant 0 : index
    %330 = vector.load %arg1[%c25_214, %c0_215] : memref<27x1024xf32, #tpu.memory_space<vmem>>, vector<1x1024xf32>
    %331 = vector.broadcast %330 : vector<1x1024xf32> to vector<4x1024xf32>
    %332 = arith.mulf %329, %331 : vector<4x1024xf32>
    %c100_216 = arith.constant 100 : index
    %c0_217 = arith.constant 0 : index
    %333 = vector.load %arg10[%c100_216, %c0_217] : memref<112x1024xf32, #tpu.memory_space<vmem>>, vector<4x1024xf32>
    tpu.vector_store %arg10[%c100_216, %c0_217], %332 {strides = array<i32>} : memref<112x1024xf32, #tpu.memory_space<vmem>>, vector<4x1024xf32>,
    %c951_i32_218 = arith.constant 951 : i32
    %334 = tpu.dynamic_rotate %207 by %c951_i32_218 dim 1 : vector<4x1024xf32>, i32 -> vector<4x1024xf32>
    %c26_219 = arith.constant 26 : index
    %c0_220 = arith.constant 0 : index
    %335 = vector.load %arg1[%c26_219, %c0_220] : memref<27x1024xf32, #tpu.memory_space<vmem>>, vector<1x1024xf32>
    %336 = vector.broadcast %335 : vector<1x1024xf32> to vector<4x1024xf32>
    %337 = arith.mulf %334, %336 : vector<4x1024xf32>
    %c104_221 = arith.constant 104 : index
    %c0_222 = arith.constant 0 : index
    %338 = vector.load %arg10[%c104_221, %c0_222] : memref<112x1024xf32, #tpu.memory_space<vmem>>, vector<4x1024xf32>
    tpu.vector_store %arg10[%c104_221, %c0_222], %337 {strides = array<i32>} : memref<112x1024xf32, #tpu.memory_space<vmem>>, vector<4x1024xf32>,
    %cst_223 = arith.constant 0.000000e+00 : f32
    %339 = vector.broadcast %cst_223 : f32 to vector<4x1024xf32>
    %c108_224 = arith.constant 108 : index
    %c0_225 = arith.constant 0 : index
    %340 = vector.load %arg10[%c108_224, %c0_225] : memref<112x1024xf32, #tpu.memory_space<vmem>>, vector<4x1024xf32>
    tpu.vector_store %arg10[%c108_224, %c0_225], %339 {strides = array<i32>} : memref<112x1024xf32, #tpu.memory_space<vmem>>, vector<4x1024xf32>,
    %c0_226 = arith.constant 0 : index
    %c0_227 = arith.constant 0 : index
    %341 = vector.load %arg6[%c0_226, %c0_227] : memref<8x112xf32, #tpu.memory_space<vmem>>, vector<8x112xf32>
    %c0_228 = arith.constant 0 : index
    %c0_229 = arith.constant 0 : index
    %342 = vector.load %arg10[%c0_228, %c0_229] : memref<112x1024xf32, #tpu.memory_space<vmem>>, vector<112x1024xf32>
    %cst_230 = arith.constant dense<0.000000e+00> : vector<8x1024xf32>
    %343 = tpu.matmul %341, %342, %cst_230 {dimension_numbers = #tpu.dot_dimension_numbers<[1], [0], [0], [1], [0, 0, 1, 1], [], []>} : vector<8x112xf32>, vector<112x1024xf32>, vector<8x1024xf32> -> vector<8x1024xf32>
    %cst_231 = arith.constant 0.000000e+00 : f32
    %344 = vector.broadcast %cst_231 : f32 to vector<8x1024xf32>
    %345 = arith.maximumf %343, %344 : vector<8x1024xf32>
    %346 = arith.mulf %345, %345 : vector<8x1024xf32>
    %c0_232 = arith.constant 0 : index
    %c0_233 = arith.constant 0 : index
    %347 = vector.load %arg7[%c0_232, %c0_233] : memref<8x1xf32, #tpu.memory_space<vmem>>, vector<8x1xf32>
    %c0_234 = arith.constant 0 : index
    %c0_235 = arith.constant 0 : index
    %348 = vector.load %arg8[%c0_234, %c0_235] : memref<8x1xf32, #tpu.memory_space<vmem>>, vector<8x1xf32>
    %cst_236 = arith.constant 0.000000e+00 : f32
    %349 = vector.broadcast %cst_236 : f32 to vector<8x1024xf32>
    %cst_237 = arith.constant 0.000000e+00 : f32
    %350 = vector.broadcast %cst_237 : f32 to vector<8x1024xf32>
    %c0_238 = arith.constant 0 : index
    %c0_239 = arith.constant 0 : index
    %351 = vector.load %arg2[%c0_238, %c0_239] : memref<2x1024xf32, #tpu.memory_space<vmem>>, vector<1x1024xf32>
    %352 = vector.broadcast %351 : vector<1x1024xf32> to vector<8x1024xf32>
    %353 = arith.mulf %345, %352 : vector<8x1024xf32>
    %cst_240 = arith.constant dense<0.000000e+00> : vector<8xf32>
    %354 = vector.multi_reduction <add>, %353, %cst_240 [1] : vector<8x1024xf32> to vector<8xf32>
    %355 = vector.shape_cast %354 : vector<8xf32> to vector<8x1xf32>
    %356 = vector.broadcast %351 : vector<1x1024xf32> to vector<8x1024xf32>
    %357 = arith.mulf %346, %356 : vector<8x1024xf32>
    %cst_241 = arith.constant dense<0.000000e+00> : vector<8xf32>
    %358 = vector.multi_reduction <add>, %357, %cst_241 [1] : vector<8x1024xf32> to vector<8xf32>
    %359 = vector.shape_cast %358 : vector<8xf32> to vector<8x1xf32>
    %cst_242 = arith.constant 0.001953125 : f32
    %360 = vector.broadcast %cst_242 : f32 to vector<8x1xf32>
    %361 = arith.mulf %355, %360 : vector<8x1xf32>
    %cst_243 = arith.constant 0.001953125 : f32
    %362 = vector.broadcast %cst_243 : f32 to vector<8x1xf32>
    %363 = arith.mulf %359, %362 : vector<8x1xf32>
    %364 = arith.mulf %361, %361 : vector<8x1xf32>
    %365 = arith.subf %363, %364 : vector<8x1xf32>
    %cst_244 = arith.constant 0.000000e+00 : f32
    %366 = vector.broadcast %cst_244 : f32 to vector<8x1xf32>
    %367 = arith.maximumf %365, %366 : vector<8x1xf32>
    %cst_245 = arith.constant 9.99999974E-6 : f32
    %368 = vector.broadcast %cst_245 : f32 to vector<8x1xf32>
    %369 = arith.addf %367, %368 : vector<8x1xf32>
    %370 = math.rsqrt %369 : vector<8x1xf32>
    %371 = arith.mulf %370, %347 : vector<8x1xf32>
    %372 = vector.broadcast %371 : vector<8x1xf32> to vector<8x1024xf32>
    %373 = vector.broadcast %351 : vector<1x1024xf32> to vector<8x1024xf32>
    %374 = arith.mulf %372, %373 : vector<8x1024xf32>
    %375 = arith.addf %349, %374 : vector<8x1024xf32>
    %376 = arith.mulf %361, %371 : vector<8x1xf32>
    %377 = arith.subf %348, %376 : vector<8x1xf32>
    %378 = vector.broadcast %377 : vector<8x1xf32> to vector<8x1024xf32>
    %379 = vector.broadcast %351 : vector<1x1024xf32> to vector<8x1024xf32>
    %380 = arith.mulf %378, %379 : vector<8x1024xf32>
    %381 = arith.addf %350, %380 : vector<8x1024xf32>
    %c1_246 = arith.constant 1 : index
    %c0_247 = arith.constant 0 : index
    %382 = vector.load %arg2[%c1_246, %c0_247] : memref<2x1024xf32, #tpu.memory_space<vmem>>, vector<1x1024xf32>
    %383 = vector.broadcast %382 : vector<1x1024xf32> to vector<8x1024xf32>
    %384 = arith.mulf %345, %383 : vector<8x1024xf32>
    %cst_248 = arith.constant dense<0.000000e+00> : vector<8xf32>
    %385 = vector.multi_reduction <add>, %384, %cst_248 [1] : vector<8x1024xf32> to vector<8xf32>
    %386 = vector.shape_cast %385 : vector<8xf32> to vector<8x1xf32>
    %387 = vector.broadcast %382 : vector<1x1024xf32> to vector<8x1024xf32>
    %388 = arith.mulf %346, %387 : vector<8x1024xf32>
    %cst_249 = arith.constant dense<0.000000e+00> : vector<8xf32>
    %389 = vector.multi_reduction <add>, %388, %cst_249 [1] : vector<8x1024xf32> to vector<8xf32>
    %390 = vector.shape_cast %389 : vector<8xf32> to vector<8x1xf32>
    %cst_250 = arith.constant 0.001953125 : f32
    %391 = vector.broadcast %cst_250 : f32 to vector<8x1xf32>
    %392 = arith.mulf %386, %391 : vector<8x1xf32>
    %cst_251 = arith.constant 0.001953125 : f32
    %393 = vector.broadcast %cst_251 : f32 to vector<8x1xf32>
    %394 = arith.mulf %390, %393 : vector<8x1xf32>
    %395 = arith.mulf %392, %392 : vector<8x1xf32>
    %396 = arith.subf %394, %395 : vector<8x1xf32>
    %cst_252 = arith.constant 0.000000e+00 : f32
    %397 = vector.broadcast %cst_252 : f32 to vector<8x1xf32>
    %398 = arith.maximumf %396, %397 : vector<8x1xf32>
    %cst_253 = arith.constant 9.99999974E-6 : f32
    %399 = vector.broadcast %cst_253 : f32 to vector<8x1xf32>
    %400 = arith.addf %398, %399 : vector<8x1xf32>
    %401 = math.rsqrt %400 : vector<8x1xf32>
    %402 = arith.mulf %401, %347 : vector<8x1xf32>
    %403 = vector.broadcast %402 : vector<8x1xf32> to vector<8x1024xf32>
    %404 = vector.broadcast %382 : vector<1x1024xf32> to vector<8x1024xf32>
    %405 = arith.mulf %403, %404 : vector<8x1024xf32>
    %406 = arith.addf %375, %405 : vector<8x1024xf32>
    %407 = arith.mulf %392, %402 : vector<8x1xf32>
    %408 = arith.subf %348, %407 : vector<8x1xf32>
    %409 = vector.broadcast %408 : vector<8x1xf32> to vector<8x1024xf32>
    %410 = vector.broadcast %382 : vector<1x1024xf32> to vector<8x1024xf32>
    %411 = arith.mulf %409, %410 : vector<8x1024xf32>
    %412 = arith.addf %381, %411 : vector<8x1024xf32>
    %413 = arith.mulf %345, %406 : vector<8x1024xf32>
    %414 = arith.addf %413, %412 : vector<8x1024xf32>
    %c0_254 = arith.constant 0 : index
    %c0_255 = arith.constant 0 : index
    %415 = vector.load %arg9[%c0_254, %c0_255] : memref<8x1024xf32, #tpu.memory_space<vmem>>, vector<8x1024xf32>
    tpu.vector_store %arg9[%c0_254, %c0_255], %414 {strides = array<i32>} : memref<8x1024xf32, #tpu.memory_space<vmem>>, vector<8x1024xf32>,
    return
  }
}

</mosaic_0001>

<llo_original>
// kernel: _encoder_impl.1
$region0: #{_encoder_impl.1}
  #allocation0 [shape = 'u32[]', space=smem, size = 0x4, offset = 0x4, fixed_abs, tag = 'smem constant byte address 0x4 - core index']
  #allocation1 [shape = 'u32[144,128]{1,0:T(1,128)}', space=vmem, size = 0x12000, scoped, tag = 'internal scratch']
  #allocation2 [shape = 'f32[112,1024]{1,0:T(8,128)}', space=vmem, size = 0x70000, scoped, tag = 'scratch operand']
  %s0 = inlined_call_operand.vmem [shape: f32[4,1024], index: 0, kind: input, shape index: {}]
  %s1 = inlined_call_operand.vmem [shape: f32[27,1024], index: 1, kind: input, shape index: {}]
  %s2 = inlined_call_operand.vmem [shape: f32[2,1024], index: 2, kind: input, shape index: {}]
  %s3 = inlined_call_operand.vmem [shape: f32[4,112], index: 3, kind: input, shape index: {}]
  %s4 = inlined_call_operand.vmem [shape: f32[4,1], index: 4, kind: input, shape index: {}]
  %s5 = inlined_call_operand.vmem [shape: f32[4,1], index: 5, kind: input, shape index: {}]
  %s6 = inlined_call_operand.vmem [shape: f32[8,112], index: 6, kind: input, shape index: {}]
  %s7 = inlined_call_operand.vmem [shape: f32[8,1], index: 7, kind: input, shape index: {}]
  %s8 = inlined_call_operand.vmem [shape: f32[8,1], index: 8, kind: input, shape index: {}]
  %s9 = inlined_call_operand.vmem [shape: f32[8,1024], index: 9, kind: output, shape index: {}]
  %s10 = sld [smem:[#allocation0]]
  $region46: #{_encoder_impl.1} parent=0
    _
  %s12 = ssub.s32 1, %s10
  %s13 = scalar_select 0, %s12, %s10
  // Predicated region
  $region2: #{_encoder_impl.1} parent=0 // pred_check
    _
  $region3: #{_encoder_impl.1} parent=0 // pred_check_branch
    %15 = sbr.rel (0) target = $region5
  $region4: #{_encoder_impl.1} parent=0 // pred_region
    _
  $region5: #{_encoder_impl.1} parent=0 // pred_fallthru
    _
  // Predicated region
  $region6: #{_encoder_impl.1} parent=0 // pred_check
    _
  $region7: #{_encoder_impl.1} parent=0 // pred_check_branch
    %17 = sbr.rel (0) target = $region9
  $region8: #{_encoder_impl.1} parent=0 // pred_region
    _
  $region9: #{_encoder_impl.1} parent=0 // pred_fallthru
    _
  // Predicated region
  $region10: #{_encoder_impl.1} parent=0 // pred_check
    _
  $region11: #{_encoder_impl.1} parent=0 // pred_check_branch
    %19 = sbr.rel (0) target = $region13
  $region12: #{_encoder_impl.1} parent=0 // pred_region
    _
  $region13: #{_encoder_impl.1} parent=0 // pred_fallthru
    _
  // Predicated region
  $region14: #{_encoder_impl.1} parent=0 // pred_check
    _
  $region15: #{_encoder_impl.1} parent=0 // pred_check_branch
    %21 = sbr.rel (0) target = $region17
  $region16: #{_encoder_impl.1} parent=0 // pred_region
    _
  $region17: #{_encoder_impl.1} parent=0 // pred_fallthru
    _
  // Predicated region
  $region18: #{_encoder_impl.1} parent=0 // pred_check
    _
  $region19: #{_encoder_impl.1} parent=0 // pred_check_branch
    %23 = sbr.rel (0) target = $region21
  $region20: #{_encoder_impl.1} parent=0 // pred_region
    _
  $region21: #{_encoder_impl.1} parent=0 // pred_fallthru
    _
  // Predicated region
  $region22: #{_encoder_impl.1} parent=0 // pred_check
    _
  $region23: #{_encoder_impl.1} parent=0 // pred_check_branch
    %25 = sbr.rel (0) target = $region25
  $region24: #{_encoder_impl.1} parent=0 // pred_region
    _
  $region25: #{_encoder_impl.1} parent=0 // pred_fallthru
    _
  // Predicated region
  $region26: #{_encoder_impl.1} parent=0 // pred_check
    _
  $region27: #{_encoder_impl.1} parent=0 // pred_check_branch
    %27 = sbr.rel (0) target = $region29
  $region28: #{_encoder_impl.1} parent=0 // pred_region
    _
  $region29: #{_encoder_impl.1} parent=0 // pred_fallthru
    _
  // Predicated region
  $region30: #{_encoder_impl.1} parent=0 // pred_check
    _
  $region31: #{_encoder_impl.1} parent=0 // pred_check_branch
    %29 = sbr.rel (0) target = $region33
  $region32: #{_encoder_impl.1} parent=0 // pred_region
    _
  $region33: #{_encoder_impl.1} parent=0 // pred_fallthru
    _
  // Predicated region
  $region34: #{_encoder_impl.1} parent=0 // pred_check
    _
  $region35: #{_encoder_impl.1} parent=0 // pred_check_branch
    %31 = sbr.rel (0) target = $region37
  $region36: #{_encoder_impl.1} parent=0 // pred_region
    _
  $region37: #{_encoder_impl.1} parent=0 // pred_fallthru
    _
  %v32 = vld [vmem:[%s0] sm:$0xff]
  %v33 = vld [vmem:[%s0 + $0x8] sm:$0xff]
  %v34 = vld [vmem:[%s0 + $0x10] sm:$0xff]
  %v35 = vld [vmem:[%s0 + $0x18] sm:$0xff]
  %v40 = vcombine.high %v32, %v32
  %v41 = vcombine.high %v33, %v33
  %v42 = vcombine.high %v34, %v34
  %v43 = vcombine.high %v35, %v35
  %48 = vrot.lane.b32.xlu0 %v32, 73
  %v49 = vpop.permute.xlu0 %48
  %50 = vrot.lane.b32.xlu0 %v40, 73
  %v51 = vpop.permute.xlu0 %50
  %52 = vrot.lane.b32.xlu0 %v33, 73
  %v53 = vpop.permute.xlu0 %52
  %54 = vrot.lane.b32.xlu0 %v41, 73
  %v55 = vpop.permute.xlu0 %54
  %56 = vrot.lane.b32.xlu0 %v34, 73
  %v57 = vpop.permute.xlu0 %56
  %58 = vrot.lane.b32.xlu0 %v42, 73
  %v59 = vpop.permute.xlu0 %58
  %60 = vrot.lane.b32.xlu0 %v35, 73
  %v61 = vpop.permute.xlu0 %60
  %62 = vrot.lane.b32.xlu0 %v43, 73
  %v63 = vpop.permute.xlu0 %62
  %v64 = vlaneseq
  %v65 = vand.u32 %v64, 127
  %vm66 = vcmp.lt.s32.totalorder %v65, 73
  %v67 = vsel %vm66, %v61, %v63
  %v68 = vsel %vm66, %v59, %v61
  %v69 = vsel %vm66, %v57, %v59
  %v70 = vsel %vm66, %v55, %v57
  %v71 = vsel %vm66, %v53, %v55
  %v72 = vsel %vm66, %v51, %v53
  %v73 = vsel %vm66, %v49, %v51
  %v74 = vsel %vm66, %v63, %v49
  %v75 = vld [vmem:[%s1] ss:$8 sm:$0xf]
  %v76 = vld [vmem:[%s1] ss:$8 sm:$0xf0]
  %v77 = vor.u32 %v75, %v76
  %v79 = vlaneseq
  %v80 = vshrl.u32 %v79, 7
  %v81 = vsub.s32 0, %v80
  %v82 = vrot.slane %v77, %v81
  %v83 = vlaneseq
  %v84 = vshrl.u32 %v83, 7
  %v85 = vsub.s32 1, %v84
  %v86 = vrot.slane %v77, %v85
  %v87 = vlaneseq
  %v88 = vshrl.u32 %v87, 7
  %v89 = vsub.s32 2, %v88
  %v90 = vrot.slane %v77, %v89
  %v91 = vlaneseq
  %v92 = vshrl.u32 %v91, 7
  %v93 = vsub.s32 3, %v92
  %v94 = vrot.slane %v77, %v93
  %v95 = vlaneseq
  %v96 = vshrl.u32 %v95, 7
  %v97 = vsub.s32 4, %v96
  %v98 = vrot.slane %v77, %v97
  %v99 = vlaneseq
  %v100 = vshrl.u32 %v99, 7
  %v101 = vsub.s32 5, %v100
  %v102 = vrot.slane %v77, %v101
  %v103 = vlaneseq
  %v104 = vshrl.u32 %v103, 7
  %v105 = vsub.s32 6, %v104
  %v106 = vrot.slane %v77, %v105
  %v107 = vlaneseq
  %v108 = vshrl.u32 %v107, 7
  %v109 = vsub.s32 7, %v108
  %v110 = vrot.slane %v77, %v109
  %v119 = vmul.f32 %v74, %v82
  %v120 = vmul.f32 %v73, %v86
  %v121 = vmul.f32 %v72, %v90
  %v122 = vmul.f32 %v71, %v94
  %v123 = vmul.f32 %v70, %v98
  %v124 = vmul.f32 %v69, %v102
  %v125 = vmul.f32 %v68, %v106
  %v126 = vmul.f32 %v67, %v110
  %127 = vst [vmem:[#allocation2] sm:$0xf] %v119
  %128 = vst [vmem:[#allocation2 + $0x8] sm:$0xf] %v120
  %129 = vst [vmem:[#allocation2 + $0x10] sm:$0xf] %v121
  %130 = vst [vmem:[#allocation2 + $0x18] sm:$0xf] %v122
  %131 = vst [vmem:[#allocation2 + $0x20] sm:$0xf] %v123
  %132 = vst [vmem:[#allocation2 + $0x28] sm:$0xf] %v124
  %133 = vst [vmem:[#allocation2 + $0x30] sm:$0xf] %v125
  %134 = vst [vmem:[#allocation2 + $0x38] sm:$0xf] %v126
  %135 = vrot.lane.b32.xlu0 %v32, 72
  %v136 = vpop.permute.xlu0 %135
  %137 = vrot.lane.b32.xlu0 %v40, 72
  %v138 = vpop.permute.xlu0 %137
  %139 = vrot.lane.b32.xlu0 %v33, 72
  %v140 = vpop.permute.xlu0 %139
  %141 = vrot.lane.b32.xlu0 %v41, 72
  %v142 = vpop.permute.xlu0 %141
  %143 = vrot.lane.b32.xlu0 %v34, 72
  %v144 = vpop.permute.xlu0 %143
  %145 = vrot.lane.b32.xlu0 %v42, 72
  %v146 = vpop.permute.xlu0 %145
  %147 = vrot.lane.b32.xlu0 %v35, 72
  %v148 = vpop.permute.xlu0 %147
  %149 = vrot.lane.b32.xlu0 %v43, 72
  %v150 = vpop.permute.xlu0 %149
  %vm151 = vcmp.lt.s32.totalorder %v65, 72
  %v152 = vsel %vm151, %v148, %v150
  %v153 = vsel %vm151, %v146, %v148
  %v154 = vsel %vm151, %v144, %v146
  %v155 = vsel %vm151, %v142, %v144
  %v156 = vsel %vm151, %v140, %v142
  %v157 = vsel %vm151, %v138, %v140
  %v158 = vsel %vm151, %v136, %v138
  %v159 = vsel %vm151, %v150, %v136
  %s160 = scalar_lea.vmem %s1, 1
  %v161 = vld [vmem:[%s160] ss:$8 sm:$0xf]
  %v162 = vld [vmem:[%s160] ss:$8 sm:$0xf0]
  %v163 = vor.u32 %v161, %v162
  %v165 = vlaneseq
  %v166 = vshrl.u32 %v165, 7
  %v167 = vsub.s32 0, %v166
  %v168 = vrot.slane %v163, %v167
  %v169 = vlaneseq
  %v170 = vshrl.u32 %v169, 7
  %v171 = vsub.s32 1, %v170
  %v172 = vrot.slane %v163, %v171
  %v173 = vlaneseq
  %v174 = vshrl.u32 %v173, 7
  %v175 = vsub.s32 2, %v174
  %v176 = vrot.slane %v163, %v175
  %v177 = vlaneseq
  %v178 = vshrl.u32 %v177, 7
  %v179 = vsub.s32 3, %v178
  %v180 = vrot.slane %v163, %v179
  %v181 = vlaneseq
  %v182 = vshrl.u32 %v181, 7
  %v183 = vsub.s32 4, %v182
  %v184 = vrot.slane %v163, %v183
  %v185 = vlaneseq
  %v186 = vshrl.u32 %v185, 7
  %v187 = vsub.s32 5, %v186
  %v188 = vrot.slane %v163, %v187
  %v189 = vlaneseq
  %v190 = vshrl.u32 %v189, 7
  %v191 = vsub.s32 6, %v190
  %v192 = vrot.slane %v163, %v191
  %v193 = vlaneseq
  %v194 = vshrl.u32 %v193, 7
  %v195 = vsub.s32 7, %v194
  %v196 = vrot.slane %v163, %v195
  %v205 = vmul.f32 %v159, %v168
  %v206 = vmul.f32 %v158, %v172
  %v207 = vmul.f32 %v157, %v176
  %v208 = vmul.f32 %v156, %v180
  %v209 = vmul.f32 %v155, %v184
  %v210 = vmul.f32 %v154, %v188
  %v211 = vmul.f32 %v153, %v192
  %v212 = vmul.f32 %v152, %v196
  %v221 = vrot.slane %v205, 4
  %v222 = vrot.slane %v206, 4
  %v223 = vrot.slane %v207, 4
  %v224 = vrot.slane %v208, 4
  %v225 = vrot.slane %v209, 4
  %v226 = vrot.slane %v210, 4
  %v227 = vrot.slane %v211, 4
  %v228 = vrot.slane %v212, 4
  %237 = vst [vmem:[#allocation2] sm:$0xf0] %v221
  %238 = vst [vmem:[#allocation2 + $0x8] sm:$0xf0] %v222
  %239 = vst [vmem:[#allocation2 + $0x10] sm:$0xf0] %v223
  %240 = vst [vmem:[#allocation2 + $0x18] sm:$0xf0] %v224
  %241 = vst [vmem:[#allocation2 + $0x20] sm:$0xf0] %v225
  %242 = vst [vmem:[#allocation2 + $0x28] sm:$0xf0] %v226
  %243 = vst [vmem:[#allocation2 + $0x30] sm:$0xf0] %v227
  %244 = vst [vmem:[#allocation2 + $0x38] sm:$0xf0] %v228
  %245 = vrot.lane.b32.xlu0 %v32, 71
  %v246 = vpop.permute.xlu0 %245
  %247 = vrot.lane.b32.xlu0 %v40, 71
  %v248 = vpop.permute.xlu0 %247
  %249 = vrot.lane.b32.xlu0 %v33, 71
  %v250 = vpop.permute.xlu0 %249
  %251 = vrot.lane.b32.xlu0 %v41, 71
  %v252 = vpop.permute.xlu0 %251
  %253 = vrot.lane.b32.xlu0 %v34, 71
  %v254 = vpop.permute.xlu0 %253
  %255 = vrot.lane.b32.xlu0 %v42, 71
  %v256 = vpop.permute.xlu0 %255
  %257 = vrot.lane.b32.xlu0 %v35, 71
  %v258 = vpop.permute.xlu0 %257
  %259 = vrot.lane.b32.xlu0 %v43, 71
  %v260 = vpop.permute.xlu0 %259
  %vm261 = vcmp.lt.s32.totalorder %v65, 71
  %v262 = vsel %vm261, %v258, %v260
  %v263 = vsel %vm261, %v256, %v258
  %v264 = vsel %vm261, %v254, %v256
  %v265 = vsel %vm261, %v252, %v254
  %v266 = vsel %vm261, %v250, %v252
  %v267 = vsel %vm261, %v248, %v250
  %v268 = vsel %vm261, %v246, %v248
  %v269 = vsel %vm261, %v260, %v246
  %s270 = scalar_lea.vmem %s1, 2
  %v271 = vld [vmem:[%s270] ss:$8 sm:$0xf]
  %v272 = vld [vmem:[%s270] ss:$8 sm:$0xf0]
  %v273 = vor.u32 %v271, %v272
  %v275 = vlaneseq
  %v276 = vshrl.u32 %v275, 7
  %v277 = vsub.s32 0, %v276
  %v278 = vrot.slane %v273, %v277
  %v279 = vlaneseq
  %v280 = vshrl.u32 %v279, 7
  %v281 = vsub.s32 1, %v280
  %v282 = vrot.slane %v273, %v281
  %v283 = vlaneseq
  %v284 = vshrl.u32 %v283, 7
  %v285 = vsub.s32 2, %v284
  %v286 = vrot.slane %v273, %v285
  %v287 = vlaneseq
  %v288 = vshrl.u32 %v287, 7
  %v289 = vsub.s32 3, %v288
  %v290 = vrot.slane %v273, %v289
  %v291 = vlaneseq
  %v292 = vshrl.u32 %v291, 7
  %v293 = vsub.s32 4, %v292
  %v294 = vrot.slane %v273, %v293
  %v295 = vlaneseq
  %v296 = vshrl.u32 %v295, 7
  %v297 = vsub.s32 5, %v296
  %v298 = vrot.slane %v273, %v297
  %v299 = vlaneseq
  %v300 = vshrl.u32 %v299, 7
  %v301 = vsub.s32 6, %v300
  %v302 = vrot.slane %v273, %v301
  %v303 = vlaneseq
  %v304 = vshrl.u32 %v303, 7
  %v305 = vsub.s32 7, %v304
  %v306 = vrot.slane %v273, %v305
  %v315 = vmul.f32 %v269, %v278
  %v316 = vmul.f32 %v268, %v282
  %v317 = vmul.f32 %v267, %v286
  %v318 = vmul.f32 %v266, %v290
  %v319 = vmul.f32 %v265, %v294
  %v320 = vmul.f32 %v264, %v298
  %v321 = vmul.f32 %v263, %v302
  %v322 = vmul.f32 %v262, %v306
  %323 = vst [vmem:[#allocation2 + $0x40] sm:$0xf] %v315
  %324 = vst [vmem:[#allocation2 + $0x48] sm:$0xf] %v316
  %325 = vst [vmem:[#allocation2 + $0x50] sm:$0xf] %v317
  %326 = vst [vmem:[#allocation2 + $0x58] sm:$0xf] %v318
  %327 = vst [vmem:[#allocation2 + $0x60] sm:$0xf] %v319
  %328 = vst [vmem:[#allocation2 + $0x68] sm:$0xf] %v320
  %329 = vst [vmem:[#allocation2 + $0x70] sm:$0xf] %v321
  %330 = vst [vmem:[#allocation2 + $0x78] sm:$0xf] %v322
  %331 = vrot.lane.b32.xlu0 %v32, 65
  %v332 = vpop.permute.xlu0 %331
  %333 = vrot.lane.b32.xlu0 %v40, 65
  %v334 = vpop.permute.xlu0 %333
  %335 = vrot.lane.b32.xlu0 %v33, 65
  %v336 = vpop.permute.xlu0 %335
  %337 = vrot.lane.b32.xlu0 %v41, 65
  %v338 = vpop.permute.xlu0 %337
  %339 = vrot.lane.b32.xlu0 %v34, 65
  %v340 = vpop.permute.xlu0 %339
  %341 = vrot.lane.b32.xlu0 %v42, 65
  %v342 = vpop.permute.xlu0 %341
  %343 = vrot.lane.b32.xlu0 %v35, 65
  %v344 = vpop.permute.xlu0 %343
  %345 = vrot.lane.b32.xlu0 %v43, 65
  %v346 = vpop.permute.xlu0 %345
  %vm347 = vcmp.lt.s32.totalorder %v65, 65
  %v348 = vsel %vm347, %v344, %v346
  %v349 = vsel %vm347, %v342, %v344
  %v350 = vsel %vm347, %v340, %v342
  %v351 = vsel %vm347, %v338, %v340
  %v352 = vsel %vm347, %v336, %v338
  %v353 = vsel %vm347, %v334, %v336
  %v354 = vsel %vm347, %v332, %v334
  %v355 = vsel %vm347, %v346, %v332
  %s356 = scalar_lea.vmem %s1, 3
  %v357 = vld [vmem:[%s356] ss:$8 sm:$0xf]
  %v358 = vld [vmem:[%s356] ss:$8 sm:$0xf0]
  %v359 = vor.u32 %v357, %v358
  %v361 = vlaneseq
  %v362 = vshrl.u32 %v361, 7
  %v363 = vsub.s32 0, %v362
  %v364 = vrot.slane %v359, %v363
  %v365 = vlaneseq
  %v366 = vshrl.u32 %v365, 7
  %v367 = vsub.s32 1, %v366
  %v368 = vrot.slane %v359, %v367
  %v369 = vlaneseq
  %v370 = vshrl.u32 %v369, 7
  %v371 = vsub.s32 2, %v370
  %v372 = vrot.slane %v359, %v371
  %v373 = vlaneseq
  %v374 = vshrl.u32 %v373, 7
  %v375 = vsub.s32 3, %v374
  %v376 = vrot.slane %v359, %v375
  %v377 = vlaneseq
  %v378 = vshrl.u32 %v377, 7
  %v379 = vsub.s32 4, %v378
  %v380 = vrot.slane %v359, %v379
  %v381 = vlaneseq
  %v382 = vshrl.u32 %v381, 7
  %v383 = vsub.s32 5, %v382
  %v384 = vrot.slane %v359, %v383
  %v385 = vlaneseq
  %v386 = vshrl.u32 %v385, 7
  %v387 = vsub.s32 6, %v386
  %v388 = vrot.slane %v359, %v387
  %v389 = vlaneseq
  %v390 = vshrl.u32 %v389, 7
  %v391 = vsub.s32 7, %v390
  %v392 = vrot.slane %v359, %v391
  %v401 = vmul.f32 %v355, %v364
  %v402 = vmul.f32 %v354, %v368
  %v403 = vmul.f32 %v353, %v372
  %v404 = vmul.f32 %v352, %v376
  %v405 = vmul.f32 %v351, %v380
  %v406 = vmul.f32 %v350, %v384
  %v407 = vmul.f32 %v349, %v388
  %v408 = vmul.f32 %v348, %v392
  %v417 = vrot.slane %v401, 4
  %v418 = vrot.slane %v402, 4
  %v419 = vrot.slane %v403, 4
  %v420 = vrot.slane %v404, 4
  %v421 = vrot.slane %v405, 4
  %v422 = vrot.slane %v406, 4
  %v423 = vrot.slane %v407, 4
  %v424 = vrot.slane %v408, 4
  %433 = vst [vmem:[#allocation2 + $0x40] sm:$0xf0] %v417
  %434 = vst [vmem:[#allocation2 + $0x48] sm:$0xf0] %v418
  %435 = vst [vmem:[#allocation2 + $0x50] sm:$0xf0] %v419
  %436 = vst [vmem:[#allocation2 + $0x58] sm:$0xf0] %v420
  %437 = vst [vmem:[#allocation2 + $0x60] sm:$0xf0] %v421
  %438 = vst [vmem:[#allocation2 + $0x68] sm:$0xf0] %v422
  %439 = vst [vmem:[#allocation2 + $0x70] sm:$0xf0] %v423
  %440 = vst [vmem:[#allocation2 + $0x78] sm:$0xf0] %v424
  %441 = vrot.lane.b32.xlu0 %v32, 64
  %v442 = vpop.permute.xlu0 %441
  %443 = vrot.lane.b32.xlu0 %v40, 64
  %v444 = vpop.permute.xlu0 %443
  %445 = vrot.lane.b32.xlu0 %v33, 64
  %v446 = vpop.permute.xlu0 %445
  %447 = vrot.lane.b32.xlu0 %v41, 64
  %v448 = vpop.permute.xlu0 %447
  %449 = vrot.lane.b32.xlu0 %v34, 64
  %v450 = vpop.permute.xlu0 %449
  %451 = vrot.lane.b32.xlu0 %v42, 64
  %v452 = vpop.permute.xlu0 %451
  %453 = vrot.lane.b32.xlu0 %v35, 64
  %v454 = vpop.permute.xlu0 %453
  %455 = vrot.lane.b32.xlu0 %v43, 64
  %v456 = vpop.permute.xlu0 %455
  %vm457 = vcmp.lt.s32.totalorder %v65, 64
  %v458 = vsel %vm457, %v454, %v456
  %v459 = vsel %vm457, %v452, %v454
  %v460 = vsel %vm457, %v450, %v452
  %v461 = vsel %vm457, %v448, %v450
  %v462 = vsel %vm457, %v446, %v448
  %v463 = vsel %vm457, %v444, %v446
  %v464 = vsel %vm457, %v442, %v444
  %v465 = vsel %vm457, %v456, %v442
  %s466 = scalar_lea.vmem %s1, 4
  %v467 = vld [vmem:[%s466] ss:$8 sm:$0xf]
  %v468 = vld [vmem:[%s466] ss:$8 sm:$0xf0]
  %v469 = vor.u32 %v467, %v468
  %v471 = vlaneseq
  %v472 = vshrl.u32 %v471, 7
  %v473 = vsub.s32 0, %v472
  %v474 = vrot.slane %v469, %v473
  %v475 = vlaneseq
  %v476 = vshrl.u32 %v475, 7
  %v477 = vsub.s32 1, %v476
  %v478 = vrot.slane %v469, %v477
  %v479 = vlaneseq
  %v480 = vshrl.u32 %v479, 7
  %v481 = vsub.s32 2, %v480
  %v482 = vrot.slane %v469, %v481
  %v483 = vlaneseq
  %v484 = vshrl.u32 %v483, 7
  %v485 = vsub.s32 3, %v484
  %v486 = vrot.slane %v469, %v485
  %v487 = vlaneseq
  %v488 = vshrl.u32 %v487, 7
  %v489 = vsub.s32 4, %v488
  %v490 = vrot.slane %v469, %v489
  %v491 = vlaneseq
  %v492 = vshrl.u32 %v491, 7
  %v493 = vsub.s32 5, %v492
  %v494 = vrot.slane %v469, %v493
  %v495 = vlaneseq
  %v496 = vshrl.u32 %v495, 7
  %v497 = vsub.s32 6, %v496
  %v498 = vrot.slane %v469, %v497
  %v499 = vlaneseq
  %v500 = vshrl.u32 %v499, 7
  %v501 = vsub.s32 7, %v500
  %v502 = vrot.slane %v469, %v501
  %v511 = vmul.f32 %v465, %v474
  %v512 = vmul.f32 %v464, %v478
  %v513 = vmul.f32 %v463, %v482
  %v514 = vmul.f32 %v462, %v486
  %v515 = vmul.f32 %v461, %v490
  %v516 = vmul.f32 %v460, %v494
  %v517 = vmul.f32 %v459, %v498
  %v518 = vmul.f32 %v458, %v502
  %519 = vst [vmem:[#allocation2 + $0x80] sm:$0xf] %v511
  %520 = vst [vmem:[#allocation2 + $0x88] sm:$0xf] %v512
  %521 = vst [vmem:[#allocation2 + $0x90] sm:$0xf] %v513
  %522 = vst [vmem:[#allocation2 + $0x98] sm:$0xf] %v514
  %523 = vst [vmem:[#allocation2 + $0xa0] sm:$0xf] %v515
  %524 = vst [vmem:[#allocation2 + $0xa8] sm:$0xf] %v516
  %525 = vst [vmem:[#allocation2 + $0xb0] sm:$0xf] %v517
  %526 = vst [vmem:[#allocation2 + $0xb8] sm:$0xf] %v518
  %527 = vrot.lane.b32.xlu0 %v32, 63
  %v528 = vpop.permute.xlu0 %527
  %529 = vrot.lane.b32.xlu0 %v40, 63
  %v530 = vpop.permute.xlu0 %529
  %531 = vrot.lane.b32.xlu0 %v33, 63
  %v532 = vpop.permute.xlu0 %531
  %533 = vrot.lane.b32.xlu0 %v41, 63
  %v534 = vpop.permute.xlu0 %533
  %535 = vrot.lane.b32.xlu0 %v34, 63
  %v536 = vpop.permute.xlu0 %535
  %537 = vrot.lane.b32.xlu0 %v42, 63
  %v538 = vpop.permute.xlu0 %537
  %539 = vrot.lane.b32.xlu0 %v35, 63
  %v540 = vpop.permute.xlu0 %539
  %541 = vrot.lane.b32.xlu0 %v43, 63
  %v542 = vpop.permute.xlu0 %541
  %vm543 = vcmp.lt.s32.totalorder %v65, 63
  %v544 = vsel %vm543, %v540, %v542
  %v545 = vsel %vm543, %v538, %v540
  %v546 = vsel %vm543, %v536, %v538
  %v547 = vsel %vm543, %v534, %v536
  %v548 = vsel %vm543, %v532, %v534
  %v549 = vsel %vm543, %v530, %v532
  %v550 = vsel %vm543, %v528, %v530
  %v551 = vsel %vm543, %v542, %v528
  %s552 = scalar_lea.vmem %s1, 5
  %v553 = vld [vmem:[%s552] ss:$8 sm:$0xf]
  %v554 = vld [vmem:[%s552] ss:$8 sm:$0xf0]
  %v555 = vor.u32 %v553, %v554
  %v557 = vlaneseq
  %v558 = vshrl.u32 %v557, 7
  %v559 = vsub.s32 0, %v558
  %v560 = vrot.slane %v555, %v559
  %v561 = vlaneseq
  %v562 = vshrl.u32 %v561, 7
  %v563 = vsub.s32 1, %v562
  %v564 = vrot.slane %v555, %v563
  %v565 = vlaneseq
  %v566 = vshrl.u32 %v565, 7
  %v567 = vsub.s32 2, %v566
  %v568 = vrot.slane %v555, %v567
  %v569 = vlaneseq
  %v570 = vshrl.u32 %v569, 7
  %v571 = vsub.s32 3, %v570
  %v572 = vrot.slane %v555, %v571
  %v573 = vlaneseq
  %v574 = vshrl.u32 %v573, 7
  %v575 = vsub.s32 4, %v574
  %v576 = vrot.slane %v555, %v575
  %v577 = vlaneseq
  %v578 = vshrl.u32 %v577, 7
  %v579 = vsub.s32 5, %v578
  %v580 = vrot.slane %v555, %v579
  %v581 = vlaneseq
  %v582 = vshrl.u32 %v581, 7
  %v583 = vsub.s32 6, %v582
  %v584 = vrot.slane %v555, %v583
  %v585 = vlaneseq
  %v586 = vshrl.u32 %v585, 7
  %v587 = vsub.s32 7, %v586
  %v588 = vrot.slane %v555, %v587
  %v597 = vmul.f32 %v551, %v560
  %v598 = vmul.f32 %v550, %v564
  %v599 = vmul.f32 %v549, %v568
  %v600 = vmul.f32 %v548, %v572
  %v601 = vmul.f32 %v547, %v576
  %v602 = vmul.f32 %v546, %v580
  %v603 = vmul.f32 %v545, %v584
  %v604 = vmul.f32 %v544, %v588
  %v613 = vrot.slane %v597, 4
  %v614 = vrot.slane %v598, 4
  %v615 = vrot.slane %v599, 4
  %v616 = vrot.slane %v600, 4
  %v617 = vrot.slane %v601, 4
  %v618 = vrot.slane %v602, 4
  %v619 = vrot.slane %v603, 4
  %v620 = vrot.slane %v604, 4
  %629 = vst [vmem:[#allocation2 + $0x80] sm:$0xf0] %v613
  %630 = vst [vmem:[#allocation2 + $0x88] sm:$0xf0] %v614
  %631 = vst [vmem:[#allocation2 + $0x90] sm:$0xf0] %v615
  %632 = vst [vmem:[#allocation2 + $0x98] sm:$0xf0] %v616
  %633 = vst [vmem:[#allocation2 + $0xa0] sm:$0xf0] %v617
  %634 = vst [vmem:[#allocation2 + $0xa8] sm:$0xf0] %v618
  %635 = vst [vmem:[#allocation2 + $0xb0] sm:$0xf0] %v619
  %636 = vst [vmem:[#allocation2 + $0xb8] sm:$0xf0] %v620
  %637 = vrot.lane.b32.xlu0 %v32, 57
  %v638 = vpop.permute.xlu0 %637
  %639 = vrot.lane.b32.xlu0 %v40, 57
  %v640 = vpop.permute.xlu0 %639
  %641 = vrot.lane.b32.xlu0 %v33, 57
  %v642 = vpop.permute.xlu0 %641
  %643 = vrot.lane.b32.xlu0 %v41, 57
  %v644 = vpop.permute.xlu0 %643
  %645 = vrot.lane.b32.xlu0 %v34, 57
  %v646 = vpop.permute.xlu0 %645
  %647 = vrot.lane.b32.xlu0 %v42, 57
  %v648 = vpop.permute.xlu0 %647
  %649 = vrot.lane.b32.xlu0 %v35, 57
  %v650 = vpop.permute.xlu0 %649
  %651 = vrot.lane.b32.xlu0 %v43, 57
  %v652 = vpop.permute.xlu0 %651
  %vm653 = vcmp.lt.s32.totalorder %v65, 57
  %v654 = vsel %vm653, %v650, %v652
  %v655 = vsel %vm653, %v648, %v650
  %v656 = vsel %vm653, %v646, %v648
  %v657 = vsel %vm653, %v644, %v646
  %v658 = vsel %vm653, %v642, %v644
  %v659 = vsel %vm653, %v640, %v642
  %v660 = vsel %vm653, %v638, %v640
  %v661 = vsel %vm653, %v652, %v638
  %s662 = scalar_lea.vmem %s1, 6
  %v663 = vld [vmem:[%s662] ss:$8 sm:$0xf]
  %v664 = vld [vmem:[%s662] ss:$8 sm:$0xf0]
  %v665 = vor.u32 %v663, %v664
  %v667 = vlaneseq
  %v668 = vshrl.u32 %v667, 7
  %v669 = vsub.s32 0, %v668
  %v670 = vrot.slane %v665, %v669
  %v671 = vlaneseq
  %v672 = vshrl.u32 %v671, 7
  %v673 = vsub.s32 1, %v672
  %v674 = vrot.slane %v665, %v673
  %v675 = vlaneseq
  %v676 = vshrl.u32 %v675, 7
  %v677 = vsub.s32 2, %v676
  %v678 = vrot.slane %v665, %v677
  %v679 = vlaneseq
  %v680 = vshrl.u32 %v679, 7
  %v681 = vsub.s32 3, %v680
  %v682 = vrot.slane %v665, %v681
  %v683 = vlaneseq
  %v684 = vshrl.u32 %v683, 7
  %v685 = vsub.s32 4, %v684
  %v686 = vrot.slane %v665, %v685
  %v687 = vlaneseq
  %v688 = vshrl.u32 %v687, 7
  %v689 = vsub.s32 5, %v688
  %v690 = vrot.slane %v665, %v689
  %v691 = vlaneseq
  %v692 = vshrl.u32 %v691, 7
  %v693 = vsub.s32 6, %v692
  %v694 = vrot.slane %v665, %v693
  %v695 = vlaneseq
  %v696 = vshrl.u32 %v695, 7
  %v697 = vsub.s32 7, %v696
  %v698 = vrot.slane %v665, %v697
  %v707 = vmul.f32 %v661, %v670
  %v708 = vmul.f32 %v660, %v674
  %v709 = vmul.f32 %v659, %v678
  %v710 = vmul.f32 %v658, %v682
  %v711 = vmul.f32 %v657, %v686
  %v712 = vmul.f32 %v656, %v690
  %v713 = vmul.f32 %v655, %v694
  %v714 = vmul.f32 %v654, %v698
  %715 = vst [vmem:[#allocation2 + $0xc0] sm:$0xf] %v707
  %716 = vst [vmem:[#allocation2 + $0xc8] sm:$0xf] %v708
  %717 = vst [vmem:[#allocation2 + $0xd0] sm:$0xf] %v709
  %718 = vst [vmem:[#allocation2 + $0xd8] sm:$0xf] %v710
  %719 = vst [vmem:[#allocation2 + $0xe0] sm:$0xf] %v711
  %720 = vst [vmem:[#allocation2 + $0xe8] sm:$0xf] %v712
  %721 = vst [vmem:[#allocation2 + $0xf0] sm:$0xf] %v713
  %722 = vst [vmem:[#allocation2 + $0xf8] sm:$0xf] %v714
  %723 = vrot.lane.b32.xlu0 %v32, 56
  %v724 = vpop.permute.xlu0 %723
  %725 = vrot.lane.b32.xlu0 %v40, 56
  %v726 = vpop.permute.xlu0 %725
  %727 = vrot.lane.b32.xlu0 %v33, 56
  %v728 = vpop.permute.xlu0 %727
  %729 = vrot.lane.b32.xlu0 %v41, 56
  %v730 = vpop.permute.xlu0 %729
  %731 = vrot.lane.b32.xlu0 %v34, 56
  %v732 = vpop.permute.xlu0 %731
  %733 = vrot.lane.b32.xlu0 %v42, 56
  %v734 = vpop.permute.xlu0 %733
  %735 = vrot.lane.b32.xlu0 %v35, 56
  %v736 = vpop.permute.xlu0 %735
  %737 = vrot.lane.b32.xlu0 %v43, 56
  %v738 = vpop.permute.xlu0 %737
  %vm739 = vcmp.lt.s32.totalorder %v65, 56
  %v740 = vsel %vm739, %v736, %v738
  %v741 = vsel %vm739, %v734, %v736
  %v742 = vsel %vm739, %v732, %v734
  %v743 = vsel %vm739, %v730, %v732
  %v744 = vsel %vm739, %v728, %v730
  %v745 = vsel %vm739, %v726, %v728
  %v746 = vsel %vm739, %v724, %v726
  %v747 = vsel %vm739, %v738, %v724
  %s748 = scalar_lea.vmem %s1, 7
  %v749 = vld [vmem:[%s748] ss:$8 sm:$0xf]
  %v750 = vld [vmem:[%s748] ss:$8 sm:$0xf0]
  %v751 = vor.u32 %v749, %v750
  %v753 = vlaneseq
  %v754 = vshrl.u32 %v753, 7
  %v755 = vsub.s32 0, %v754
  %v756 = vrot.slane %v751, %v755
  %v757 = vlaneseq
  %v758 = vshrl.u32 %v757, 7
  %v759 = vsub.s32 1, %v758
  %v760 = vrot.slane %v751, %v759
  %v761 = vlaneseq
  %v762 = vshrl.u32 %v761, 7
  %v763 = vsub.s32 2, %v762
  %v764 = vrot.slane %v751, %v763
  %v765 = vlaneseq
  %v766 = vshrl.u32 %v765, 7
  %v767 = vsub.s32 3, %v766
  %v768 = vrot.slane %v751, %v767
  %v769 = vlaneseq
  %v770 = vshrl.u32 %v769, 7
  %v771 = vsub.s32 4, %v770
  %v772 = vrot.slane %v751, %v771
  %v773 = vlaneseq
  %v774 = vshrl.u32 %v773, 7
  %v775 = vsub.s32 5, %v774
  %v776 = vrot.slane %v751, %v775
  %v777 = vlaneseq
  %v778 = vshrl.u32 %v777, 7
  %v779 = vsub.s32 6, %v778
  %v780 = vrot.slane %v751, %v779
  %v781 = vlaneseq
  %v782 = vshrl.u32 %v781, 7
  %v783 = vsub.s32 7, %v782
  %v784 = vrot.slane %v751, %v783
  %v793 = vmul.f32 %v747, %v756
  %v794 = vmul.f32 %v746, %v760
  %v795 = vmul.f32 %v745, %v764
  %v796 = vmul.f32 %v744, %v768
  %v797 = vmul.f32 %v743, %v772
  %v798 = vmul.f32 %v742, %v776
  %v799 = vmul.f32 %v741, %v780
  %v800 = vmul.f32 %v740, %v784
  %v809 = vrot.slane %v793, 4
  %v810 = vrot.slane %v794, 4
  %v811 = vrot.slane %v795, 4
  %v812 = vrot.slane %v796, 4
  %v813 = vrot.slane %v797, 4
  %v814 = vrot.slane %v798, 4
  %v815 = vrot.slane %v799, 4
  %v816 = vrot.slane %v800, 4
  %825 = vst [vmem:[#allocation2 + $0xc0] sm:$0xf0] %v809
  %826 = vst [vmem:[#allocation2 + $0xc8] sm:$0xf0] %v810
  %827 = vst [vmem:[#allocation2 + $0xd0] sm:$0xf0] %v811
  %828 = vst [vmem:[#allocation2 + $0xd8] sm:$0xf0] %v812
  %829 = vst [vmem:[#allocation2 + $0xe0] sm:$0xf0] %v813
  %830 = vst [vmem:[#allocation2 + $0xe8] sm:$0xf0] %v814
  %831 = vst [vmem:[#allocation2 + $0xf0] sm:$0xf0] %v815
  %832 = vst [vmem:[#allocation2 + $0xf8] sm:$0xf0] %v816
  %833 = vrot.lane.b32.xlu0 %v32, 55
  %v834 = vpop.permute.xlu0 %833
  %835 = vrot.lane.b32.xlu0 %v40, 55
  %v836 = vpop.permute.xlu0 %835
  %837 = vrot.lane.b32.xlu0 %v33, 55
  %v838 = vpop.permute.xlu0 %837
  %839 = vrot.lane.b32.xlu0 %v41, 55
  %v840 = vpop.permute.xlu0 %839
  %841 = vrot.lane.b32.xlu0 %v34, 55
  %v842 = vpop.permute.xlu0 %841
  %843 = vrot.lane.b32.xlu0 %v42, 55
  %v844 = vpop.permute.xlu0 %843
  %845 = vrot.lane.b32.xlu0 %v35, 55
  %v846 = vpop.permute.xlu0 %845
  %847 = vrot.lane.b32.xlu0 %v43, 55
  %v848 = vpop.permute.xlu0 %847
  %vm849 = vcmp.lt.s32.totalorder %v65, 55
  %v850 = vsel %vm849, %v846, %v848
  %v851 = vsel %vm849, %v844, %v846
  %v852 = vsel %vm849, %v842, %v844
  %v853 = vsel %vm849, %v840, %v842
  %v854 = vsel %vm849, %v838, %v840
  %v855 = vsel %vm849, %v836, %v838
  %v856 = vsel %vm849, %v834, %v836
  %v857 = vsel %vm849, %v848, %v834
  %s858 = scalar_lea.vmem %s1, 64
  %v859 = vld [vmem:[%s858] ss:$8 sm:$0xf]
  %v860 = vld [vmem:[%s858] ss:$8 sm:$0xf0]
  %v861 = vor.u32 %v859, %v860
  %v863 = vlaneseq
  %v864 = vshrl.u32 %v863, 7
  %v865 = vsub.s32 0, %v864
  %v866 = vrot.slane %v861, %v865
  %v867 = vlaneseq
  %v868 = vshrl.u32 %v867, 7
  %v869 = vsub.s32 1, %v868
  %v870 = vrot.slane %v861, %v869
  %v871 = vlaneseq
  %v872 = vshrl.u32 %v871, 7
  %v873 = vsub.s32 2, %v872
  %v874 = vrot.slane %v861, %v873
  %v875 = vlaneseq
  %v876 = vshrl.u32 %v875, 7
  %v877 = vsub.s32 3, %v876
  %v878 = vrot.slane %v861, %v877
  %v879 = vlaneseq
  %v880 = vshrl.u32 %v879, 7
  %v881 = vsub.s32 4, %v880
  %v882 = vrot.slane %v861, %v881
  %v883 = vlaneseq
  %v884 = vshrl.u32 %v883, 7
  %v885 = vsub.s32 5, %v884
  %v886 = vrot.slane %v861, %v885
  %v887 = vlaneseq
  %v888 = vshrl.u32 %v887, 7
  %v889 = vsub.s32 6, %v888
  %v890 = vrot.slane %v861, %v889
  %v891 = vlaneseq
  %v892 = vshrl.u32 %v891, 7
  %v893 = vsub.s32 7, %v892
  %v894 = vrot.slane %v861, %v893
  %v903 = vmul.f32 %v857, %v866
  %v904 = vmul.f32 %v856, %v870
  %v905 = vmul.f32 %v855, %v874
  %v906 = vmul.f32 %v854, %v878
  %v907 = vmul.f32 %v853, %v882
  %v908 = vmul.f32 %v852, %v886
  %v909 = vmul.f32 %v851, %v890
  %v910 = vmul.f32 %v850, %v894
  %911 = vst [vmem:[#allocation2 + $0x100] sm:$0xf] %v903
  %912 = vst [vmem:[#allocation2 + $0x108] sm:$0xf] %v904
  %913 = vst [vmem:[#allocation2 + $0x110] sm:$0xf] %v905
  %914 = vst [vmem:[#allocation2 + $0x118] sm:$0xf] %v906
  %915 = vst [vmem:[#allocation2 + $0x120] sm:$0xf] %v907
  %916 = vst [vmem:[#allocation2 + $0x128] sm:$0xf] %v908
  %917 = vst [vmem:[#allocation2 + $0x130] sm:$0xf] %v909
  %918 = vst [vmem:[#allocation2 + $0x138] sm:$0xf] %v910
  %919 = vrot.lane.b32.xlu0 %v32, 9
  %v920 = vpop.permute.xlu0 %919
  %921 = vrot.lane.b32.xlu0 %v40, 9
  %v922 = vpop.permute.xlu0 %921
  %923 = vrot.lane.b32.xlu0 %v33, 9
  %v924 = vpop.permute.xlu0 %923
  %925 = vrot.lane.b32.xlu0 %v41, 9
  %v926 = vpop.permute.xlu0 %925
  %927 = vrot.lane.b32.xlu0 %v34, 9
  %v928 = vpop.permute.xlu0 %927
  %929 = vrot.lane.b32.xlu0 %v42, 9
  %v930 = vpop.permute.xlu0 %929
  %931 = vrot.lane.b32.xlu0 %v35, 9
  %v932 = vpop.permute.xlu0 %931
  %933 = vrot.lane.b32.xlu0 %v43, 9
  %v934 = vpop.permute.xlu0 %933
  %vm935 = vcmp.lt.s32.totalorder %v65, 9
  %v936 = vsel %vm935, %v932, %v934
  %v937 = vsel %vm935, %v930, %v932
  %v938 = vsel %vm935, %v928, %v930
  %v939 = vsel %vm935, %v926, %v928
  %v940 = vsel %vm935, %v924, %v926
  %v941 = vsel %vm935, %v922, %v924
  %v942 = vsel %vm935, %v920, %v922
  %v943 = vsel %vm935, %v934, %v920
  %s944 = scalar_lea.vmem %s1, 65
  %v945 = vld [vmem:[%s944] ss:$8 sm:$0xf]
  %v946 = vld [vmem:[%s944] ss:$8 sm:$0xf0]
  %v947 = vor.u32 %v945, %v946
  %v949 = vlaneseq
  %v950 = vshrl.u32 %v949, 7
  %v951 = vsub.s32 0, %v950
  %v952 = vrot.slane %v947, %v951
  %v953 = vlaneseq
  %v954 = vshrl.u32 %v953, 7
  %v955 = vsub.s32 1, %v954
  %v956 = vrot.slane %v947, %v955
  %v957 = vlaneseq
  %v958 = vshrl.u32 %v957, 7
  %v959 = vsub.s32 2, %v958
  %v960 = vrot.slane %v947, %v959
  %v961 = vlaneseq
  %v962 = vshrl.u32 %v961, 7
  %v963 = vsub.s32 3, %v962
  %v964 = vrot.slane %v947, %v963
  %v965 = vlaneseq
  %v966 = vshrl.u32 %v965, 7
  %v967 = vsub.s32 4, %v966
  %v968 = vrot.slane %v947, %v967
  %v969 = vlaneseq
  %v970 = vshrl.u32 %v969, 7
  %v971 = vsub.s32 5, %v970
  %v972 = vrot.slane %v947, %v971
  %v973 = vlaneseq
  %v974 = vshrl.u32 %v973, 7
  %v975 = vsub.s32 6, %v974
  %v976 = vrot.slane %v947, %v975
  %v977 = vlaneseq
  %v978 = vshrl.u32 %v977, 7
  %v979 = vsub.s32 7, %v978
  %v980 = vrot.slane %v947, %v979
  %v989 = vmul.f32 %v943, %v952
  %v990 = vmul.f32 %v942, %v956
  %v991 = vmul.f32 %v941, %v960
  %v992 = vmul.f32 %v940, %v964
  %v993 = vmul.f32 %v939, %v968
  %v994 = vmul.f32 %v938, %v972
  %v995 = vmul.f32 %v937, %v976
  %v996 = vmul.f32 %v936, %v980
  %v1005 = vrot.slane %v989, 4
  %v1006 = vrot.slane %v990, 4
  %v1007 = vrot.slane %v991, 4
  %v1008 = vrot.slane %v992, 4
  %v1009 = vrot.slane %v993, 4
  %v1010 = vrot.slane %v994, 4
  %v1011 = vrot.slane %v995, 4
  %v1012 = vrot.slane %v996, 4
  %1021 = vst [vmem:[#allocation2 + $0x100] sm:$0xf0] %v1005
  %1022 = vst [vmem:[#allocation2 + $0x108] sm:$0xf0] %v1006
  %1023 = vst [vmem:[#allocation2 + $0x110] sm:$0xf0] %v1007
  %1024 = vst [vmem:[#allocation2 + $0x118] sm:$0xf0] %v1008
  %1025 = vst [vmem:[#allocation2 + $0x120] sm:$0xf0] %v1009
  %1026 = vst [vmem:[#allocation2 + $0x128] sm:$0xf0] %v1010
  %1027 = vst [vmem:[#allocation2 + $0x130] sm:$0xf0] %v1011
  %1028 = vst [vmem:[#allocation2 + $0x138] sm:$0xf0] %v1012
  %1029 = vrot.lane.b32.xlu0 %v32, 8
  %v1030 = vpop.permute.xlu0 %1029
  %1031 = vrot.lane.b32.xlu0 %v40, 8
  %v1032 = vpop.permute.xlu0 %1031
  %1033 = vrot.lane.b32.xlu0 %v33, 8
  %v1034 = vpop.permute.xlu0 %1033
  %1035 = vrot.lane.b32.xlu0 %v41, 8
  %v1036 = vpop.permute.xlu0 %1035
  %1037 = vrot.lane.b32.xlu0 %v34, 8
  %v1038 = vpop.permute.xlu0 %1037
  %1039 = vrot.lane.b32.xlu0 %v42, 8
  %v1040 = vpop.permute.xlu0 %1039
  %1041 = vrot.lane.b32.xlu0 %v35, 8
  %v1042 = vpop.permute.xlu0 %1041
  %1043 = vrot.lane.b32.xlu0 %v43, 8
  %v1044 = vpop.permute.xlu0 %1043
  %vm1045 = vcmp.lt.s32.totalorder %v65, 8
  %v1046 = vsel %vm1045, %v1042, %v1044
  %v1047 = vsel %vm1045, %v1040, %v1042
  %v1048 = vsel %vm1045, %v1038, %v1040
  %v1049 = vsel %vm1045, %v1036, %v1038
  %v1050 = vsel %vm1045, %v1034, %v1036
  %v1051 = vsel %vm1045, %v1032, %v1034
  %v1052 = vsel %vm1045, %v1030, %v1032
  %v1053 = vsel %vm1045, %v1044, %v1030
  %s1054 = scalar_lea.vmem %s1, 66
  %v1055 = vld [vmem:[%s1054] ss:$8 sm:$0xf]
  %v1056 = vld [vmem:[%s1054] ss:$8 sm:$0xf0]
  %v1057 = vor.u32 %v1055, %v1056
  %v1059 = vlaneseq
  %v1060 = vshrl.u32 %v1059, 7
  %v1061 = vsub.s32 0, %v1060
  %v1062 = vrot.slane %v1057, %v1061
  %v1063 = vlaneseq
  %v1064 = vshrl.u32 %v1063, 7
  %v1065 = vsub.s32 1, %v1064
  %v1066 = vrot.slane %v1057, %v1065
  %v1067 = vlaneseq
  %v1068 = vshrl.u32 %v1067, 7
  %v1069 = vsub.s32 2, %v1068
  %v1070 = vrot.slane %v1057, %v1069
  %v1071 = vlaneseq
  %v1072 = vshrl.u32 %v1071, 7
  %v1073 = vsub.s32 3, %v1072
  %v1074 = vrot.slane %v1057, %v1073
  %v1075 = vlaneseq
  %v1076 = vshrl.u32 %v1075, 7
  %v1077 = vsub.s32 4, %v1076
  %v1078 = vrot.slane %v1057, %v1077
  %v1079 = vlaneseq
  %v1080 = vshrl.u32 %v1079, 7
  %v1081 = vsub.s32 5, %v1080
  %v1082 = vrot.slane %v1057, %v1081
  %v1083 = vlaneseq
  %v1084 = vshrl.u32 %v1083, 7
  %v1085 = vsub.s32 6, %v1084
  %v1086 = vrot.slane %v1057, %v1085
  %v1087 = vlaneseq
  %v1088 = vshrl.u32 %v1087, 7
  %v1089 = vsub.s32 7, %v1088
  %v1090 = vrot.slane %v1057, %v1089
  %v1099 = vmul.f32 %v1053, %v1062
  %v1100 = vmul.f32 %v1052, %v1066
  %v1101 = vmul.f32 %v1051, %v1070
  %v1102 = vmul.f32 %v1050, %v1074
  %v1103 = vmul.f32 %v1049, %v1078
  %v1104 = vmul.f32 %v1048, %v1082
  %v1105 = vmul.f32 %v1047, %v1086
  %v1106 = vmul.f32 %v1046, %v1090
  %1107 = vst [vmem:[#allocation2 + $0x140] sm:$0xf] %v1099
  %1108 = vst [vmem:[#allocation2 + $0x148] sm:$0xf] %v1100
  %1109 = vst [vmem:[#allocation2 + $0x150] sm:$0xf] %v1101
  %1110 = vst [vmem:[#allocation2 + $0x158] sm:$0xf] %v1102
  %1111 = vst [vmem:[#allocation2 + $0x160] sm:$0xf] %v1103
  %1112 = vst [vmem:[#allocation2 + $0x168] sm:$0xf] %v1104
  %1113 = vst [vmem:[#allocation2 + $0x170] sm:$0xf] %v1105
  %1114 = vst [vmem:[#allocation2 + $0x178] sm:$0xf] %v1106
  %1115 = vrot.lane.b32.xlu0 %v32, 7
  %v1116 = vpop.permute.xlu0 %1115
  %1117 = vrot.lane.b32.xlu0 %v40, 7
  %v1118 = vpop.permute.xlu0 %1117
  %1119 = vrot.lane.b32.xlu0 %v33, 7
  %v1120 = vpop.permute.xlu0 %1119
  %1121 = vrot.lane.b32.xlu0 %v41, 7
  %v1122 = vpop.permute.xlu0 %1121
  %1123 = vrot.lane.b32.xlu0 %v34, 7
  %v1124 = vpop.permute.xlu0 %1123
  %1125 = vrot.lane.b32.xlu0 %v42, 7
  %v1126 = vpop.permute.xlu0 %1125
  %1127 = vrot.lane.b32.xlu0 %v35, 7
  %v1128 = vpop.permute.xlu0 %1127
  %1129 = vrot.lane.b32.xlu0 %v43, 7
  %v1130 = vpop.permute.xlu0 %1129
  %vm1131 = vcmp.lt.s32.totalorder %v65, 7
  %v1132 = vsel %vm1131, %v1128, %v1130
  %v1133 = vsel %vm1131, %v1126, %v1128
  %v1134 = vsel %vm1131, %v1124, %v1126
  %v1135 = vsel %vm1131, %v1122, %v1124
  %v1136 = vsel %vm1131, %v1120, %v1122
  %v1137 = vsel %vm1131, %v1118, %v1120
  %v1138 = vsel %vm1131, %v1116, %v1118
  %v1139 = vsel %vm1131, %v1130, %v1116
  %s1140 = scalar_lea.vmem %s1, 67
  %v1141 = vld [vmem:[%s1140] ss:$8 sm:$0xf]
  %v1142 = vld [vmem:[%s1140] ss:$8 sm:$0xf0]
  %v1143 = vor.u32 %v1141, %v1142
  %v1145 = vlaneseq
  %v1146 = vshrl.u32 %v1145, 7
  %v1147 = vsub.s32 0, %v1146
  %v1148 = vrot.slane %v1143, %v1147
  %v1149 = vlaneseq
  %v1150 = vshrl.u32 %v1149, 7
  %v1151 = vsub.s32 1, %v1150
  %v1152 = vrot.slane %v1143, %v1151
  %v1153 = vlaneseq
  %v1154 = vshrl.u32 %v1153, 7
  %v1155 = vsub.s32 2, %v1154
  %v1156 = vrot.slane %v1143, %v1155
  %v1157 = vlaneseq
  %v1158 = vshrl.u32 %v1157, 7
  %v1159 = vsub.s32 3, %v1158
  %v1160 = vrot.slane %v1143, %v1159
  %v1161 = vlaneseq
  %v1162 = vshrl.u32 %v1161, 7
  %v1163 = vsub.s32 4, %v1162
  %v1164 = vrot.slane %v1143, %v1163
  %v1165 = vlaneseq
  %v1166 = vshrl.u32 %v1165, 7
  %v1167 = vsub.s32 5, %v1166
  %v1168 = vrot.slane %v1143, %v1167
  %v1169 = vlaneseq
  %v1170 = vshrl.u32 %v1169, 7
  %v1171 = vsub.s32 6, %v1170
  %v1172 = vrot.slane %v1143, %v1171
  %v1173 = vlaneseq
  %v1174 = vshrl.u32 %v1173, 7
  %v1175 = vsub.s32 7, %v1174
  %v1176 = vrot.slane %v1143, %v1175
  %v1185 = vmul.f32 %v1139, %v1148
  %v1186 = vmul.f32 %v1138, %v1152
  %v1187 = vmul.f32 %v1137, %v1156
  %v1188 = vmul.f32 %v1136, %v1160
  %v1189 = vmul.f32 %v1135, %v1164
  %v1190 = vmul.f32 %v1134, %v1168
  %v1191 = vmul.f32 %v1133, %v1172
  %v1192 = vmul.f32 %v1132, %v1176
  %v1201 = vrot.slane %v1185, 4
  %v1202 = vrot.slane %v1186, 4
  %v1203 = vrot.slane %v1187, 4
  %v1204 = vrot.slane %v1188, 4
  %v1205 = vrot.slane %v1189, 4
  %v1206 = vrot.slane %v1190, 4
  %v1207 = vrot.slane %v1191, 4
  %v1208 = vrot.slane %v1192, 4
  %1217 = vst [vmem:[#allocation2 + $0x140] sm:$0xf0] %v1201
  %1218 = vst [vmem:[#allocation2 + $0x148] sm:$0xf0] %v1202
  %1219 = vst [vmem:[#allocation2 + $0x150] sm:$0xf0] %v1203
  %1220 = vst [vmem:[#allocation2 + $0x158] sm:$0xf0] %v1204
  %1221 = vst [vmem:[#allocation2 + $0x160] sm:$0xf0] %v1205
  %1222 = vst [vmem:[#allocation2 + $0x168] sm:$0xf0] %v1206
  %1223 = vst [vmem:[#allocation2 + $0x170] sm:$0xf0] %v1207
  %1224 = vst [vmem:[#allocation2 + $0x178] sm:$0xf0] %v1208
  %1225 = vrot.lane.b32.xlu0 %v32, 1
  %v1226 = vpop.permute.xlu0 %1225
  %1227 = vrot.lane.b32.xlu0 %v40, 1
  %v1228 = vpop.permute.xlu0 %1227
  %1229 = vrot.lane.b32.xlu0 %v33, 1
  %v1230 = vpop.permute.xlu0 %1229
  %1231 = vrot.lane.b32.xlu0 %v41, 1
  %v1232 = vpop.permute.xlu0 %1231
  %1233 = vrot.lane.b32.xlu0 %v34, 1
  %v1234 = vpop.permute.xlu0 %1233
  %1235 = vrot.lane.b32.xlu0 %v42, 1
  %v1236 = vpop.permute.xlu0 %1235
  %1237 = vrot.lane.b32.xlu0 %v35, 1
  %v1238 = vpop.permute.xlu0 %1237
  %1239 = vrot.lane.b32.xlu0 %v43, 1
  %v1240 = vpop.permute.xlu0 %1239
  %vm1241 = vcmp.lt.s32.totalorder %v65, 1
  %v1242 = vsel %vm1241, %v1238, %v1240
  %v1243 = vsel %vm1241, %v1236, %v1238
  %v1244 = vsel %vm1241, %v1234, %v1236
  %v1245 = vsel %vm1241, %v1232, %v1234
  %v1246 = vsel %vm1241, %v1230, %v1232
  %v1247 = vsel %vm1241, %v1228, %v1230
  %v1248 = vsel %vm1241, %v1226, %v1228
  %v1249 = vsel %vm1241, %v1240, %v1226
  %s1250 = scalar_lea.vmem %s1, 68
  %v1251 = vld [vmem:[%s1250] ss:$8 sm:$0xf]
  %v1252 = vld [vmem:[%s1250] ss:$8 sm:$0xf0]
  %v1253 = vor.u32 %v1251, %v1252
  %v1255 = vlaneseq
  %v1256 = vshrl.u32 %v1255, 7
  %v1257 = vsub.s32 0, %v1256
  %v1258 = vrot.slane %v1253, %v1257
  %v1259 = vlaneseq
  %v1260 = vshrl.u32 %v1259, 7
  %v1261 = vsub.s32 1, %v1260
  %v1262 = vrot.slane %v1253, %v1261
  %v1263 = vlaneseq
  %v1264 = vshrl.u32 %v1263, 7
  %v1265 = vsub.s32 2, %v1264
  %v1266 = vrot.slane %v1253, %v1265
  %v1267 = vlaneseq
  %v1268 = vshrl.u32 %v1267, 7
  %v1269 = vsub.s32 3, %v1268
  %v1270 = vrot.slane %v1253, %v1269
  %v1271 = vlaneseq
  %v1272 = vshrl.u32 %v1271, 7
  %v1273 = vsub.s32 4, %v1272
  %v1274 = vrot.slane %v1253, %v1273
  %v1275 = vlaneseq
  %v1276 = vshrl.u32 %v1275, 7
  %v1277 = vsub.s32 5, %v1276
  %v1278 = vrot.slane %v1253, %v1277
  %v1279 = vlaneseq
  %v1280 = vshrl.u32 %v1279, 7
  %v1281 = vsub.s32 6, %v1280
  %v1282 = vrot.slane %v1253, %v1281
  %v1283 = vlaneseq
  %v1284 = vshrl.u32 %v1283, 7
  %v1285 = vsub.s32 7, %v1284
  %v1286 = vrot.slane %v1253, %v1285
  %v1295 = vmul.f32 %v1249, %v1258
  %v1296 = vmul.f32 %v1248, %v1262
  %v1297 = vmul.f32 %v1247, %v1266
  %v1298 = vmul.f32 %v1246, %v1270
  %v1299 = vmul.f32 %v1245, %v1274
  %v1300 = vmul.f32 %v1244, %v1278
  %v1301 = vmul.f32 %v1243, %v1282
  %v1302 = vmul.f32 %v1242, %v1286
  %1303 = vst [vmem:[#allocation2 + $0x180] sm:$0xf] %v1295
  %1304 = vst [vmem:[#allocation2 + $0x188] sm:$0xf] %v1296
  %1305 = vst [vmem:[#allocation2 + $0x190] sm:$0xf] %v1297
  %1306 = vst [vmem:[#allocation2 + $0x198] sm:$0xf] %v1298
  %1307 = vst [vmem:[#allocation2 + $0x1a0] sm:$0xf] %v1299
  %1308 = vst [vmem:[#allocation2 + $0x1a8] sm:$0xf] %v1300
  %1309 = vst [vmem:[#allocation2 + $0x1b0] sm:$0xf] %v1301
  %1310 = vst [vmem:[#allocation2 + $0x1b8] sm:$0xf] %v1302
  %v1311 = vcombine.low %v32, %v32
  %v1312 = vcombine.low %v33, %v33
  %v1313 = vcombine.low %v34, %v34
  %v1314 = vcombine.low %v35, %v35
  %1319 = vst [vmem:[#allocation2 + $0x180] sm:$0xf0] %v1311
  %1320 = vst [vmem:[#allocation2 + $0x188] sm:$0xf0] %v32
  %1321 = vst [vmem:[#allocation2 + $0x190] sm:$0xf0] %v1312
  %1322 = vst [vmem:[#allocation2 + $0x198] sm:$0xf0] %v33
  %1323 = vst [vmem:[#allocation2 + $0x1a0] sm:$0xf0] %v1313
  %1324 = vst [vmem:[#allocation2 + $0x1a8] sm:$0xf0] %v34
  %1325 = vst [vmem:[#allocation2 + $0x1b0] sm:$0xf0] %v1314
  %1326 = vst [vmem:[#allocation2 + $0x1b8] sm:$0xf0] %v35
  %1327 = vrot.lane.b32.xlu0 %v32, 127
  %v1328 = vpop.permute.xlu0 %1327
  %1329 = vrot.lane.b32.xlu0 %v40, 127
  %v1330 = vpop.permute.xlu0 %1329
  %1331 = vrot.lane.b32.xlu0 %v33, 127
  %v1332 = vpop.permute.xlu0 %1331
  %1333 = vrot.lane.b32.xlu0 %v41, 127
  %v1334 = vpop.permute.xlu0 %1333
  %1335 = vrot.lane.b32.xlu0 %v34, 127
  %v1336 = vpop.permute.xlu0 %1335
  %1337 = vrot.lane.b32.xlu0 %v42, 127
  %v1338 = vpop.permute.xlu0 %1337
  %1339 = vrot.lane.b32.xlu0 %v35, 127
  %v1340 = vpop.permute.xlu0 %1339
  %1341 = vrot.lane.b32.xlu0 %v43, 127
  %v1342 = vpop.permute.xlu0 %1341
  %vm1343 = vcmp.lt.s32.totalorder %v65, 127
  %v1344 = vsel %vm1343, %v1340, %v1342
  %v1345 = vsel %vm1343, %v1338, %v1340
  %v1346 = vsel %vm1343, %v1336, %v1338
  %v1347 = vsel %vm1343, %v1334, %v1336
  %v1348 = vsel %vm1343, %v1332, %v1334
  %v1349 = vsel %vm1343, %v1330, %v1332
  %v1350 = vsel %vm1343, %v1328, %v1330
  %v1351 = vsel %vm1343, %v1342, %v1328
  %s1352 = scalar_lea.vmem %s1, 70
  %v1353 = vld [vmem:[%s1352] ss:$8 sm:$0xf]
  %v1354 = vld [vmem:[%s1352] ss:$8 sm:$0xf0]
  %v1355 = vor.u32 %v1353, %v1354
  %v1357 = vlaneseq
  %v1358 = vshrl.u32 %v1357, 7
  %v1359 = vsub.s32 0, %v1358
  %v1360 = vrot.slane %v1355, %v1359
  %v1361 = vlaneseq
  %v1362 = vshrl.u32 %v1361, 7
  %v1363 = vsub.s32 1, %v1362
  %v1364 = vrot.slane %v1355, %v1363
  %v1365 = vlaneseq
  %v1366 = vshrl.u32 %v1365, 7
  %v1367 = vsub.s32 2, %v1366
  %v1368 = vrot.slane %v1355, %v1367
  %v1369 = vlaneseq
  %v1370 = vshrl.u32 %v1369, 7
  %v1371 = vsub.s32 3, %v1370
  %v1372 = vrot.slane %v1355, %v1371
  %v1373 = vlaneseq
  %v1374 = vshrl.u32 %v1373, 7
  %v1375 = vsub.s32 4, %v1374
  %v1376 = vrot.slane %v1355, %v1375
  %v1377 = vlaneseq
  %v1378 = vshrl.u32 %v1377, 7
  %v1379 = vsub.s32 5, %v1378
  %v1380 = vrot.slane %v1355, %v1379
  %v1381 = vlaneseq
  %v1382 = vshrl.u32 %v1381, 7
  %v1383 = vsub.s32 6, %v1382
  %v1384 = vrot.slane %v1355, %v1383
  %v1385 = vlaneseq
  %v1386 = vshrl.u32 %v1385, 7
  %v1387 = vsub.s32 7, %v1386
  %v1388 = vrot.slane %v1355, %v1387
  %v1397 = vmul.f32 %v1350, %v1360
  %v1398 = vmul.f32 %v1349, %v1364
  %v1399 = vmul.f32 %v1348, %v1368
  %v1400 = vmul.f32 %v1347, %v1372
  %v1401 = vmul.f32 %v1346, %v1376
  %v1402 = vmul.f32 %v1345, %v1380
  %v1403 = vmul.f32 %v1344, %v1384
  %v1404 = vmul.f32 %v1351, %v1388
  %1405 = vst [vmem:[#allocation2 + $0x1c0] sm:$0xf] %v1397
  %1406 = vst [vmem:[#allocation2 + $0x1c8] sm:$0xf] %v1398
  %1407 = vst [vmem:[#allocation2 + $0x1d0] sm:$0xf] %v1399
  %1408 = vst [vmem:[#allocation2 + $0x1d8] sm:$0xf] %v1400
  %1409 = vst [vmem:[#allocation2 + $0x1e0] sm:$0xf] %v1401
  %1410 = vst [vmem:[#allocation2 + $0x1e8] sm:$0xf] %v1402
  %1411 = vst [vmem:[#allocation2 + $0x1f0] sm:$0xf] %v1403
  %1412 = vst [vmem:[#allocation2 + $0x1f8] sm:$0xf] %v1404
  %1413 = vrot.lane.b32.xlu0 %v32, 121
  %v1414 = vpop.permute.xlu0 %1413
  %1415 = vrot.lane.b32.xlu0 %v40, 121
  %v1416 = vpop.permute.xlu0 %1415
  %1417 = vrot.lane.b32.xlu0 %v33, 121
  %v1418 = vpop.permute.xlu0 %1417
  %1419 = vrot.lane.b32.xlu0 %v41, 121
  %v1420 = vpop.permute.xlu0 %1419
  %1421 = vrot.lane.b32.xlu0 %v34, 121
  %v1422 = vpop.permute.xlu0 %1421
  %1423 = vrot.lane.b32.xlu0 %v42, 121
  %v1424 = vpop.permute.xlu0 %1423
  %1425 = vrot.lane.b32.xlu0 %v35, 121
  %v1426 = vpop.permute.xlu0 %1425
  %1427 = vrot.lane.b32.xlu0 %v43, 121
  %v1428 = vpop.permute.xlu0 %1427
  %vm1429 = vcmp.lt.s32.totalorder %v65, 121
  %v1430 = vsel %vm1429, %v1426, %v1428
  %v1431 = vsel %vm1429, %v1424, %v1426
  %v1432 = vsel %vm1429, %v1422, %v1424
  %v1433 = vsel %vm1429, %v1420, %v1422
  %v1434 = vsel %vm1429, %v1418, %v1420
  %v1435 = vsel %vm1429, %v1416, %v1418
  %v1436 = vsel %vm1429, %v1414, %v1416
  %v1437 = vsel %vm1429, %v1428, %v1414
  %s1438 = scalar_lea.vmem %s1, 71
  %v1439 = vld [vmem:[%s1438] ss:$8 sm:$0xf]
  %v1440 = vld [vmem:[%s1438] ss:$8 sm:$0xf0]
  %v1441 = vor.u32 %v1439, %v1440
  %v1443 = vlaneseq
  %v1444 = vshrl.u32 %v1443, 7
  %v1445 = vsub.s32 0, %v1444
  %v1446 = vrot.slane %v1441, %v1445
  %v1447 = vlaneseq
  %v1448 = vshrl.u32 %v1447, 7
  %v1449 = vsub.s32 1, %v1448
  %v1450 = vrot.slane %v1441, %v1449
  %v1451 = vlaneseq
  %v1452 = vshrl.u32 %v1451, 7
  %v1453 = vsub.s32 2, %v1452
  %v1454 = vrot.slane %v1441, %v1453
  %v1455 = vlaneseq
  %v1456 = vshrl.u32 %v1455, 7
  %v1457 = vsub.s32 3, %v1456
  %v1458 = vrot.slane %v1441, %v1457
  %v1459 = vlaneseq
  %v1460 = vshrl.u32 %v1459, 7
  %v1461 = vsub.s32 4, %v1460
  %v1462 = vrot.slane %v1441, %v1461
  %v1463 = vlaneseq
  %v1464 = vshrl.u32 %v1463, 7
  %v1465 = vsub.s32 5, %v1464
  %v1466 = vrot.slane %v1441, %v1465
  %v1467 = vlaneseq
  %v1468 = vshrl.u32 %v1467, 7
  %v1469 = vsub.s32 6, %v1468
  %v1470 = vrot.slane %v1441, %v1469
  %v1471 = vlaneseq
  %v1472 = vshrl.u32 %v1471, 7
  %v1473 = vsub.s32 7, %v1472
  %v1474 = vrot.slane %v1441, %v1473
  %v1483 = vmul.f32 %v1436, %v1446
  %v1484 = vmul.f32 %v1435, %v1450
  %v1485 = vmul.f32 %v1434, %v1454
  %v1486 = vmul.f32 %v1433, %v1458
  %v1487 = vmul.f32 %v1432, %v1462
  %v1488 = vmul.f32 %v1431, %v1466
  %v1489 = vmul.f32 %v1430, %v1470
  %v1490 = vmul.f32 %v1437, %v1474
  %v1499 = vrot.slane %v1483, 4
  %v1500 = vrot.slane %v1484, 4
  %v1501 = vrot.slane %v1485, 4
  %v1502 = vrot.slane %v1486, 4
  %v1503 = vrot.slane %v1487, 4
  %v1504 = vrot.slane %v1488, 4
  %v1505 = vrot.slane %v1489, 4
  %v1506 = vrot.slane %v1490, 4
  %1515 = vst [vmem:[#allocation2 + $0x1c0] sm:$0xf0] %v1499
  %1516 = vst [vmem:[#allocation2 + $0x1c8] sm:$0xf0] %v1500
  %1517 = vst [vmem:[#allocation2 + $0x1d0] sm:$0xf0] %v1501
  %1518 = vst [vmem:[#allocation2 + $0x1d8] sm:$0xf0] %v1502
  %1519 = vst [vmem:[#allocation2 + $0x1e0] sm:$0xf0] %v1503
  %1520 = vst [vmem:[#allocation2 + $0x1e8] sm:$0xf0] %v1504
  %1521 = vst [vmem:[#allocation2 + $0x1f0] sm:$0xf0] %v1505
  %1522 = vst [vmem:[#allocation2 + $0x1f8] sm:$0xf0] %v1506
  %1523 = vrot.lane.b32.xlu0 %v32, 120
  %v1524 = vpop.permute.xlu0 %1523
  %1525 = vrot.lane.b32.xlu0 %v40, 120
  %v1526 = vpop.permute.xlu0 %1525
  %1527 = vrot.lane.b32.xlu0 %v33, 120
  %v1528 = vpop.permute.xlu0 %1527
  %1529 = vrot.lane.b32.xlu0 %v41, 120
  %v1530 = vpop.permute.xlu0 %1529
  %1531 = vrot.lane.b32.xlu0 %v34, 120
  %v1532 = vpop.permute.xlu0 %1531
  %1533 = vrot.lane.b32.xlu0 %v42, 120
  %v1534 = vpop.permute.xlu0 %1533
  %1535 = vrot.lane.b32.xlu0 %v35, 120
  %v1536 = vpop.permute.xlu0 %1535
  %1537 = vrot.lane.b32.xlu0 %v43, 120
  %v1538 = vpop.permute.xlu0 %1537
  %vm1539 = vcmp.lt.s32.totalorder %v65, 120
  %v1540 = vsel %vm1539, %v1536, %v1538
  %v1541 = vsel %vm1539, %v1534, %v1536
  %v1542 = vsel %vm1539, %v1532, %v1534
  %v1543 = vsel %vm1539, %v1530, %v1532
  %v1544 = vsel %vm1539, %v1528, %v1530
  %v1545 = vsel %vm1539, %v1526, %v1528
  %v1546 = vsel %vm1539, %v1524, %v1526
  %v1547 = vsel %vm1539, %v1538, %v1524
  %s1548 = scalar_lea.vmem %s1, 128
  %v1549 = vld [vmem:[%s1548] ss:$8 sm:$0xf]
  %v1550 = vld [vmem:[%s1548] ss:$8 sm:$0xf0]
  %v1551 = vor.u32 %v1549, %v1550
  %v1553 = vlaneseq
  %v1554 = vshrl.u32 %v1553, 7
  %v1555 = vsub.s32 0, %v1554
  %v1556 = vrot.slane %v1551, %v1555
  %v1557 = vlaneseq
  %v1558 = vshrl.u32 %v1557, 7
  %v1559 = vsub.s32 1, %v1558
  %v1560 = vrot.slane %v1551, %v1559
  %v1561 = vlaneseq
  %v1562 = vshrl.u32 %v1561, 7
  %v1563 = vsub.s32 2, %v1562
  %v1564 = vrot.slane %v1551, %v1563
  %v1565 = vlaneseq
  %v1566 = vshrl.u32 %v1565, 7
  %v1567 = vsub.s32 3, %v1566
  %v1568 = vrot.slane %v1551, %v1567
  %v1569 = vlaneseq
  %v1570 = vshrl.u32 %v1569, 7
  %v1571 = vsub.s32 4, %v1570
  %v1572 = vrot.slane %v1551, %v1571
  %v1573 = vlaneseq
  %v1574 = vshrl.u32 %v1573, 7
  %v1575 = vsub.s32 5, %v1574
  %v1576 = vrot.slane %v1551, %v1575
  %v1577 = vlaneseq
  %v1578 = vshrl.u32 %v1577, 7
  %v1579 = vsub.s32 6, %v1578
  %v1580 = vrot.slane %v1551, %v1579
  %v1581 = vlaneseq
  %v1582 = vshrl.u32 %v1581, 7
  %v1583 = vsub.s32 7, %v1582
  %v1584 = vrot.slane %v1551, %v1583
  %v1593 = vmul.f32 %v1546, %v1556
  %v1594 = vmul.f32 %v1545, %v1560
  %v1595 = vmul.f32 %v1544, %v1564
  %v1596 = vmul.f32 %v1543, %v1568
  %v1597 = vmul.f32 %v1542, %v1572
  %v1598 = vmul.f32 %v1541, %v1576
  %v1599 = vmul.f32 %v1540, %v1580
  %v1600 = vmul.f32 %v1547, %v1584
  %1601 = vst [vmem:[#allocation2 + $0x200] sm:$0xf] %v1593
  %1602 = vst [vmem:[#allocation2 + $0x208] sm:$0xf] %v1594
  %1603 = vst [vmem:[#allocation2 + $0x210] sm:$0xf] %v1595
  %1604 = vst [vmem:[#allocation2 + $0x218] sm:$0xf] %v1596
  %1605 = vst [vmem:[#allocation2 + $0x220] sm:$0xf] %v1597
  %1606 = vst [vmem:[#allocation2 + $0x228] sm:$0xf] %v1598
  %1607 = vst [vmem:[#allocation2 + $0x230] sm:$0xf] %v1599
  %1608 = vst [vmem:[#allocation2 + $0x238] sm:$0xf] %v1600
  %1609 = vrot.lane.b32.xlu0 %v32, 119
  %v1610 = vpop.permute.xlu0 %1609
  %1611 = vrot.lane.b32.xlu0 %v40, 119
  %v1612 = vpop.permute.xlu0 %1611
  %1613 = vrot.lane.b32.xlu0 %v33, 119
  %v1614 = vpop.permute.xlu0 %1613
  %1615 = vrot.lane.b32.xlu0 %v41, 119
  %v1616 = vpop.permute.xlu0 %1615
  %1617 = vrot.lane.b32.xlu0 %v34, 119
  %v1618 = vpop.permute.xlu0 %1617
  %1619 = vrot.lane.b32.xlu0 %v42, 119
  %v1620 = vpop.permute.xlu0 %1619
  %1621 = vrot.lane.b32.xlu0 %v35, 119
  %v1622 = vpop.permute.xlu0 %1621
  %1623 = vrot.lane.b32.xlu0 %v43, 119
  %v1624 = vpop.permute.xlu0 %1623
  %vm1625 = vcmp.lt.s32.totalorder %v65, 119
  %v1626 = vsel %vm1625, %v1622, %v1624
  %v1627 = vsel %vm1625, %v1620, %v1622
  %v1628 = vsel %vm1625, %v1618, %v1620
  %v1629 = vsel %vm1625, %v1616, %v1618
  %v1630 = vsel %vm1625, %v1614, %v1616
  %v1631 = vsel %vm1625, %v1612, %v1614
  %v1632 = vsel %vm1625, %v1610, %v1612
  %v1633 = vsel %vm1625, %v1624, %v1610
  %s1634 = scalar_lea.vmem %s1, 129
  %v1635 = vld [vmem:[%s1634] ss:$8 sm:$0xf]
  %v1636 = vld [vmem:[%s1634] ss:$8 sm:$0xf0]
  %v1637 = vor.u32 %v1635, %v1636
  %v1639 = vlaneseq
  %v1640 = vshrl.u32 %v1639, 7
  %v1641 = vsub.s32 0, %v1640
  %v1642 = vrot.slane %v1637, %v1641
  %v1643 = vlaneseq
  %v1644 = vshrl.u32 %v1643, 7
  %v1645 = vsub.s32 1, %v1644
  %v1646 = vrot.slane %v1637, %v1645
  %v1647 = vlaneseq
  %v1648 = vshrl.u32 %v1647, 7
  %v1649 = vsub.s32 2, %v1648
  %v1650 = vrot.slane %v1637, %v1649
  %v1651 = vlaneseq
  %v1652 = vshrl.u32 %v1651, 7
  %v1653 = vsub.s32 3, %v1652
  %v1654 = vrot.slane %v1637, %v1653
  %v1655 = vlaneseq
  %v1656 = vshrl.u32 %v1655, 7
  %v1657 = vsub.s32 4, %v1656
  %v1658 = vrot.slane %v1637, %v1657
  %v1659 = vlaneseq
  %v1660 = vshrl.u32 %v1659, 7
  %v1661 = vsub.s32 5, %v1660
  %v1662 = vrot.slane %v1637, %v1661
  %v1663 = vlaneseq
  %v1664 = vshrl.u32 %v1663, 7
  %v1665 = vsub.s32 6, %v1664
  %v1666 = vrot.slane %v1637, %v1665
  %v1667 = vlaneseq
  %v1668 = vshrl.u32 %v1667, 7
  %v1669 = vsub.s32 7, %v1668
  %v1670 = vrot.slane %v1637, %v1669
  %v1679 = vmul.f32 %v1632, %v1642
  %v1680 = vmul.f32 %v1631, %v1646
  %v1681 = vmul.f32 %v1630, %v1650
  %v1682 = vmul.f32 %v1629, %v1654
  %v1683 = vmul.f32 %v1628, %v1658
  %v1684 = vmul.f32 %v1627, %v1662
  %v1685 = vmul.f32 %v1626, %v1666
  %v1686 = vmul.f32 %v1633, %v1670
  %v1695 = vrot.slane %v1679, 4
  %v1696 = vrot.slane %v1680, 4
  %v1697 = vrot.slane %v1681, 4
  %v1698 = vrot.slane %v1682, 4
  %v1699 = vrot.slane %v1683, 4
  %v1700 = vrot.slane %v1684, 4
  %v1701 = vrot.slane %v1685, 4
  %v1702 = vrot.slane %v1686, 4
  %1711 = vst [vmem:[#allocation2 + $0x200] sm:$0xf0] %v1695
  %1712 = vst [vmem:[#allocation2 + $0x208] sm:$0xf0] %v1696
  %1713 = vst [vmem:[#allocation2 + $0x210] sm:$0xf0] %v1697
  %1714 = vst [vmem:[#allocation2 + $0x218] sm:$0xf0] %v1698
  %1715 = vst [vmem:[#allocation2 + $0x220] sm:$0xf0] %v1699
  %1716 = vst [vmem:[#allocation2 + $0x228] sm:$0xf0] %v1700
  %1717 = vst [vmem:[#allocation2 + $0x230] sm:$0xf0] %v1701
  %1718 = vst [vmem:[#allocation2 + $0x238] sm:$0xf0] %v1702
  %s1719 = scalar_lea.vmem %s1, 130
  %v1720 = vld [vmem:[%s1719] ss:$8 sm:$0xf]
  %v1721 = vld [vmem:[%s1719] ss:$8 sm:$0xf0]
  %v1722 = vor.u32 %v1720, %v1721
  %v1724 = vlaneseq
  %v1725 = vshrl.u32 %v1724, 7
  %v1726 = vsub.s32 0, %v1725
  %v1727 = vrot.slane %v1722, %v1726
  %v1728 = vlaneseq
  %v1729 = vshrl.u32 %v1728, 7
  %v1730 = vsub.s32 1, %v1729
  %v1731 = vrot.slane %v1722, %v1730
  %v1732 = vlaneseq
  %v1733 = vshrl.u32 %v1732, 7
  %v1734 = vsub.s32 2, %v1733
  %v1735 = vrot.slane %v1722, %v1734
  %v1736 = vlaneseq
  %v1737 = vshrl.u32 %v1736, 7
  %v1738 = vsub.s32 3, %v1737
  %v1739 = vrot.slane %v1722, %v1738
  %v1740 = vlaneseq
  %v1741 = vshrl.u32 %v1740, 7
  %v1742 = vsub.s32 4, %v1741
  %v1743 = vrot.slane %v1722, %v1742
  %v1744 = vlaneseq
  %v1745 = vshrl.u32 %v1744, 7
  %v1746 = vsub.s32 5, %v1745
  %v1747 = vrot.slane %v1722, %v1746
  %v1748 = vlaneseq
  %v1749 = vshrl.u32 %v1748, 7
  %v1750 = vsub.s32 6, %v1749
  %v1751 = vrot.slane %v1722, %v1750
  %v1752 = vlaneseq
  %v1753 = vshrl.u32 %v1752, 7
  %v1754 = vsub.s32 7, %v1753
  %v1755 = vrot.slane %v1722, %v1754
  %v1764 = vmul.f32 %v73, %v1727
  %v1765 = vmul.f32 %v72, %v1731
  %v1766 = vmul.f32 %v71, %v1735
  %v1767 = vmul.f32 %v70, %v1739
  %v1768 = vmul.f32 %v69, %v1743
  %v1769 = vmul.f32 %v68, %v1747
  %v1770 = vmul.f32 %v67, %v1751
  %v1771 = vmul.f32 %v74, %v1755
  %1772 = vst [vmem:[#allocation2 + $0x240] sm:$0xf] %v1764
  %1773 = vst [vmem:[#allocation2 + $0x248] sm:$0xf] %v1765
  %1774 = vst [vmem:[#allocation2 + $0x250] sm:$0xf] %v1766
  %1775 = vst [vmem:[#allocation2 + $0x258] sm:$0xf] %v1767
  %1776 = vst [vmem:[#allocation2 + $0x260] sm:$0xf] %v1768
  %1777 = vst [vmem:[#allocation2 + $0x268] sm:$0xf] %v1769
  %1778 = vst [vmem:[#allocation2 + $0x270] sm:$0xf] %v1770
  %1779 = vst [vmem:[#allocation2 + $0x278] sm:$0xf] %v1771
  %s1780 = scalar_lea.vmem %s1, 131
  %v1781 = vld [vmem:[%s1780] ss:$8 sm:$0xf]
  %v1782 = vld [vmem:[%s1780] ss:$8 sm:$0xf0]
  %v1783 = vor.u32 %v1781, %v1782
  %v1785 = vlaneseq
  %v1786 = vshrl.u32 %v1785, 7
  %v1787 = vsub.s32 0, %v1786
  %v1788 = vrot.slane %v1783, %v1787
  %v1789 = vlaneseq
  %v1790 = vshrl.u32 %v1789, 7
  %v1791 = vsub.s32 1, %v1790
  %v1792 = vrot.slane %v1783, %v1791
  %v1793 = vlaneseq
  %v1794 = vshrl.u32 %v1793, 7
  %v1795 = vsub.s32 2, %v1794
  %v1796 = vrot.slane %v1783, %v1795
  %v1797 = vlaneseq
  %v1798 = vshrl.u32 %v1797, 7
  %v1799 = vsub.s32 3, %v1798
  %v1800 = vrot.slane %v1783, %v1799
  %v1801 = vlaneseq
  %v1802 = vshrl.u32 %v1801, 7
  %v1803 = vsub.s32 4, %v1802
  %v1804 = vrot.slane %v1783, %v1803
  %v1805 = vlaneseq
  %v1806 = vshrl.u32 %v1805, 7
  %v1807 = vsub.s32 5, %v1806
  %v1808 = vrot.slane %v1783, %v1807
  %v1809 = vlaneseq
  %v1810 = vshrl.u32 %v1809, 7
  %v1811 = vsub.s32 6, %v1810
  %v1812 = vrot.slane %v1783, %v1811
  %v1813 = vlaneseq
  %v1814 = vshrl.u32 %v1813, 7
  %v1815 = vsub.s32 7, %v1814
  %v1816 = vrot.slane %v1783, %v1815
  %v1825 = vmul.f32 %v158, %v1788
  %v1826 = vmul.f32 %v157, %v1792
  %v1827 = vmul.f32 %v156, %v1796
  %v1828 = vmul.f32 %v155, %v1800
  %v1829 = vmul.f32 %v154, %v1804
  %v1830 = vmul.f32 %v153, %v1808
  %v1831 = vmul.f32 %v152, %v1812
  %v1832 = vmul.f32 %v159, %v1816
  %v1841 = vrot.slane %v1825, 4
  %v1842 = vrot.slane %v1826, 4
  %v1843 = vrot.slane %v1827, 4
  %v1844 = vrot.slane %v1828, 4
  %v1845 = vrot.slane %v1829, 4
  %v1846 = vrot.slane %v1830, 4
  %v1847 = vrot.slane %v1831, 4
  %v1848 = vrot.slane %v1832, 4
  %1857 = vst [vmem:[#allocation2 + $0x240] sm:$0xf0] %v1841
  %1858 = vst [vmem:[#allocation2 + $0x248] sm:$0xf0] %v1842
  %1859 = vst [vmem:[#allocation2 + $0x250] sm:$0xf0] %v1843
  %1860 = vst [vmem:[#allocation2 + $0x258] sm:$0xf0] %v1844
  %1861 = vst [vmem:[#allocation2 + $0x260] sm:$0xf0] %v1845
  %1862 = vst [vmem:[#allocation2 + $0x268] sm:$0xf0] %v1846
  %1863 = vst [vmem:[#allocation2 + $0x270] sm:$0xf0] %v1847
  %1864 = vst [vmem:[#allocation2 + $0x278] sm:$0xf0] %v1848
  %s1865 = scalar_lea.vmem %s1, 132
  %v1866 = vld [vmem:[%s1865] ss:$8 sm:$0xf]
  %v1867 = vld [vmem:[%s1865] ss:$8 sm:$0xf0]
  %v1868 = vor.u32 %v1866, %v1867
  %v1870 = vlaneseq
  %v1871 = vshrl.u32 %v1870, 7
  %v1872 = vsub.s32 0, %v1871
  %v1873 = vrot.slane %v1868, %v1872
  %v1874 = vlaneseq
  %v1875 = vshrl.u32 %v1874, 7
  %v1876 = vsub.s32 1, %v1875
  %v1877 = vrot.slane %v1868, %v1876
  %v1878 = vlaneseq
  %v1879 = vshrl.u32 %v1878, 7
  %v1880 = vsub.s32 2, %v1879
  %v1881 = vrot.slane %v1868, %v1880
  %v1882 = vlaneseq
  %v1883 = vshrl.u32 %v1882, 7
  %v1884 = vsub.s32 3, %v1883
  %v1885 = vrot.slane %v1868, %v1884
  %v1886 = vlaneseq
  %v1887 = vshrl.u32 %v1886, 7
  %v1888 = vsub.s32 4, %v1887
  %v1889 = vrot.slane %v1868, %v1888
  %v1890 = vlaneseq
  %v1891 = vshrl.u32 %v1890, 7
  %v1892 = vsub.s32 5, %v1891
  %v1893 = vrot.slane %v1868, %v1892
  %v1894 = vlaneseq
  %v1895 = vshrl.u32 %v1894, 7
  %v1896 = vsub.s32 6, %v1895
  %v1897 = vrot.slane %v1868, %v1896
  %v1898 = vlaneseq
  %v1899 = vshrl.u32 %v1898, 7
  %v1900 = vsub.s32 7, %v1899
  %v1901 = vrot.slane %v1868, %v1900
  %v1910 = vmul.f32 %v268, %v1873
  %v1911 = vmul.f32 %v267, %v1877
  %v1912 = vmul.f32 %v266, %v1881
  %v1913 = vmul.f32 %v265, %v1885
  %v1914 = vmul.f32 %v264, %v1889
  %v1915 = vmul.f32 %v263, %v1893
  %v1916 = vmul.f32 %v262, %v1897
  %v1917 = vmul.f32 %v269, %v1901
  %1918 = vst [vmem:[#allocation2 + $0x280] sm:$0xf] %v1910
  %1919 = vst [vmem:[#allocation2 + $0x288] sm:$0xf] %v1911
  %1920 = vst [vmem:[#allocation2 + $0x290] sm:$0xf] %v1912
  %1921 = vst [vmem:[#allocation2 + $0x298] sm:$0xf] %v1913
  %1922 = vst [vmem:[#allocation2 + $0x2a0] sm:$0xf] %v1914
  %1923 = vst [vmem:[#allocation2 + $0x2a8] sm:$0xf] %v1915
  %1924 = vst [vmem:[#allocation2 + $0x2b0] sm:$0xf] %v1916
  %1925 = vst [vmem:[#allocation2 + $0x2b8] sm:$0xf] %v1917
  %s1926 = scalar_lea.vmem %s1, 133
  %v1927 = vld [vmem:[%s1926] ss:$8 sm:$0xf]
  %v1928 = vld [vmem:[%s1926] ss:$8 sm:$0xf0]
  %v1929 = vor.u32 %v1927, %v1928
  %v1931 = vlaneseq
  %v1932 = vshrl.u32 %v1931, 7
  %v1933 = vsub.s32 0, %v1932
  %v1934 = vrot.slane %v1929, %v1933
  %v1935 = vlaneseq
  %v1936 = vshrl.u32 %v1935, 7
  %v1937 = vsub.s32 1, %v1936
  %v1938 = vrot.slane %v1929, %v1937
  %v1939 = vlaneseq
  %v1940 = vshrl.u32 %v1939, 7
  %v1941 = vsub.s32 2, %v1940
  %v1942 = vrot.slane %v1929, %v1941
  %v1943 = vlaneseq
  %v1944 = vshrl.u32 %v1943, 7
  %v1945 = vsub.s32 3, %v1944
  %v1946 = vrot.slane %v1929, %v1945
  %v1947 = vlaneseq
  %v1948 = vshrl.u32 %v1947, 7
  %v1949 = vsub.s32 4, %v1948
  %v1950 = vrot.slane %v1929, %v1949
  %v1951 = vlaneseq
  %v1952 = vshrl.u32 %v1951, 7
  %v1953 = vsub.s32 5, %v1952
  %v1954 = vrot.slane %v1929, %v1953
  %v1955 = vlaneseq
  %v1956 = vshrl.u32 %v1955, 7
  %v1957 = vsub.s32 6, %v1956
  %v1958 = vrot.slane %v1929, %v1957
  %v1959 = vlaneseq
  %v1960 = vshrl.u32 %v1959, 7
  %v1961 = vsub.s32 7, %v1960
  %v1962 = vrot.slane %v1929, %v1961
  %v1971 = vmul.f32 %v354, %v1934
  %v1972 = vmul.f32 %v353, %v1938
  %v1973 = vmul.f32 %v352, %v1942
  %v1974 = vmul.f32 %v351, %v1946
  %v1975 = vmul.f32 %v350, %v1950
  %v1976 = vmul.f32 %v349, %v1954
  %v1977 = vmul.f32 %v348, %v1958
  %v1978 = vmul.f32 %v355, %v1962
  %v1987 = vrot.slane %v1971, 4
  %v1988 = vrot.slane %v1972, 4
  %v1989 = vrot.slane %v1973, 4
  %v1990 = vrot.slane %v1974, 4
  %v1991 = vrot.slane %v1975, 4
  %v1992 = vrot.slane %v1976, 4
  %v1993 = vrot.slane %v1977, 4
  %v1994 = vrot.slane %v1978, 4
  %2003 = vst [vmem:[#allocation2 + $0x280] sm:$0xf0] %v1987
  %2004 = vst [vmem:[#allocation2 + $0x288] sm:$0xf0] %v1988
  %2005 = vst [vmem:[#allocation2 + $0x290] sm:$0xf0] %v1989
  %2006 = vst [vmem:[#allocation2 + $0x298] sm:$0xf0] %v1990
  %2007 = vst [vmem:[#allocation2 + $0x2a0] sm:$0xf0] %v1991
  %2008 = vst [vmem:[#allocation2 + $0x2a8] sm:$0xf0] %v1992
  %2009 = vst [vmem:[#allocation2 + $0x2b0] sm:$0xf0] %v1993
  %2010 = vst [vmem:[#allocation2 + $0x2b8] sm:$0xf0] %v1994
  %s2011 = scalar_lea.vmem %s1, 134
  %v2012 = vld [vmem:[%s2011] ss:$8 sm:$0xf]
  %v2013 = vld [vmem:[%s2011] ss:$8 sm:$0xf0]
  %v2014 = vor.u32 %v2012, %v2013
  %v2016 = vlaneseq
  %v2017 = vshrl.u32 %v2016, 7
  %v2018 = vsub.s32 0, %v2017
  %v2019 = vrot.slane %v2014, %v2018
  %v2020 = vlaneseq
  %v2021 = vshrl.u32 %v2020, 7
  %v2022 = vsub.s32 1, %v2021
  %v2023 = vrot.slane %v2014, %v2022
  %v2024 = vlaneseq
  %v2025 = vshrl.u32 %v2024, 7
  %v2026 = vsub.s32 2, %v2025
  %v2027 = vrot.slane %v2014, %v2026
  %v2028 = vlaneseq
  %v2029 = vshrl.u32 %v2028, 7
  %v2030 = vsub.s32 3, %v2029
  %v2031 = vrot.slane %v2014, %v2030
  %v2032 = vlaneseq
  %v2033 = vshrl.u32 %v2032, 7
  %v2034 = vsub.s32 4, %v2033
  %v2035 = vrot.slane %v2014, %v2034
  %v2036 = vlaneseq
  %v2037 = vshrl.u32 %v2036, 7
  %v2038 = vsub.s32 5, %v2037
  %v2039 = vrot.slane %v2014, %v2038
  %v2040 = vlaneseq
  %v2041 = vshrl.u32 %v2040, 7
  %v2042 = vsub.s32 6, %v2041
  %v2043 = vrot.slane %v2014, %v2042
  %v2044 = vlaneseq
  %v2045 = vshrl.u32 %v2044, 7
  %v2046 = vsub.s32 7, %v2045
  %v2047 = vrot.slane %v2014, %v2046
  %v2056 = vmul.f32 %v464, %v2019
  %v2057 = vmul.f32 %v463, %v2023
  %v2058 = vmul.f32 %v462, %v2027
  %v2059 = vmul.f32 %v461, %v2031
  %v2060 = vmul.f32 %v460, %v2035
  %v2061 = vmul.f32 %v459, %v2039
  %v2062 = vmul.f32 %v458, %v2043
  %v2063 = vmul.f32 %v465, %v2047
  %2064 = vst [vmem:[#allocation2 + $0x2c0] sm:$0xf] %v2056
  %2065 = vst [vmem:[#allocation2 + $0x2c8] sm:$0xf] %v2057
  %2066 = vst [vmem:[#allocation2 + $0x2d0] sm:$0xf] %v2058
  %2067 = vst [vmem:[#allocation2 + $0x2d8] sm:$0xf] %v2059
  %2068 = vst [vmem:[#allocation2 + $0x2e0] sm:$0xf] %v2060
  %2069 = vst [vmem:[#allocation2 + $0x2e8] sm:$0xf] %v2061
  %2070 = vst [vmem:[#allocation2 + $0x2f0] sm:$0xf] %v2062
  %2071 = vst [vmem:[#allocation2 + $0x2f8] sm:$0xf] %v2063
  %s2072 = scalar_lea.vmem %s1, 135
  %v2073 = vld [vmem:[%s2072] ss:$8 sm:$0xf]
  %v2074 = vld [vmem:[%s2072] ss:$8 sm:$0xf0]
  %v2075 = vor.u32 %v2073, %v2074
  %v2077 = vlaneseq
  %v2078 = vshrl.u32 %v2077, 7
  %v2079 = vsub.s32 0, %v2078
  %v2080 = vrot.slane %v2075, %v2079
  %v2081 = vlaneseq
  %v2082 = vshrl.u32 %v2081, 7
  %v2083 = vsub.s32 1, %v2082
  %v2084 = vrot.slane %v2075, %v2083
  %v2085 = vlaneseq
  %v2086 = vshrl.u32 %v2085, 7
  %v2087 = vsub.s32 2, %v2086
  %v2088 = vrot.slane %v2075, %v2087
  %v2089 = vlaneseq
  %v2090 = vshrl.u32 %v2089, 7
  %v2091 = vsub.s32 3, %v2090
  %v2092 = vrot.slane %v2075, %v2091
  %v2093 = vlaneseq
  %v2094 = vshrl.u32 %v2093, 7
  %v2095 = vsub.s32 4, %v2094
  %v2096 = vrot.slane %v2075, %v2095
  %v2097 = vlaneseq
  %v2098 = vshrl.u32 %v2097, 7
  %v2099 = vsub.s32 5, %v2098
  %v2100 = vrot.slane %v2075, %v2099
  %v2101 = vlaneseq
  %v2102 = vshrl.u32 %v2101, 7
  %v2103 = vsub.s32 6, %v2102
  %v2104 = vrot.slane %v2075, %v2103
  %v2105 = vlaneseq
  %v2106 = vshrl.u32 %v2105, 7
  %v2107 = vsub.s32 7, %v2106
  %v2108 = vrot.slane %v2075, %v2107
  %v2117 = vmul.f32 %v550, %v2080
  %v2118 = vmul.f32 %v549, %v2084
  %v2119 = vmul.f32 %v548, %v2088
  %v2120 = vmul.f32 %v547, %v2092
  %v2121 = vmul.f32 %v546, %v2096
  %v2122 = vmul.f32 %v545, %v2100
  %v2123 = vmul.f32 %v544, %v2104
  %v2124 = vmul.f32 %v551, %v2108
  %v2133 = vrot.slane %v2117, 4
  %v2134 = vrot.slane %v2118, 4
  %v2135 = vrot.slane %v2119, 4
  %v2136 = vrot.slane %v2120, 4
  %v2137 = vrot.slane %v2121, 4
  %v2138 = vrot.slane %v2122, 4
  %v2139 = vrot.slane %v2123, 4
  %v2140 = vrot.slane %v2124, 4
  %2149 = vst [vmem:[#allocation2 + $0x2c0] sm:$0xf0] %v2133
  %2150 = vst [vmem:[#allocation2 + $0x2c8] sm:$0xf0] %v2134
  %2151 = vst [vmem:[#allocation2 + $0x2d0] sm:$0xf0] %v2135
  %2152 = vst [vmem:[#allocation2 + $0x2d8] sm:$0xf0] %v2136
  %2153 = vst [vmem:[#allocation2 + $0x2e0] sm:$0xf0] %v2137
  %2154 = vst [vmem:[#allocation2 + $0x2e8] sm:$0xf0] %v2138
  %2155 = vst [vmem:[#allocation2 + $0x2f0] sm:$0xf0] %v2139
  %2156 = vst [vmem:[#allocation2 + $0x2f8] sm:$0xf0] %v2140
  %s2157 = scalar_lea.vmem %s1, 192
  %v2158 = vld [vmem:[%s2157] ss:$8 sm:$0xf]
  %v2159 = vld [vmem:[%s2157] ss:$8 sm:$0xf0]
  %v2160 = vor.u32 %v2158, %v2159
  %v2162 = vlaneseq
  %v2163 = vshrl.u32 %v2162, 7
  %v2164 = vsub.s32 0, %v2163
  %v2165 = vrot.slane %v2160, %v2164
  %v2166 = vlaneseq
  %v2167 = vshrl.u32 %v2166, 7
  %v2168 = vsub.s32 1, %v2167
  %v2169 = vrot.slane %v2160, %v2168
  %v2170 = vlaneseq
  %v2171 = vshrl.u32 %v2170, 7
  %v2172 = vsub.s32 2, %v2171
  %v2173 = vrot.slane %v2160, %v2172
  %v2174 = vlaneseq
  %v2175 = vshrl.u32 %v2174, 7
  %v2176 = vsub.s32 3, %v2175
  %v2177 = vrot.slane %v2160, %v2176
  %v2178 = vlaneseq
  %v2179 = vshrl.u32 %v2178, 7
  %v2180 = vsub.s32 4, %v2179
  %v2181 = vrot.slane %v2160, %v2180
  %v2182 = vlaneseq
  %v2183 = vshrl.u32 %v2182, 7
  %v2184 = vsub.s32 5, %v2183
  %v2185 = vrot.slane %v2160, %v2184
  %v2186 = vlaneseq
  %v2187 = vshrl.u32 %v2186, 7
  %v2188 = vsub.s32 6, %v2187
  %v2189 = vrot.slane %v2160, %v2188
  %v2190 = vlaneseq
  %v2191 = vshrl.u32 %v2190, 7
  %v2192 = vsub.s32 7, %v2191
  %v2193 = vrot.slane %v2160, %v2192
  %v2202 = vmul.f32 %v660, %v2165
  %v2203 = vmul.f32 %v659, %v2169
  %v2204 = vmul.f32 %v658, %v2173
  %v2205 = vmul.f32 %v657, %v2177
  %v2206 = vmul.f32 %v656, %v2181
  %v2207 = vmul.f32 %v655, %v2185
  %v2208 = vmul.f32 %v654, %v2189
  %v2209 = vmul.f32 %v661, %v2193
  %2210 = vst [vmem:[#allocation2 + $0x300] sm:$0xf] %v2202
  %2211 = vst [vmem:[#allocation2 + $0x308] sm:$0xf] %v2203
  %2212 = vst [vmem:[#allocation2 + $0x310] sm:$0xf] %v2204
  %2213 = vst [vmem:[#allocation2 + $0x318] sm:$0xf] %v2205
  %2214 = vst [vmem:[#allocation2 + $0x320] sm:$0xf] %v2206
  %2215 = vst [vmem:[#allocation2 + $0x328] sm:$0xf] %v2207
  %2216 = vst [vmem:[#allocation2 + $0x330] sm:$0xf] %v2208
  %2217 = vst [vmem:[#allocation2 + $0x338] sm:$0xf] %v2209
  %s2218 = scalar_lea.vmem %s1, 193
  %v2219 = vld [vmem:[%s2218] ss:$8 sm:$0xf]
  %v2220 = vld [vmem:[%s2218] ss:$8 sm:$0xf0]
  %v2221 = vor.u32 %v2219, %v2220
  %v2223 = vlaneseq
  %v2224 = vshrl.u32 %v2223, 7
  %v2225 = vsub.s32 0, %v2224
  %v2226 = vrot.slane %v2221, %v2225
  %v2227 = vlaneseq
  %v2228 = vshrl.u32 %v2227, 7
  %v2229 = vsub.s32 1, %v2228
  %v2230 = vrot.slane %v2221, %v2229
  %v2231 = vlaneseq
  %v2232 = vshrl.u32 %v2231, 7
  %v2233 = vsub.s32 2, %v2232
  %v2234 = vrot.slane %v2221, %v2233
  %v2235 = vlaneseq
  %v2236 = vshrl.u32 %v2235, 7
  %v2237 = vsub.s32 3, %v2236
  %v2238 = vrot.slane %v2221, %v2237
  %v2239 = vlaneseq
  %v2240 = vshrl.u32 %v2239, 7
  %v2241 = vsub.s32 4, %v2240
  %v2242 = vrot.slane %v2221, %v2241
  %v2243 = vlaneseq
  %v2244 = vshrl.u32 %v2243, 7
  %v2245 = vsub.s32 5, %v2244
  %v2246 = vrot.slane %v2221, %v2245
  %v2247 = vlaneseq
  %v2248 = vshrl.u32 %v2247, 7
  %v2249 = vsub.s32 6, %v2248
  %v2250 = vrot.slane %v2221, %v2249
  %v2251 = vlaneseq
  %v2252 = vshrl.u32 %v2251, 7
  %v2253 = vsub.s32 7, %v2252
  %v2254 = vrot.slane %v2221, %v2253
  %v2263 = vmul.f32 %v746, %v2226
  %v2264 = vmul.f32 %v745, %v2230
  %v2265 = vmul.f32 %v744, %v2234
  %v2266 = vmul.f32 %v743, %v2238
  %v2267 = vmul.f32 %v742, %v2242
  %v2268 = vmul.f32 %v741, %v2246
  %v2269 = vmul.f32 %v740, %v2250
  %v2270 = vmul.f32 %v747, %v2254
  %v2279 = vrot.slane %v2263, 4
  %v2280 = vrot.slane %v2264, 4
  %v2281 = vrot.slane %v2265, 4
  %v2282 = vrot.slane %v2266, 4
  %v2283 = vrot.slane %v2267, 4
  %v2284 = vrot.slane %v2268, 4
  %v2285 = vrot.slane %v2269, 4
  %v2286 = vrot.slane %v2270, 4
  %2295 = vst [vmem:[#allocation2 + $0x300] sm:$0xf0] %v2279
  %2296 = vst [vmem:[#allocation2 + $0x308] sm:$0xf0] %v2280
  %2297 = vst [vmem:[#allocation2 + $0x310] sm:$0xf0] %v2281
  %2298 = vst [vmem:[#allocation2 + $0x318] sm:$0xf0] %v2282
  %2299 = vst [vmem:[#allocation2 + $0x320] sm:$0xf0] %v2283
  %2300 = vst [vmem:[#allocation2 + $0x328] sm:$0xf0] %v2284
  %2301 = vst [vmem:[#allocation2 + $0x330] sm:$0xf0] %v2285
  %2302 = vst [vmem:[#allocation2 + $0x338] sm:$0xf0] %v2286
  %s2303 = scalar_lea.vmem %s1, 194
  %v2304 = vld [vmem:[%s2303] ss:$8 sm:$0xf]
  %v2305 = vld [vmem:[%s2303] ss:$8 sm:$0xf0]
  %v2306 = vor.u32 %v2304, %v2305
  %v2308 = vlaneseq
  %v2309 = vshrl.u32 %v2308, 7
  %v2310 = vsub.s32 0, %v2309
  %v2311 = vrot.slane %v2306, %v2310
  %v2312 = vlaneseq
  %v2313 = vshrl.u32 %v2312, 7
  %v2314 = vsub.s32 1, %v2313
  %v2315 = vrot.slane %v2306, %v2314
  %v2316 = vlaneseq
  %v2317 = vshrl.u32 %v2316, 7
  %v2318 = vsub.s32 2, %v2317
  %v2319 = vrot.slane %v2306, %v2318
  %v2320 = vlaneseq
  %v2321 = vshrl.u32 %v2320, 7
  %v2322 = vsub.s32 3, %v2321
  %v2323 = vrot.slane %v2306, %v2322
  %v2324 = vlaneseq
  %v2325 = vshrl.u32 %v2324, 7
  %v2326 = vsub.s32 4, %v2325
  %v2327 = vrot.slane %v2306, %v2326
  %v2328 = vlaneseq
  %v2329 = vshrl.u32 %v2328, 7
  %v2330 = vsub.s32 5, %v2329
  %v2331 = vrot.slane %v2306, %v2330
  %v2332 = vlaneseq
  %v2333 = vshrl.u32 %v2332, 7
  %v2334 = vsub.s32 6, %v2333
  %v2335 = vrot.slane %v2306, %v2334
  %v2336 = vlaneseq
  %v2337 = vshrl.u32 %v2336, 7
  %v2338 = vsub.s32 7, %v2337
  %v2339 = vrot.slane %v2306, %v2338
  %v2348 = vmul.f32 %v856, %v2311
  %v2349 = vmul.f32 %v855, %v2315
  %v2350 = vmul.f32 %v854, %v2319
  %v2351 = vmul.f32 %v853, %v2323
  %v2352 = vmul.f32 %v852, %v2327
  %v2353 = vmul.f32 %v851, %v2331
  %v2354 = vmul.f32 %v850, %v2335
  %v2355 = vmul.f32 %v857, %v2339
  %2356 = vst [vmem:[#allocation2 + $0x340] sm:$0xf] %v2348
  %2357 = vst [vmem:[#allocation2 + $0x348] sm:$0xf] %v2349
  %2358 = vst [vmem:[#allocation2 + $0x350] sm:$0xf] %v2350
  %2359 = vst [vmem:[#allocation2 + $0x358] sm:$0xf] %v2351
  %2360 = vst [vmem:[#allocation2 + $0x360] sm:$0xf] %v2352
  %2361 = vst [vmem:[#allocation2 + $0x368] sm:$0xf] %v2353
  %2362 = vst [vmem:[#allocation2 + $0x370] sm:$0xf] %v2354
  %2363 = vst [vmem:[#allocation2 + $0x378] sm:$0xf] %v2355
  %2364 = vst [vmem:[#allocation2 + $0x340] sm:$0xf0] 0.0
  %2365 = vst [vmem:[#allocation2 + $0x348] sm:$0xf0] 0.0
  %2366 = vst [vmem:[#allocation2 + $0x350] sm:$0xf0] 0.0
  %2367 = vst [vmem:[#allocation2 + $0x358] sm:$0xf0] 0.0
  %2368 = vst [vmem:[#allocation2 + $0x360] sm:$0xf0] 0.0
  %2369 = vst [vmem:[#allocation2 + $0x368] sm:$0xf0] 0.0
  %2370 = vst [vmem:[#allocation2 + $0x370] sm:$0xf0] 0.0
  %2371 = vst [vmem:[#allocation2 + $0x378] sm:$0xf0] 0.0
  %v2372 = vld [vmem:[%s3] sm:$0xf]
  %v2373 = vld [vmem:[#allocation2] sm:$0xff]
  %v2374 = vld [vmem:[#allocation2 + $0x8] sm:$0xff]
  %v2375 = vld [vmem:[#allocation2 + $0x10] sm:$0xff]
  %v2376 = vld [vmem:[#allocation2 + $0x18] sm:$0xff]
  %v2377 = vld [vmem:[#allocation2 + $0x20] sm:$0xff]
  %v2378 = vld [vmem:[#allocation2 + $0x28] sm:$0xff]
  %v2379 = vld [vmem:[#allocation2 + $0x30] sm:$0xff]
  %v2380 = vld [vmem:[#allocation2 + $0x38] sm:$0xff]
  %v2381 = vld [vmem:[#allocation2 + $0x40] sm:$0xff]
  %v2382 = vld [vmem:[#allocation2 + $0x48] sm:$0xff]
  %v2383 = vld [vmem:[#allocation2 + $0x50] sm:$0xff]
  %v2384 = vld [vmem:[#allocation2 + $0x58] sm:$0xff]
  %v2385 = vld [vmem:[#allocation2 + $0x60] sm:$0xff]
  %v2386 = vld [vmem:[#allocation2 + $0x68] sm:$0xff]
  %v2387 = vld [vmem:[#allocation2 + $0x70] sm:$0xff]
  %v2388 = vld [vmem:[#allocation2 + $0x78] sm:$0xff]
  %v2389 = vld [vmem:[#allocation2 + $0x80] sm:$0xff]
  %v2390 = vld [vmem:[#allocation2 + $0x88] sm:$0xff]
  %v2391 = vld [vmem:[#allocation2 + $0x90] sm:$0xff]
  %v2392 = vld [vmem:[#allocation2 + $0x98] sm:$0xff]
  %v2393 = vld [vmem:[#allocation2 + $0xa0] sm:$0xff]
  %v2394 = vld [vmem:[#allocation2 + $0xa8] sm:$0xff]
  %v2395 = vld [vmem:[#allocation2 + $0xb0] sm:$0xff]
  %v2396 = vld [vmem:[#allocation2 + $0xb8] sm:$0xff]
  %v2397 = vld [vmem:[#allocation2 + $0xc0] sm:$0xff]
  %v2398 = vld [vmem:[#allocation2 + $0xc8] sm:$0xff]
  %v2399 = vld [vmem:[#allocation2 + $0xd0] sm:$0xff]
  %v2400 = vld [vmem:[#allocation2 + $0xd8] sm:$0xff]
  %v2401 = vld [vmem:[#allocation2 + $0xe0] sm:$0xff]
  %v2402 = vld [vmem:[#allocation2 + $0xe8] sm:$0xff]
  %v2403 = vld [vmem:[#allocation2 + $0xf0] sm:$0xff]
  %v2404 = vld [vmem:[#allocation2 + $0xf8] sm:$0xff]
  %v2405 = vld [vmem:[#allocation2 + $0x100] sm:$0xff]
  %v2406 = vld [vmem:[#allocation2 + $0x108] sm:$0xff]
  %v2407 = vld [vmem:[#allocation2 + $0x110] sm:$0xff]
  %v2408 = vld [vmem:[#allocation2 + $0x118] sm:$0xff]
  %v2409 = vld [vmem:[#allocation2 + $0x120] sm:$0xff]
  %v2410 = vld [vmem:[#allocation2 + $0x128] sm:$0xff]
  %v2411 = vld [vmem:[#allocation2 + $0x130] sm:$0xff]
  %v2412 = vld [vmem:[#allocation2 + $0x138] sm:$0xff]
  %v2413 = vld [vmem:[#allocation2 + $0x140] sm:$0xff]
  %v2414 = vld [vmem:[#allocation2 + $0x148] sm:$0xff]
  %v2415 = vld [vmem:[#allocation2 + $0x150] sm:$0xff]
  %v2416 = vld [vmem:[#allocation2 + $0x158] sm:$0xff]
  %v2417 = vld [vmem:[#allocation2 + $0x160] sm:$0xff]
  %v2418 = vld [vmem:[#allocation2 + $0x168] sm:$0xff]
  %v2419 = vld [vmem:[#allocation2 + $0x170] sm:$0xff]
  %v2420 = vld [vmem:[#allocation2 + $0x178] sm:$0xff]
  %v2421 = vld [vmem:[#allocation2 + $0x180] sm:$0xff]
  %v2422 = vld [vmem:[#allocation2 + $0x188] sm:$0xff]
  %v2423 = vld [vmem:[#allocation2 + $0x190] sm:$0xff]
  %v2424 = vld [vmem:[#allocation2 + $0x198] sm:$0xff]
  %v2425 = vld [vmem:[#allocation2 + $0x1a0] sm:$0xff]
  %v2426 = vld [vmem:[#allocation2 + $0x1a8] sm:$0xff]
  %v2427 = vld [vmem:[#allocation2 + $0x1b0] sm:$0xff]
  %v2428 = vld [vmem:[#allocation2 + $0x1b8] sm:$0xff]
  %v2429 = vld [vmem:[#allocation2 + $0x1c0] sm:$0xff]
  %v2430 = vld [vmem:[#allocation2 + $0x1c8] sm:$0xff]
  %v2431 = vld [vmem:[#allocation2 + $0x1d0] sm:$0xff]
  %v2432 = vld [vmem:[#allocation2 + $0x1d8] sm:$0xff]
  %v2433 = vld [vmem:[#allocation2 + $0x1e0] sm:$0xff]
  %v2434 = vld [vmem:[#allocation2 + $0x1e8] sm:$0xff]
  %v2435 = vld [vmem:[#allocation2 + $0x1f0] sm:$0xff]
  %v2436 = vld [vmem:[#allocation2 + $0x1f8] sm:$0xff]
  %v2437 = vld [vmem:[#allocation2 + $0x200] sm:$0xff]
  %v2438 = vld [vmem:[#allocation2 + $0x208] sm:$0xff]
  %v2439 = vld [vmem:[#allocation2 + $0x210] sm:$0xff]
  %v2440 = vld [vmem:[#allocation2 + $0x218] sm:$0xff]
  %v2441 = vld [vmem:[#allocation2 + $0x220] sm:$0xff]
  %v2442 = vld [vmem:[#allocation2 + $0x228] sm:$0xff]
  %v2443 = vld [vmem:[#allocation2 + $0x230] sm:$0xff]
  %v2444 = vld [vmem:[#allocation2 + $0x238] sm:$0xff]
  %v2445 = vld [vmem:[#allocation2 + $0x240] sm:$0xff]
  %v2446 = vld [vmem:[#allocation2 + $0x248] sm:$0xff]
  %v2447 = vld [vmem:[#allocation2 + $0x250] sm:$0xff]
  %v2448 = vld [vmem:[#allocation2 + $0x258] sm:$0xff]
  %v2449 = vld [vmem:[#allocation2 + $0x260] sm:$0xff]
  %v2450 = vld [vmem:[#allocation2 + $0x268] sm:$0xff]
  %v2451 = vld [vmem:[#allocation2 + $0x270] sm:$0xff]
  %v2452 = vld [vmem:[#allocation2 + $0x278] sm:$0xff]
  %v2453 = vld [vmem:[#allocation2 + $0x280] sm:$0xff]
  %v2454 = vld [vmem:[#allocation2 + $0x288] sm:$0xff]
  %v2455 = vld [vmem:[#allocation2 + $0x290] sm:$0xff]
  %v2456 = vld [vmem:[#allocation2 + $0x298] sm:$0xff]
  %v2457 = vld [vmem:[#allocation2 + $0x2a0] sm:$0xff]
  %v2458 = vld [vmem:[#allocation2 + $0x2a8] sm:$0xff]
  %v2459 = vld [vmem:[#allocation2 + $0x2b0] sm:$0xff]
  %v2460 = vld [vmem:[#allocation2 + $0x2b8] sm:$0xff]
  %v2461 = vld [vmem:[#allocation2 + $0x2c0] sm:$0xff]
  %v2462 = vld [vmem:[#allocation2 + $0x2c8] sm:$0xff]
  %v2463 = vld [vmem:[#allocation2 + $0x2d0] sm:$0xff]
  %v2464 = vld [vmem:[#allocation2 + $0x2d8] sm:$0xff]
  %v2465 = vld [vmem:[#allocation2 + $0x2e0] sm:$0xff]
  %v2466 = vld [vmem:[#allocation2 + $0x2e8] sm:$0xff]
  %v2467 = vld [vmem:[#allocation2 + $0x2f0] sm:$0xff]
  %v2468 = vld [vmem:[#allocation2 + $0x2f8] sm:$0xff]
  %v2469 = vld [vmem:[#allocation2 + $0x300] sm:$0xff]
  %v2470 = vld [vmem:[#allocation2 + $0x308] sm:$0xff]
  %v2471 = vld [vmem:[#allocation2 + $0x310] sm:$0xff]
  %v2472 = vld [vmem:[#allocation2 + $0x318] sm:$0xff]
  %v2473 = vld [vmem:[#allocation2 + $0x320] sm:$0xff]
  %v2474 = vld [vmem:[#allocation2 + $0x328] sm:$0xff]
  %v2475 = vld [vmem:[#allocation2 + $0x330] sm:$0xff]
  %v2476 = vld [vmem:[#allocation2 + $0x338] sm:$0xff]
  %v2477 = vld [vmem:[#allocation2 + $0x340] sm:$0xff]
  %v2478 = vld [vmem:[#allocation2 + $0x348] sm:$0xff]
  %v2479 = vld [vmem:[#allocation2 + $0x350] sm:$0xff]
  %v2480 = vld [vmem:[#allocation2 + $0x358] sm:$0xff]
  %v2481 = vld [vmem:[#allocation2 + $0x360] sm:$0xff]
  %v2482 = vld [vmem:[#allocation2 + $0x368] sm:$0xff]
  %v2483 = vld [vmem:[#allocation2 + $0x370] sm:$0xff]
  %v2484 = vld [vmem:[#allocation2 + $0x378] sm:$0xff]
  %vm2485 = vcmask 916480
  %v2487 = vsel %vm2485, %v2372, 0
  %2489 = vmatprep.subr.mxu0 0.0
  %2490 = vmatpush1.msra.mxu0 0.0
  %2491 = vmatprep.subr.mxu0 0.0
  %2492 = vmatpush1.msra.mxu0 0.0
  %2493 = vmatprep.subr.mxu0 %v2478
  %2494 = vmatpush1.msra.mxu0 %v2477
  %2495 = vmatprep.subr.mxu0 %v2470
  %2496 = vmatpush1.msra.mxu0 %v2469
  %2497 = vmatprep.subr.mxu0 %v2462
  %2498 = vmatpush1.msra.mxu0 %v2461
  %2499 = vmatprep.subr.mxu0 %v2454
  %2500 = vmatpush1.msra.mxu0 %v2453
  %2501 = vmatprep.subr.mxu0 %v2446
  %2502 = vmatpush1.msra.mxu0 %v2445
  %2503 = vmatprep.subr.mxu0 %v2438
  %2504 = vmatpush1.msra.mxu0 %v2437
  %2505 = vmatprep.subr.mxu0 %v2430
  %2506 = vmatpush1.msra.mxu0 %v2429
  %2507 = vmatprep.subr.mxu0 %v2422
  %2508 = vmatpush1.msra.mxu0 %v2421
  %2509 = vmatprep.subr.mxu0 %v2414
  %2510 = vmatpush1.msra.mxu0 %v2413
  %2511 = vmatprep.subr.mxu0 %v2406
  %2512 = vmatpush1.msra.mxu0 %v2405
  %2513 = vmatprep.subr.mxu0 %v2398
  %2514 = vmatpush1.msra.mxu0 %v2397
  %2515 = vmatprep.subr.mxu0 %v2390
  %2516 = vmatpush1.msra.mxu0 %v2389
  %2517 = vmatprep.subr.mxu0 %v2382
  %2518 = vmatpush1.msra.mxu0 %v2381
  %2519 = vmatprep.subr.mxu0 %v2374
  %2520 = vmatpush1.msra.mxu0 %v2373
  %2521 = vmatprep.subr.mxu0 0.0
  %2522 = vmatpush2.msra.mxu0 0.0
  %2523 = vmatprep.subr.mxu0 0.0
  %2524 = vmatpush2.msra.mxu0 0.0
  %2525 = vmatprep.subr.mxu0 0.0
  %2526 = vmatpush2.msra.mxu0 0.0
  %2527 = vmatprep.subr.mxu0 0.0
  %2528 = vmatpush2.msra.mxu0 0.0
  %2529 = vmatprep.subr.mxu0 0.0
  %2530 = vmatpush2.msra.mxu0 0.0
  %2531 = vmatprep.subr.mxu0 0.0
  %2532 = vmatpush2.msra.mxu0 0.0
  %2533 = vmatprep.subr.mxu0 0.0
  %2534 = vmatpush2.msra.mxu0 0.0
  %2535 = vmatprep.subr.mxu0 0.0
  %2536 = vmatpush2.msra.mxu0 0.0
  %2537 = vmatprep.subr.mxu0 0.0
  %2538 = vmatpush2.msra.mxu0 0.0
  %2539 = vmatprep.subr.mxu0 0.0
  %2540 = vmatpush2.msra.mxu0 0.0
  %2541 = vmatprep.subr.mxu0 0.0
  %2542 = vmatpush2.msra.mxu0 0.0
  %2543 = vmatprep.subr.mxu0 0.0
  %2544 = vmatpush2.msra.mxu0 0.0
  %2545 = vmatprep.subr.mxu0 0.0
  %2546 = vmatpush2.msra.mxu0 0.0
  %2547 = vmatprep.subr.mxu0 0.0
  %2548 = vmatpush2.msra.mxu0 0.0
  %2549 = vmatprep.subr.mxu0 0.0
  %2550 = vmatpush2.msra.mxu0 0.0
  %2551 = vmatprep.subr.mxu0 0.0
  %2552 = vmatpush2.msra.mxu0 0.0
  %2553 = vmatprep.mubr.f32.mxu0 0.0
  %2554 = vmatmul.mubr.f32.gmra.mxu0 %v2487
  %v2555 = vpop.f32.mrf.mxu0
  %v2556 = vadd.f32 0.0, %v2555
  %v2557 = vpop.f32.mrf.mxu0
  %v2558 = vadd.f32 0.0, %v2557
  %2559 = vdwg.mxu0
  %2560 = vmatprep.subr.mxu0 0.0
  %2561 = vmatpush1.msra.mxu0 0.0
  %2562 = vmatprep.subr.mxu0 0.0
  %2563 = vmatpush1.msra.mxu0 0.0
  %2564 = vmatprep.subr.mxu0 %v2480
  %2565 = vmatpush1.msra.mxu0 %v2479
  %2566 = vmatprep.subr.mxu0 %v2472
  %2567 = vmatpush1.msra.mxu0 %v2471
  %2568 = vmatprep.subr.mxu0 %v2464
  %2569 = vmatpush1.msra.mxu0 %v2463
  %2570 = vmatprep.subr.mxu0 %v2456
  %2571 = vmatpush1.msra.mxu0 %v2455
  %2572 = vmatprep.subr.mxu0 %v2448
  %2573 = vmatpush1.msra.mxu0 %v2447
  %2574 = vmatprep.subr.mxu0 %v2440
  %2575 = vmatpush1.msra.mxu0 %v2439
  %2576 = vmatprep.subr.mxu0 %v2432
  %2577 = vmatpush1.msra.mxu0 %v2431
  %2578 = vmatprep.subr.mxu0 %v2424
  %2579 = vmatpush1.msra.mxu0 %v2423
  %2580 = vmatprep.subr.mxu0 %v2416
  %2581 = vmatpush1.msra.mxu0 %v2415
  %2582 = vmatprep.subr.mxu0 %v2408
  %2583 = vmatpush1.msra.mxu0 %v2407
  %2584 = vmatprep.subr.mxu0 %v2400
  %2585 = vmatpush1.msra.mxu0 %v2399
  %2586 = vmatprep.subr.mxu0 %v2392
  %2587 = vmatpush1.msra.mxu0 %v2391
  %2588 = vmatprep.subr.mxu0 %v2384
  %2589 = vmatpush1.msra.mxu0 %v2383
  %2590 = vmatprep.subr.mxu0 %v2376
  %2591 = vmatpush1.msra.mxu0 %v2375
  %2592 = vmatprep.subr.mxu0 0.0
  %2593 = vmatpush2.msra.mxu0 0.0
  %2594 = vmatprep.subr.mxu0 0.0
  %2595 = vmatpush2.msra.mxu0 0.0
  %2596 = vmatprep.subr.mxu0 0.0
  %2597 = vmatpush2.msra.mxu0 0.0
  %2598 = vmatprep.subr.mxu0 0.0
  %2599 = vmatpush2.msra.mxu0 0.0
  %2600 = vmatprep.subr.mxu0 0.0
  %2601 = vmatpush2.msra.mxu0 0.0
  %2602 = vmatprep.subr.mxu0 0.0
  %2603 = vmatpush2.msra.mxu0 0.0
  %2604 = vmatprep.subr.mxu0 0.0
  %2605 = vmatpush2.msra.mxu0 0.0
  %2606 = vmatprep.subr.mxu0 0.0
  %2607 = vmatpush2.msra.mxu0 0.0
  %2608 = vmatprep.subr.mxu0 0.0
  %2609 = vmatpush2.msra.mxu0 0.0
  %2610 = vmatprep.subr.mxu0 0.0
  %2611 = vmatpush2.msra.mxu0 0.0
  %2612 = vmatprep.subr.mxu0 0.0
  %2613 = vmatpush2.msra.mxu0 0.0
  %2614 = vmatprep.subr.mxu0 0.0
  %2615 = vmatpush2.msra.mxu0 0.0
  %2616 = vmatprep.subr.mxu0 0.0
  %2617 = vmatpush2.msra.mxu0 0.0
  %2618 = vmatprep.subr.mxu0 0.0
  %2619 = vmatpush2.msra.mxu0 0.0
  %2620 = vmatprep.subr.mxu0 0.0
  %2621 = vmatpush2.msra.mxu0 0.0
  %2622 = vmatprep.subr.mxu0 0.0
  %2623 = vmatpush2.msra.mxu0 0.0
  %2624 = vmatprep.mubr.f32.mxu0 0.0
  %2625 = vmatmul.mubr.f32.gmra.mxu0 %v2487
  %v2626 = vpop.f32.mrf.mxu0
  %v2627 = vadd.f32 0.0, %v2626
  %v2628 = vpop.f32.mrf.mxu0
  %v2629 = vadd.f32 0.0, %v2628
  %2630 = vdwg.mxu0
  %2631 = vmatprep.subr.mxu0 0.0
  %2632 = vmatpush1.msra.mxu0 0.0
  %2633 = vmatprep.subr.mxu0 0.0
  %2634 = vmatpush1.msra.mxu0 0.0
  %2635 = vmatprep.subr.mxu0 %v2482
  %2636 = vmatpush1.msra.mxu0 %v2481
  %2637 = vmatprep.subr.mxu0 %v2474
  %2638 = vmatpush1.msra.mxu0 %v2473
  %2639 = vmatprep.subr.mxu0 %v2466
  %2640 = vmatpush1.msra.mxu0 %v2465
  %2641 = vmatprep.subr.mxu0 %v2458
  %2642 = vmatpush1.msra.mxu0 %v2457
  %2643 = vmatprep.subr.mxu0 %v2450
  %2644 = vmatpush1.msra.mxu0 %v2449
  %2645 = vmatprep.subr.mxu0 %v2442
  %2646 = vmatpush1.msra.mxu0 %v2441
  %2647 = vmatprep.subr.mxu0 %v2434
  %2648 = vmatpush1.msra.mxu0 %v2433
  %2649 = vmatprep.subr.mxu0 %v2426
  %2650 = vmatpush1.msra.mxu0 %v2425
  %2651 = vmatprep.subr.mxu0 %v2418
  %2652 = vmatpush1.msra.mxu0 %v2417
  %2653 = vmatprep.subr.mxu0 %v2410
  %2654 = vmatpush1.msra.mxu0 %v2409
  %2655 = vmatprep.subr.mxu0 %v2402
  %2656 = vmatpush1.msra.mxu0 %v2401
  %2657 = vmatprep.subr.mxu0 %v2394
  %2658 = vmatpush1.msra.mxu0 %v2393
  %2659 = vmatprep.subr.mxu0 %v2386
  %2660 = vmatpush1.msra.mxu0 %v2385
  %2661 = vmatprep.subr.mxu0 %v2378
  %2662 = vmatpush1.msra.mxu0 %v2377
  %2663 = vmatprep.subr.mxu0 0.0
  %2664 = vmatpush2.msra.mxu0 0.0
  %2665 = vmatprep.subr.mxu0 0.0
  %2666 = vmatpush2.msra.mxu0 0.0
  %2667 = vmatprep.subr.mxu0 0.0
  %2668 = vmatpush2.msra.mxu0 0.0
  %2669 = vmatprep.subr.mxu0 0.0
  %2670 = vmatpush2.msra.mxu0 0.0
  %2671 = vmatprep.subr.mxu0 0.0
  %2672 = vmatpush2.msra.mxu0 0.0
  %2673 = vmatprep.subr.mxu0 0.0
  %2674 = vmatpush2.msra.mxu0 0.0
  %2675 = vmatprep.subr.mxu0 0.0
  %2676 = vmatpush2.msra.mxu0 0.0
  %2677 = vmatprep.subr.mxu0 0.0
  %2678 = vmatpush2.msra.mxu0 0.0
  %2679 = vmatprep.subr.mxu0 0.0
  %2680 = vmatpush2.msra.mxu0 0.0
  %2681 = vmatprep.subr.mxu0 0.0
  %2682 = vmatpush2.msra.mxu0 0.0
  %2683 = vmatprep.subr.mxu0 0.0
  %2684 = vmatpush2.msra.mxu0 0.0
  %2685 = vmatprep.subr.mxu0 0.0
  %2686 = vmatpush2.msra.mxu0 0.0
  %2687 = vmatprep.subr.mxu0 0.0
  %2688 = vmatpush2.msra.mxu0 0.0
  %2689 = vmatprep.subr.mxu0 0.0
  %2690 = vmatpush2.msra.mxu0 0.0
  %2691 = vmatprep.subr.mxu0 0.0
  %2692 = vmatpush2.msra.mxu0 0.0
  %2693 = vmatprep.subr.mxu0 0.0
  %2694 = vmatpush2.msra.mxu0 0.0
  %2695 = vmatprep.mubr.f32.mxu0 0.0
  %2696 = vmatmul.mubr.f32.gmra.mxu0 %v2487
  %v2697 = vpop.f32.mrf.mxu0
  %v2698 = vadd.f32 0.0, %v2697
  %v2699 = vpop.f32.mrf.mxu0
  %v2700 = vadd.f32 0.0, %v2699
  %2701 = vdwg.mxu0
  %2702 = vmatprep.subr.mxu0 0.0
  %2703 = vmatpush1.msra.mxu0 0.0
  %2704 = vmatprep.subr.mxu0 0.0
  %2705 = vmatpush1.msra.mxu0 0.0
  %2706 = vmatprep.subr.mxu0 %v2484
  %2707 = vmatpush1.msra.mxu0 %v2483
  %2708 = vmatprep.subr.mxu0 %v2476
  %2709 = vmatpush1.msra.mxu0 %v2475
  %2710 = vmatprep.subr.mxu0 %v2468
  %2711 = vmatpush1.msra.mxu0 %v2467
  %2712 = vmatprep.subr.mxu0 %v2460
  %2713 = vmatpush1.msra.mxu0 %v2459
  %2714 = vmatprep.subr.mxu0 %v2452
  %2715 = vmatpush1.msra.mxu0 %v2451
  %2716 = vmatprep.subr.mxu0 %v2444
  %2717 = vmatpush1.msra.mxu0 %v2443
  %2718 = vmatprep.subr.mxu0 %v2436
  %2719 = vmatpush1.msra.mxu0 %v2435
  %2720 = vmatprep.subr.mxu0 %v2428
  %2721 = vmatpush1.msra.mxu0 %v2427
  %2722 = vmatprep.subr.mxu0 %v2420
  %2723 = vmatpush1.msra.mxu0 %v2419
  %2724 = vmatprep.subr.mxu0 %v2412
  %2725 = vmatpush1.msra.mxu0 %v2411
  %2726 = vmatprep.subr.mxu0 %v2404
  %2727 = vmatpush1.msra.mxu0 %v2403
  %2728 = vmatprep.subr.mxu0 %v2396
  %2729 = vmatpush1.msra.mxu0 %v2395
  %2730 = vmatprep.subr.mxu0 %v2388
  %2731 = vmatpush1.msra.mxu0 %v2387
  %2732 = vmatprep.subr.mxu0 %v2380
  %2733 = vmatpush1.msra.mxu0 %v2379
  %2734 = vmatprep.subr.mxu0 0.0
  %2735 = vmatpush2.msra.mxu0 0.0
  %2736 = vmatprep.subr.mxu0 0.0
  %2737 = vmatpush2.msra.mxu0 0.0
  %2738 = vmatprep.subr.mxu0 0.0
  %2739 = vmatpush2.msra.mxu0 0.0
  %2740 = vmatprep.subr.mxu0 0.0
  %2741 = vmatpush2.msra.mxu0 0.0
  %2742 = vmatprep.subr.mxu0 0.0
  %2743 = vmatpush2.msra.mxu0 0.0
  %2744 = vmatprep.subr.mxu0 0.0
  %2745 = vmatpush2.msra.mxu0 0.0
  %2746 = vmatprep.subr.mxu0 0.0
  %2747 = vmatpush2.msra.mxu0 0.0
  %2748 = vmatprep.subr.mxu0 0.0
  %2749 = vmatpush2.msra.mxu0 0.0
  %2750 = vmatprep.subr.mxu0 0.0
  %2751 = vmatpush2.msra.mxu0 0.0
  %2752 = vmatprep.subr.mxu0 0.0
  %2753 = vmatpush2.msra.mxu0 0.0
  %2754 = vmatprep.subr.mxu0 0.0
  %2755 = vmatpush2.msra.mxu0 0.0
  %2756 = vmatprep.subr.mxu0 0.0
  %2757 = vmatpush2.msra.mxu0 0.0
  %2758 = vmatprep.subr.mxu0 0.0
  %2759 = vmatpush2.msra.mxu0 0.0
  %2760 = vmatprep.subr.mxu0 0.0
  %2761 = vmatpush2.msra.mxu0 0.0
  %2762 = vmatprep.subr.mxu0 0.0
  %2763 = vmatpush2.msra.mxu0 0.0
  %2764 = vmatprep.subr.mxu0 0.0
  %2765 = vmatpush2.msra.mxu0 0.0
  %2766 = vmatprep.mubr.f32.mxu0 0.0
  %2767 = vmatmul.mubr.f32.gmra.mxu0 %v2487
  %v2768 = vpop.f32.mrf.mxu0
  %v2769 = vadd.f32 0.0, %v2768
  %v2770 = vpop.f32.mrf.mxu0
  %v2771 = vadd.f32 0.0, %v2770
  %2772 = vdwg.mxu0
  %v2773 = vmax.f32 %v2556, 0.0
  %v2774 = vmax.f32 %v2558, 0.0
  %v2775 = vmax.f32 %v2627, 0.0
  %v2776 = vmax.f32 %v2629, 0.0
  %v2777 = vmax.f32 %v2698, 0.0
  %v2778 = vmax.f32 %v2700, 0.0
  %v2779 = vmax.f32 %v2769, 0.0
  %v2780 = vmax.f32 %v2771, 0.0
  %v2781 = vmul.f32 %v2773, %v2773
  %v2782 = vmul.f32 %v2774, %v2774
  %v2783 = vmul.f32 %v2775, %v2775
  %v2784 = vmul.f32 %v2776, %v2776
  %v2785 = vmul.f32 %v2777, %v2777
  %v2786 = vmul.f32 %v2778, %v2778
  %v2787 = vmul.f32 %v2779, %v2779
  %v2788 = vmul.f32 %v2780, %v2780
  %v2789 = vld [vmem:[%s4] sm:$0xf]
  %v2790 = vld [vmem:[%s5] sm:$0xf]
  %v2791 = vld [vmem:[%s2] ss:$2 sm:$0xff]
  %v2793 = vlaneseq
  %v2794 = vshrl.u32 %v2793, 7
  %v2795 = vsub.s32 0, %v2794
  %v2796 = vrot.slane %v2791, %v2795
  %v2797 = vlaneseq
  %v2798 = vshrl.u32 %v2797, 7
  %v2799 = vsub.s32 1, %v2798
  %v2800 = vrot.slane %v2791, %v2799
  %v2801 = vlaneseq
  %v2802 = vshrl.u32 %v2801, 7
  %v2803 = vsub.s32 2, %v2802
  %v2804 = vrot.slane %v2791, %v2803
  %v2805 = vlaneseq
  %v2806 = vshrl.u32 %v2805, 7
  %v2807 = vsub.s32 3, %v2806
  %v2808 = vrot.slane %v2791, %v2807
  %v2809 = vlaneseq
  %v2810 = vshrl.u32 %v2809, 7
  %v2811 = vsub.s32 4, %v2810
  %v2812 = vrot.slane %v2791, %v2811
  %v2813 = vlaneseq
  %v2814 = vshrl.u32 %v2813, 7
  %v2815 = vsub.s32 5, %v2814
  %v2816 = vrot.slane %v2791, %v2815
  %v2817 = vlaneseq
  %v2818 = vshrl.u32 %v2817, 7
  %v2819 = vsub.s32 6, %v2818
  %v2820 = vrot.slane %v2791, %v2819
  %v2821 = vlaneseq
  %v2822 = vshrl.u32 %v2821, 7
  %v2823 = vsub.s32 7, %v2822
  %v2824 = vrot.slane %v2791, %v2823
  %v2833 = vmul.f32 %v2773, %v2796
  %v2834 = vmul.f32 %v2774, %v2800
  %v2835 = vmul.f32 %v2775, %v2804
  %v2836 = vmul.f32 %v2776, %v2808
  %v2837 = vmul.f32 %v2777, %v2812
  %v2838 = vmul.f32 %v2778, %v2816
  %v2839 = vmul.f32 %v2779, %v2820
  %v2840 = vmul.f32 %v2780, %v2824
  %vm2841 = vcmask 1043456
  %v2842 = vsel %vm2841, %v2833, 0.0
  %v2843 = vsel %vm2841, %v2834, 0.0
  %v2844 = vadd.f32 %v2842, %v2843
  %v2845 = vsel %vm2841, %v2835, 0.0
  %v2846 = vadd.f32 %v2844, %v2845
  %v2847 = vsel %vm2841, %v2836, 0.0
  %v2848 = vadd.f32 %v2846, %v2847
  %v2849 = vsel %vm2841, %v2837, 0.0
  %v2850 = vadd.f32 %v2848, %v2849
  %v2851 = vsel %vm2841, %v2838, 0.0
  %v2852 = vadd.f32 %v2850, %v2851
  %v2853 = vsel %vm2841, %v2839, 0.0
  %v2854 = vadd.f32 %v2852, %v2853
  %v2855 = vsel %vm2841, %v2840, 0.0
  %v2856 = vadd.f32 %v2854, %v2855
  %2857 = vadd.xlane.f32.xlu0 %v2856
  %v2858 = vpop.xlane.xlu0 %2857
  %v2859 = vmul.f32 %v2781, %v2796
  %v2860 = vmul.f32 %v2782, %v2800
  %v2861 = vmul.f32 %v2783, %v2804
  %v2862 = vmul.f32 %v2784, %v2808
  %v2863 = vmul.f32 %v2785, %v2812
  %v2864 = vmul.f32 %v2786, %v2816
  %v2865 = vmul.f32 %v2787, %v2820
  %v2866 = vmul.f32 %v2788, %v2824
  %v2867 = vsel %vm2841, %v2859, 0.0
  %v2868 = vsel %vm2841, %v2860, 0.0
  %v2869 = vadd.f32 %v2867, %v2868
  %v2870 = vsel %vm2841, %v2861, 0.0
  %v2871 = vadd.f32 %v2869, %v2870
  %v2872 = vsel %vm2841, %v2862, 0.0
  %v2873 = vadd.f32 %v2871, %v2872
  %v2874 = vsel %vm2841, %v2863, 0.0
  %v2875 = vadd.f32 %v2873, %v2874
  %v2876 = vsel %vm2841, %v2864, 0.0
  %v2877 = vadd.f32 %v2875, %v2876
  %v2878 = vsel %vm2841, %v2865, 0.0
  %v2879 = vadd.f32 %v2877, %v2878
  %v2880 = vsel %vm2841, %v2866, 0.0
  %v2881 = vadd.f32 %v2879, %v2880
  %2882 = vadd.xlane.f32.xlu0 %v2881
  %v2883 = vpop.xlane.xlu0 %2882
  %v2884 = vmul.f32 %v2858, 0.001953125
  %v2885 = vmul.f32 %v2883, 0.001953125
  %v2886 = vmul.f32 %v2884, %v2884
  %v2887 = vsub.f32 %v2885, %v2886
  %v2888 = vmax.f32 %v2887, 0.0
  %v2889 = vadd.f32 %v2888, 1e-05
  %v2890 = vrsqrt.pop %v2889
  %v2891 = vmul.f32 %v2890, %v2789
  %2893 = vset.pattern.permute.xlu0 0
  %2894 = vperm.xlu0 %2893, %v2891
  %v2895 = vpop.permute.xlu0 %2894
  %v2897 = vmul.f32 %v2895, %v2796
  %v2898 = vmul.f32 %v2895, %v2800
  %v2899 = vmul.f32 %v2895, %v2804
  %v2900 = vmul.f32 %v2895, %v2808
  %v2901 = vmul.f32 %v2895, %v2812
  %v2902 = vmul.f32 %v2895, %v2816
  %v2903 = vmul.f32 %v2895, %v2820
  %v2904 = vmul.f32 %v2895, %v2824
  %v2905 = vadd.f32 %v2897, 0.0
  %v2906 = vadd.f32 %v2898, 0.0
  %v2907 = vadd.f32 %v2899, 0.0
  %v2908 = vadd.f32 %v2900, 0.0
  %v2909 = vadd.f32 %v2901, 0.0
  %v2910 = vadd.f32 %v2902, 0.0
  %v2911 = vadd.f32 %v2903, 0.0
  %v2912 = vadd.f32 %v2904, 0.0
  %v2913 = vmul.f32 %v2884, %v2891
  %v2914 = vsub.f32 %v2790, %v2913
  %2916 = vset.pattern.permute.xlu0 0
  %2917 = vperm.xlu0 %2916, %v2914
  %v2918 = vpop.permute.xlu0 %2917
  %v2920 = vmul.f32 %v2918, %v2796
  %v2921 = vmul.f32 %v2918, %v2800
  %v2922 = vmul.f32 %v2918, %v2804
  %v2923 = vmul.f32 %v2918, %v2808
  %v2924 = vmul.f32 %v2918, %v2812
  %v2925 = vmul.f32 %v2918, %v2816
  %v2926 = vmul.f32 %v2918, %v2820
  %v2927 = vmul.f32 %v2918, %v2824
  %v2928 = vadd.f32 %v2920, 0.0
  %v2929 = vadd.f32 %v2921, 0.0
  %v2930 = vadd.f32 %v2922, 0.0
  %v2931 = vadd.f32 %v2923, 0.0
  %v2932 = vadd.f32 %v2924, 0.0
  %v2933 = vadd.f32 %v2925, 0.0
  %v2934 = vadd.f32 %v2926, 0.0
  %v2935 = vadd.f32 %v2927, 0.0
  %s2936 = scalar_lea.vmem %s2, 1
  %v2937 = vld [vmem:[%s2936] ss:$2 sm:$0xff]
  %v2939 = vlaneseq
  %v2940 = vshrl.u32 %v2939, 7
  %v2941 = vsub.s32 0, %v2940
  %v2942 = vrot.slane %v2937, %v2941
  %v2943 = vlaneseq
  %v2944 = vshrl.u32 %v2943, 7
  %v2945 = vsub.s32 1, %v2944
  %v2946 = vrot.slane %v2937, %v2945
  %v2947 = vlaneseq
  %v2948 = vshrl.u32 %v2947, 7
  %v2949 = vsub.s32 2, %v2948
  %v2950 = vrot.slane %v2937, %v2949
  %v2951 = vlaneseq
  %v2952 = vshrl.u32 %v2951, 7
  %v2953 = vsub.s32 3, %v2952
  %v2954 = vrot.slane %v2937, %v2953
  %v2955 = vlaneseq
  %v2956 = vshrl.u32 %v2955, 7
  %v2957 = vsub.s32 4, %v2956
  %v2958 = vrot.slane %v2937, %v2957
  %v2959 = vlaneseq
  %v2960 = vshrl.u32 %v2959, 7
  %v2961 = vsub.s32 5, %v2960
  %v2962 = vrot.slane %v2937, %v2961
  %v2963 = vlaneseq
  %v2964 = vshrl.u32 %v2963, 7
  %v2965 = vsub.s32 6, %v2964
  %v2966 = vrot.slane %v2937, %v2965
  %v2967 = vlaneseq
  %v2968 = vshrl.u32 %v2967, 7
  %v2969 = vsub.s32 7, %v2968
  %v2970 = vrot.slane %v2937, %v2969
  %v2979 = vmul.f32 %v2773, %v2942
  %v2980 = vmul.f32 %v2774, %v2946
  %v2981 = vmul.f32 %v2775, %v2950
  %v2982 = vmul.f32 %v2776, %v2954
  %v2983 = vmul.f32 %v2777, %v2958
  %v2984 = vmul.f32 %v2778, %v2962
  %v2985 = vmul.f32 %v2779, %v2966
  %v2986 = vmul.f32 %v2780, %v2970
  %v2987 = vsel %vm2841, %v2979, 0.0
  %v2988 = vsel %vm2841, %v2980, 0.0
  %v2989 = vadd.f32 %v2987, %v2988
  %v2990 = vsel %vm2841, %v2981, 0.0
  %v2991 = vadd.f32 %v2989, %v2990
  %v2992 = vsel %vm2841, %v2982, 0.0
  %v2993 = vadd.f32 %v2991, %v2992
  %v2994 = vsel %vm2841, %v2983, 0.0
  %v2995 = vadd.f32 %v2993, %v2994
  %v2996 = vsel %vm2841, %v2984, 0.0
  %v2997 = vadd.f32 %v2995, %v2996
  %v2998 = vsel %vm2841, %v2985, 0.0
  %v2999 = vadd.f32 %v2997, %v2998
  %v3000 = vsel %vm2841, %v2986, 0.0
  %v3001 = vadd.f32 %v2999, %v3000
  %3002 = vadd.xlane.f32.xlu0 %v3001
  %v3003 = vpop.xlane.xlu0 %3002
  %v3004 = vmul.f32 %v2781, %v2942
  %v3005 = vmul.f32 %v2782, %v2946
  %v3006 = vmul.f32 %v2783, %v2950
  %v3007 = vmul.f32 %v2784, %v2954
  %v3008 = vmul.f32 %v2785, %v2958
  %v3009 = vmul.f32 %v2786, %v2962
  %v3010 = vmul.f32 %v2787, %v2966
  %v3011 = vmul.f32 %v2788, %v2970
  %v3012 = vsel %vm2841, %v3004, 0.0
  %v3013 = vsel %vm2841, %v3005, 0.0
  %v3014 = vadd.f32 %v3012, %v3013
  %v3015 = vsel %vm2841, %v3006, 0.0
  %v3016 = vadd.f32 %v3014, %v3015
  %v3017 = vsel %vm2841, %v3007, 0.0
  %v3018 = vadd.f32 %v3016, %v3017
  %v3019 = vsel %vm2841, %v3008, 0.0
  %v3020 = vadd.f32 %v3018, %v3019
  %v3021 = vsel %vm2841, %v3009, 0.0
  %v3022 = vadd.f32 %v3020, %v3021
  %v3023 = vsel %vm2841, %v3010, 0.0
  %v3024 = vadd.f32 %v3022, %v3023
  %v3025 = vsel %vm2841, %v3011, 0.0
  %v3026 = vadd.f32 %v3024, %v3025
  %3027 = vadd.xlane.f32.xlu0 %v3026
  %v3028 = vpop.xlane.xlu0 %3027
  %v3029 = vmul.f32 %v3003, 0.001953125
  %v3030 = vmul.f32 %v3028, 0.001953125
  %v3031 = vmul.f32 %v3029, %v3029
  %v3032 = vsub.f32 %v3030, %v3031
  %v3033 = vmax.f32 %v3032, 0.0
  %v3034 = vadd.f32 %v3033, 1e-05
  %v3035 = vrsqrt.pop %v3034
  %v3036 = vmul.f32 %v3035, %v2789
  %3038 = vset.pattern.permute.xlu0 0
  %3039 = vperm.xlu0 %3038, %v3036
  %v3040 = vpop.permute.xlu0 %3039
  %v3042 = vmul.f32 %v3040, %v2942
  %v3043 = vmul.f32 %v3040, %v2946
  %v3044 = vmul.f32 %v3040, %v2950
  %v3045 = vmul.f32 %v3040, %v2954
  %v3046 = vmul.f32 %v3040, %v2958
  %v3047 = vmul.f32 %v3040, %v2962
  %v3048 = vmul.f32 %v3040, %v2966
  %v3049 = vmul.f32 %v3040, %v2970
  %v3050 = vadd.f32 %v2905, %v3042
  %v3051 = vadd.f32 %v2906, %v3043
  %v3052 = vadd.f32 %v2907, %v3044
  %v3053 = vadd.f32 %v2908, %v3045
  %v3054 = vadd.f32 %v2909, %v3046
  %v3055 = vadd.f32 %v2910, %v3047
  %v3056 = vadd.f32 %v2911, %v3048
  %v3057 = vadd.f32 %v2912, %v3049
  %v3058 = vmul.f32 %v3029, %v3036
  %v3059 = vsub.f32 %v2790, %v3058
  %3061 = vset.pattern.permute.xlu0 0
  %3062 = vperm.xlu0 %3061, %v3059
  %v3063 = vpop.permute.xlu0 %3062
  %v3065 = vmul.f32 %v3063, %v2942
  %v3066 = vmul.f32 %v3063, %v2946
  %v3067 = vmul.f32 %v3063, %v2950
  %v3068 = vmul.f32 %v3063, %v2954
  %v3069 = vmul.f32 %v3063, %v2958
  %v3070 = vmul.f32 %v3063, %v2962
  %v3071 = vmul.f32 %v3063, %v2966
  %v3072 = vmul.f32 %v3063, %v2970
  %v3073 = vadd.f32 %v2928, %v3065
  %v3074 = vadd.f32 %v2929, %v3066
  %v3075 = vadd.f32 %v2930, %v3067
  %v3076 = vadd.f32 %v2931, %v3068
  %v3077 = vadd.f32 %v2932, %v3069
  %v3078 = vadd.f32 %v2933, %v3070
  %v3079 = vadd.f32 %v2934, %v3071
  %v3080 = vadd.f32 %v2935, %v3072
  %v3081 = vmul.f32 %v2773, %v3050
  %v3082 = vmul.f32 %v2774, %v3051
  %v3083 = vmul.f32 %v2775, %v3052
  %v3084 = vmul.f32 %v2776, %v3053
  %v3085 = vmul.f32 %v2777, %v3054
  %v3086 = vmul.f32 %v2778, %v3055
  %v3087 = vmul.f32 %v2779, %v3056
  %v3088 = vmul.f32 %v2780, %v3057
  %v3089 = vadd.f32 %v3081, %v3073
  %v3090 = vadd.f32 %v3082, %v3074
  %v3091 = vadd.f32 %v3083, %v3075
  %v3092 = vadd.f32 %v3084, %v3076
  %v3093 = vadd.f32 %v3085, %v3077
  %v3094 = vadd.f32 %v3086, %v3078
  %v3095 = vadd.f32 %v3087, %v3079
  %v3096 = vadd.f32 %v3088, %v3080
  %3097 = vrot.lane.b32.xlu0 %v3089, 73
  %v3098 = vpop.permute.xlu0 %3097
  %3099 = vrot.lane.b32.xlu0 %v3090, 73
  %v3100 = vpop.permute.xlu0 %3099
  %3101 = vrot.lane.b32.xlu0 %v3091, 73
  %v3102 = vpop.permute.xlu0 %3101
  %3103 = vrot.lane.b32.xlu0 %v3092, 73
  %v3104 = vpop.permute.xlu0 %3103
  %3105 = vrot.lane.b32.xlu0 %v3093, 73
  %v3106 = vpop.permute.xlu0 %3105
  %3107 = vrot.lane.b32.xlu0 %v3094, 73
  %v3108 = vpop.permute.xlu0 %3107
  %3109 = vrot.lane.b32.xlu0 %v3095, 73
  %v3110 = vpop.permute.xlu0 %3109
  %3111 = vrot.lane.b32.xlu0 %v3096, 73
  %v3112 = vpop.permute.xlu0 %3111
  %v3113 = vsel %vm66, %v3110, %v3112
  %v3114 = vsel %vm66, %v3108, %v3110
  %v3115 = vsel %vm66, %v3106, %v3108
  %v3116 = vsel %vm66, %v3104, %v3106
  %v3117 = vsel %vm66, %v3102, %v3104
  %v3118 = vsel %vm66, %v3100, %v3102
  %v3119 = vsel %vm66, %v3098, %v3100
  %v3120 = vsel %vm66, %v3112, %v3098
  %v3121 = vld [vmem:[%s1] ss:$8 sm:$0xf]
  %v3122 = vld [vmem:[%s1] ss:$8 sm:$0xf0]
  %v3123 = vor.u32 %v3121, %v3122
  %v3125 = vlaneseq
  %v3126 = vshrl.u32 %v3125, 7
  %v3127 = vsub.s32 0, %v3126
  %v3128 = vrot.slane %v3123, %v3127
  %v3129 = vlaneseq
  %v3130 = vshrl.u32 %v3129, 7
  %v3131 = vsub.s32 1, %v3130
  %v3132 = vrot.slane %v3123, %v3131
  %v3133 = vlaneseq
  %v3134 = vshrl.u32 %v3133, 7
  %v3135 = vsub.s32 2, %v3134
  %v3136 = vrot.slane %v3123, %v3135
  %v3137 = vlaneseq
  %v3138 = vshrl.u32 %v3137, 7
  %v3139 = vsub.s32 3, %v3138
  %v3140 = vrot.slane %v3123, %v3139
  %v3141 = vlaneseq
  %v3142 = vshrl.u32 %v3141, 7
  %v3143 = vsub.s32 4, %v3142
  %v3144 = vrot.slane %v3123, %v3143
  %v3145 = vlaneseq
  %v3146 = vshrl.u32 %v3145, 7
  %v3147 = vsub.s32 5, %v3146
  %v3148 = vrot.slane %v3123, %v3147
  %v3149 = vlaneseq
  %v3150 = vshrl.u32 %v3149, 7
  %v3151 = vsub.s32 6, %v3150
  %v3152 = vrot.slane %v3123, %v3151
  %v3153 = vlaneseq
  %v3154 = vshrl.u32 %v3153, 7
  %v3155 = vsub.s32 7, %v3154
  %v3156 = vrot.slane %v3123, %v3155
  %v3165 = vmul.f32 %v3120, %v3128
  %v3166 = vmul.f32 %v3119, %v3132
  %v3167 = vmul.f32 %v3118, %v3136
  %v3168 = vmul.f32 %v3117, %v3140
  %v3169 = vmul.f32 %v3116, %v3144
  %v3170 = vmul.f32 %v3115, %v3148
  %v3171 = vmul.f32 %v3114, %v3152
  %v3172 = vmul.f32 %v3113, %v3156
  %3173 = vst [vmem:[#allocation2] sm:$0xf] %v3165
  %3174 = vst [vmem:[#allocation2 + $0x8] sm:$0xf] %v3166
  %3175 = vst [vmem:[#allocation2 + $0x10] sm:$0xf] %v3167
  %3176 = vst [vmem:[#allocation2 + $0x18] sm:$0xf] %v3168
  %3177 = vst [vmem:[#allocation2 + $0x20] sm:$0xf] %v3169
  %3178 = vst [vmem:[#allocation2 + $0x28] sm:$0xf] %v3170
  %3179 = vst [vmem:[#allocation2 + $0x30] sm:$0xf] %v3171
  %3180 = vst [vmem:[#allocation2 + $0x38] sm:$0xf] %v3172
  %3181 = vrot.lane.b32.xlu0 %v3089, 72
  %v3182 = vpop.permute.xlu0 %3181
  %3183 = vrot.lane.b32.xlu0 %v3090, 72
  %v3184 = vpop.permute.xlu0 %3183
  %3185 = vrot.lane.b32.xlu0 %v3091, 72
  %v3186 = vpop.permute.xlu0 %3185
  %3187 = vrot.lane.b32.xlu0 %v3092, 72
  %v3188 = vpop.permute.xlu0 %3187
  %3189 = vrot.lane.b32.xlu0 %v3093, 72
  %v3190 = vpop.permute.xlu0 %3189
  %3191 = vrot.lane.b32.xlu0 %v3094, 72
  %v3192 = vpop.permute.xlu0 %3191
  %3193 = vrot.lane.b32.xlu0 %v3095, 72
  %v3194 = vpop.permute.xlu0 %3193
  %3195 = vrot.lane.b32.xlu0 %v3096, 72
  %v3196 = vpop.permute.xlu0 %3195
  %v3197 = vsel %vm151, %v3194, %v3196
  %v3198 = vsel %vm151, %v3192, %v3194
  %v3199 = vsel %vm151, %v3190, %v3192
  %v3200 = vsel %vm151, %v3188, %v3190
  %v3201 = vsel %vm151, %v3186, %v3188
  %v3202 = vsel %vm151, %v3184, %v3186
  %v3203 = vsel %vm151, %v3182, %v3184
  %v3204 = vsel %vm151, %v3196, %v3182
  %v3205 = vld [vmem:[%s160] ss:$8 sm:$0xf]
  %v3206 = vld [vmem:[%s160] ss:$8 sm:$0xf0]
  %v3207 = vor.u32 %v3205, %v3206
  %v3209 = vlaneseq
  %v3210 = vshrl.u32 %v3209, 7
  %v3211 = vsub.s32 0, %v3210
  %v3212 = vrot.slane %v3207, %v3211
  %v3213 = vlaneseq
  %v3214 = vshrl.u32 %v3213, 7
  %v3215 = vsub.s32 1, %v3214
  %v3216 = vrot.slane %v3207, %v3215
  %v3217 = vlaneseq
  %v3218 = vshrl.u32 %v3217, 7
  %v3219 = vsub.s32 2, %v3218
  %v3220 = vrot.slane %v3207, %v3219
  %v3221 = vlaneseq
  %v3222 = vshrl.u32 %v3221, 7
  %v3223 = vsub.s32 3, %v3222
  %v3224 = vrot.slane %v3207, %v3223
  %v3225 = vlaneseq
  %v3226 = vshrl.u32 %v3225, 7
  %v3227 = vsub.s32 4, %v3226
  %v3228 = vrot.slane %v3207, %v3227
  %v3229 = vlaneseq
  %v3230 = vshrl.u32 %v3229, 7
  %v3231 = vsub.s32 5, %v3230
  %v3232 = vrot.slane %v3207, %v3231
  %v3233 = vlaneseq
  %v3234 = vshrl.u32 %v3233, 7
  %v3235 = vsub.s32 6, %v3234
  %v3236 = vrot.slane %v3207, %v3235
  %v3237 = vlaneseq
  %v3238 = vshrl.u32 %v3237, 7
  %v3239 = vsub.s32 7, %v3238
  %v3240 = vrot.slane %v3207, %v3239
  %v3249 = vmul.f32 %v3204, %v3212
  %v3250 = vmul.f32 %v3203, %v3216
  %v3251 = vmul.f32 %v3202, %v3220
  %v3252 = vmul.f32 %v3201, %v3224
  %v3253 = vmul.f32 %v3200, %v3228
  %v3254 = vmul.f32 %v3199, %v3232
  %v3255 = vmul.f32 %v3198, %v3236
  %v3256 = vmul.f32 %v3197, %v3240
  %v3265 = vrot.slane %v3249, 4
  %v3266 = vrot.slane %v3250, 4
  %v3267 = vrot.slane %v3251, 4
  %v3268 = vrot.slane %v3252, 4
  %v3269 = vrot.slane %v3253, 4
  %v3270 = vrot.slane %v3254, 4
  %v3271 = vrot.slane %v3255, 4
  %v3272 = vrot.slane %v3256, 4
  %3281 = vst [vmem:[#allocation2] sm:$0xf0] %v3265
  %3282 = vst [vmem:[#allocation2 + $0x8] sm:$0xf0] %v3266
  %3283 = vst [vmem:[#allocation2 + $0x10] sm:$0xf0] %v3267
  %3284 = vst [vmem:[#allocation2 + $0x18] sm:$0xf0] %v3268
  %3285 = vst [vmem:[#allocation2 + $0x20] sm:$0xf0] %v3269
  %3286 = vst [vmem:[#allocation2 + $0x28] sm:$0xf0] %v3270
  %3287 = vst [vmem:[#allocation2 + $0x30] sm:$0xf0] %v3271
  %3288 = vst [vmem:[#allocation2 + $0x38] sm:$0xf0] %v3272
  %3289 = vrot.lane.b32.xlu0 %v3089, 71
  %v3290 = vpop.permute.xlu0 %3289
  %3291 = vrot.lane.b32.xlu0 %v3090, 71
  %v3292 = vpop.permute.xlu0 %3291
  %3293 = vrot.lane.b32.xlu0 %v3091, 71
  %v3294 = vpop.permute.xlu0 %3293
  %3295 = vrot.lane.b32.xlu0 %v3092, 71
  %v3296 = vpop.permute.xlu0 %3295
  %3297 = vrot.lane.b32.xlu0 %v3093, 71
  %v3298 = vpop.permute.xlu0 %3297
  %3299 = vrot.lane.b32.xlu0 %v3094, 71
  %v3300 = vpop.permute.xlu0 %3299
  %3301 = vrot.lane.b32.xlu0 %v3095, 71
  %v3302 = vpop.permute.xlu0 %3301
  %3303 = vrot.lane.b32.xlu0 %v3096, 71
  %v3304 = vpop.permute.xlu0 %3303
  %v3305 = vsel %vm261, %v3302, %v3304
  %v3306 = vsel %vm261, %v3300, %v3302
  %v3307 = vsel %vm261, %v3298, %v3300
  %v3308 = vsel %vm261, %v3296, %v3298
  %v3309 = vsel %vm261, %v3294, %v3296
  %v3310 = vsel %vm261, %v3292, %v3294
  %v3311 = vsel %vm261, %v3290, %v3292
  %v3312 = vsel %vm261, %v3304, %v3290
  %v3313 = vld [vmem:[%s270] ss:$8 sm:$0xf]
  %v3314 = vld [vmem:[%s270] ss:$8 sm:$0xf0]
  %v3315 = vor.u32 %v3313, %v3314
  %v3317 = vlaneseq
  %v3318 = vshrl.u32 %v3317, 7
  %v3319 = vsub.s32 0, %v3318
  %v3320 = vrot.slane %v3315, %v3319
  %v3321 = vlaneseq
  %v3322 = vshrl.u32 %v3321, 7
  %v3323 = vsub.s32 1, %v3322
  %v3324 = vrot.slane %v3315, %v3323
  %v3325 = vlaneseq
  %v3326 = vshrl.u32 %v3325, 7
  %v3327 = vsub.s32 2, %v3326
  %v3328 = vrot.slane %v3315, %v3327
  %v3329 = vlaneseq
  %v3330 = vshrl.u32 %v3329, 7
  %v3331 = vsub.s32 3, %v3330
  %v3332 = vrot.slane %v3315, %v3331
  %v3333 = vlaneseq
  %v3334 = vshrl.u32 %v3333, 7
  %v3335 = vsub.s32 4, %v3334
  %v3336 = vrot.slane %v3315, %v3335
  %v3337 = vlaneseq
  %v3338 = vshrl.u32 %v3337, 7
  %v3339 = vsub.s32 5, %v3338
  %v3340 = vrot.slane %v3315, %v3339
  %v3341 = vlaneseq
  %v3342 = vshrl.u32 %v3341, 7
  %v3343 = vsub.s32 6, %v3342
  %v3344 = vrot.slane %v3315, %v3343
  %v3345 = vlaneseq
  %v3346 = vshrl.u32 %v3345, 7
  %v3347 = vsub.s32 7, %v3346
  %v3348 = vrot.slane %v3315, %v3347
  %v3357 = vmul.f32 %v3312, %v3320
  %v3358 = vmul.f32 %v3311, %v3324
  %v3359 = vmul.f32 %v3310, %v3328
  %v3360 = vmul.f32 %v3309, %v3332
  %v3361 = vmul.f32 %v3308, %v3336
  %v3362 = vmul.f32 %v3307, %v3340
  %v3363 = vmul.f32 %v3306, %v3344
  %v3364 = vmul.f32 %v3305, %v3348
  %3365 = vst [vmem:[#allocation2 + $0x40] sm:$0xf] %v3357
  %3366 = vst [vmem:[#allocation2 + $0x48] sm:$0xf] %v3358
  %3367 = vst [vmem:[#allocation2 + $0x50] sm:$0xf] %v3359
  %3368 = vst [vmem:[#allocation2 + $0x58] sm:$0xf] %v3360
  %3369 = vst [vmem:[#allocation2 + $0x60] sm:$0xf] %v3361
  %3370 = vst [vmem:[#allocation2 + $0x68] sm:$0xf] %v3362
  %3371 = vst [vmem:[#allocation2 + $0x70] sm:$0xf] %v3363
  %3372 = vst [vmem:[#allocation2 + $0x78] sm:$0xf] %v3364
  %3373 = vrot.lane.b32.xlu0 %v3089, 65
  %v3374 = vpop.permute.xlu0 %3373
  %3375 = vrot.lane.b32.xlu0 %v3090, 65
  %v3376 = vpop.permute.xlu0 %3375
  %3377 = vrot.lane.b32.xlu0 %v3091, 65
  %v3378 = vpop.permute.xlu0 %3377
  %3379 = vrot.lane.b32.xlu0 %v3092, 65
  %v3380 = vpop.permute.xlu0 %3379
  %3381 = vrot.lane.b32.xlu0 %v3093, 65
  %v3382 = vpop.permute.xlu0 %3381
  %3383 = vrot.lane.b32.xlu0 %v3094, 65
  %v3384 = vpop.permute.xlu0 %3383
  %3385 = vrot.lane.b32.xlu0 %v3095, 65
  %v3386 = vpop.permute.xlu0 %3385
  %3387 = vrot.lane.b32.xlu0 %v3096, 65
  %v3388 = vpop.permute.xlu0 %3387
  %v3389 = vsel %vm347, %v3386, %v3388
  %v3390 = vsel %vm347, %v3384, %v3386
  %v3391 = vsel %vm347, %v3382, %v3384
  %v3392 = vsel %vm347, %v3380, %v3382
  %v3393 = vsel %vm347, %v3378, %v3380
  %v3394 = vsel %vm347, %v3376, %v3378
  %v3395 = vsel %vm347, %v3374, %v3376
  %v3396 = vsel %vm347, %v3388, %v3374
  %v3397 = vld [vmem:[%s356] ss:$8 sm:$0xf]
  %v3398 = vld [vmem:[%s356] ss:$8 sm:$0xf0]
  %v3399 = vor.u32 %v3397, %v3398
  %v3401 = vlaneseq
  %v3402 = vshrl.u32 %v3401, 7
  %v3403 = vsub.s32 0, %v3402
  %v3404 = vrot.slane %v3399, %v3403
  %v3405 = vlaneseq
  %v3406 = vshrl.u32 %v3405, 7
  %v3407 = vsub.s32 1, %v3406
  %v3408 = vrot.slane %v3399, %v3407
  %v3409 = vlaneseq
  %v3410 = vshrl.u32 %v3409, 7
  %v3411 = vsub.s32 2, %v3410
  %v3412 = vrot.slane %v3399, %v3411
  %v3413 = vlaneseq
  %v3414 = vshrl.u32 %v3413, 7
  %v3415 = vsub.s32 3, %v3414
  %v3416 = vrot.slane %v3399, %v3415
  %v3417 = vlaneseq
  %v3418 = vshrl.u32 %v3417, 7
  %v3419 = vsub.s32 4, %v3418
  %v3420 = vrot.slane %v3399, %v3419
  %v3421 = vlaneseq
  %v3422 = vshrl.u32 %v3421, 7
  %v3423 = vsub.s32 5, %v3422
  %v3424 = vrot.slane %v3399, %v3423
  %v3425 = vlaneseq
  %v3426 = vshrl.u32 %v3425, 7
  %v3427 = vsub.s32 6, %v3426
  %v3428 = vrot.slane %v3399, %v3427
  %v3429 = vlaneseq
  %v3430 = vshrl.u32 %v3429, 7
  %v3431 = vsub.s32 7, %v3430
  %v3432 = vrot.slane %v3399, %v3431
  %v3441 = vmul.f32 %v3396, %v3404
  %v3442 = vmul.f32 %v3395, %v3408
  %v3443 = vmul.f32 %v3394, %v3412
  %v3444 = vmul.f32 %v3393, %v3416
  %v3445 = vmul.f32 %v3392, %v3420
  %v3446 = vmul.f32 %v3391, %v3424
  %v3447 = vmul.f32 %v3390, %v3428
  %v3448 = vmul.f32 %v3389, %v3432
  %v3457 = vrot.slane %v3441, 4
  %v3458 = vrot.slane %v3442, 4
  %v3459 = vrot.slane %v3443, 4
  %v3460 = vrot.slane %v3444, 4
  %v3461 = vrot.slane %v3445, 4
  %v3462 = vrot.slane %v3446, 4
  %v3463 = vrot.slane %v3447, 4
  %v3464 = vrot.slane %v3448, 4
  %3473 = vst [vmem:[#allocation2 + $0x40] sm:$0xf0] %v3457
  %3474 = vst [vmem:[#allocation2 + $0x48] sm:$0xf0] %v3458
  %3475 = vst [vmem:[#allocation2 + $0x50] sm:$0xf0] %v3459
  %3476 = vst [vmem:[#allocation2 + $0x58] sm:$0xf0] %v3460
  %3477 = vst [vmem:[#allocation2 + $0x60] sm:$0xf0] %v3461
  %3478 = vst [vmem:[#allocation2 + $0x68] sm:$0xf0] %v3462
  %3479 = vst [vmem:[#allocation2 + $0x70] sm:$0xf0] %v3463
  %3480 = vst [vmem:[#allocation2 + $0x78] sm:$0xf0] %v3464
  %3481 = vrot.lane.b32.xlu0 %v3089, 64
  %v3482 = vpop.permute.xlu0 %3481
  %3483 = vrot.lane.b32.xlu0 %v3090, 64
  %v3484 = vpop.permute.xlu0 %3483
  %3485 = vrot.lane.b32.xlu0 %v3091, 64
  %v3486 = vpop.permute.xlu0 %3485
  %3487 = vrot.lane.b32.xlu0 %v3092, 64
  %v3488 = vpop.permute.xlu0 %3487
  %3489 = vrot.lane.b32.xlu0 %v3093, 64
  %v3490 = vpop.permute.xlu0 %3489
  %3491 = vrot.lane.b32.xlu0 %v3094, 64
  %v3492 = vpop.permute.xlu0 %3491
  %3493 = vrot.lane.b32.xlu0 %v3095, 64
  %v3494 = vpop.permute.xlu0 %3493
  %3495 = vrot.lane.b32.xlu0 %v3096, 64
  %v3496 = vpop.permute.xlu0 %3495
  %v3497 = vsel %vm457, %v3494, %v3496
  %v3498 = vsel %vm457, %v3492, %v3494
  %v3499 = vsel %vm457, %v3490, %v3492
  %v3500 = vsel %vm457, %v3488, %v3490
  %v3501 = vsel %vm457, %v3486, %v3488
  %v3502 = vsel %vm457, %v3484, %v3486
  %v3503 = vsel %vm457, %v3482, %v3484
  %v3504 = vsel %vm457, %v3496, %v3482
  %v3505 = vld [vmem:[%s466] ss:$8 sm:$0xf]
  %v3506 = vld [vmem:[%s466] ss:$8 sm:$0xf0]
  %v3507 = vor.u32 %v3505, %v3506
  %v3509 = vlaneseq
  %v3510 = vshrl.u32 %v3509, 7
  %v3511 = vsub.s32 0, %v3510
  %v3512 = vrot.slane %v3507, %v3511
  %v3513 = vlaneseq
  %v3514 = vshrl.u32 %v3513, 7
  %v3515 = vsub.s32 1, %v3514
  %v3516 = vrot.slane %v3507, %v3515
  %v3517 = vlaneseq
  %v3518 = vshrl.u32 %v3517, 7
  %v3519 = vsub.s32 2, %v3518
  %v3520 = vrot.slane %v3507, %v3519
  %v3521 = vlaneseq
  %v3522 = vshrl.u32 %v3521, 7
  %v3523 = vsub.s32 3, %v3522
  %v3524 = vrot.slane %v3507, %v3523
  %v3525 = vlaneseq
  %v3526 = vshrl.u32 %v3525, 7
  %v3527 = vsub.s32 4, %v3526
  %v3528 = vrot.slane %v3507, %v3527
  %v3529 = vlaneseq
  %v3530 = vshrl.u32 %v3529, 7
  %v3531 = vsub.s32 5, %v3530
  %v3532 = vrot.slane %v3507, %v3531
  %v3533 = vlaneseq
  %v3534 = vshrl.u32 %v3533, 7
  %v3535 = vsub.s32 6, %v3534
  %v3536 = vrot.slane %v3507, %v3535
  %v3537 = vlaneseq
  %v3538 = vshrl.u32 %v3537, 7
  %v3539 = vsub.s32 7, %v3538
  %v3540 = vrot.slane %v3507, %v3539
  %v3549 = vmul.f32 %v3504, %v3512
  %v3550 = vmul.f32 %v3503, %v3516
  %v3551 = vmul.f32 %v3502, %v3520
  %v3552 = vmul.f32 %v3501, %v3524
  %v3553 = vmul.f32 %v3500, %v3528
  %v3554 = vmul.f32 %v3499, %v3532
  %v3555 = vmul.f32 %v3498, %v3536
  %v3556 = vmul.f32 %v3497, %v3540
  %3557 = vst [vmem:[#allocation2 + $0x80] sm:$0xf] %v3549
  %3558 = vst [vmem:[#allocation2 + $0x88] sm:$0xf] %v3550
  %3559 = vst [vmem:[#allocation2 + $0x90] sm:$0xf] %v3551
  %3560 = vst [vmem:[#allocation2 + $0x98] sm:$0xf] %v3552
  %3561 = vst [vmem:[#allocation2 + $0xa0] sm:$0xf] %v3553
  %3562 = vst [vmem:[#allocation2 + $0xa8] sm:$0xf] %v3554
  %3563 = vst [vmem:[#allocation2 + $0xb0] sm:$0xf] %v3555
  %3564 = vst [vmem:[#allocation2 + $0xb8] sm:$0xf] %v3556
  %3565 = vrot.lane.b32.xlu0 %v3089, 63
  %v3566 = vpop.permute.xlu0 %3565
  %3567 = vrot.lane.b32.xlu0 %v3090, 63
  %v3568 = vpop.permute.xlu0 %3567
  %3569 = vrot.lane.b32.xlu0 %v3091, 63
  %v3570 = vpop.permute.xlu0 %3569
  %3571 = vrot.lane.b32.xlu0 %v3092, 63
  %v3572 = vpop.permute.xlu0 %3571
  %3573 = vrot.lane.b32.xlu0 %v3093, 63
  %v3574 = vpop.permute.xlu0 %3573
  %3575 = vrot.lane.b32.xlu0 %v3094, 63
  %v3576 = vpop.permute.xlu0 %3575
  %3577 = vrot.lane.b32.xlu0 %v3095, 63
  %v3578 = vpop.permute.xlu0 %3577
  %3579 = vrot.lane.b32.xlu0 %v3096, 63
  %v3580 = vpop.permute.xlu0 %3579
  %v3581 = vsel %vm543, %v3578, %v3580
  %v3582 = vsel %vm543, %v3576, %v3578
  %v3583 = vsel %vm543, %v3574, %v3576
  %v3584 = vsel %vm543, %v3572, %v3574
  %v3585 = vsel %vm543, %v3570, %v3572
  %v3586 = vsel %vm543, %v3568, %v3570
  %v3587 = vsel %vm543, %v3566, %v3568
  %v3588 = vsel %vm543, %v3580, %v3566
  %v3589 = vld [vmem:[%s552] ss:$8 sm:$0xf]
  %v3590 = vld [vmem:[%s552] ss:$8 sm:$0xf0]
  %v3591 = vor.u32 %v3589, %v3590
  %v3593 = vlaneseq
  %v3594 = vshrl.u32 %v3593, 7
  %v3595 = vsub.s32 0, %v3594
  %v3596 = vrot.slane %v3591, %v3595
  %v3597 = vlaneseq
  %v3598 = vshrl.u32 %v3597, 7
  %v3599 = vsub.s32 1, %v3598
  %v3600 = vrot.slane %v3591, %v3599
  %v3601 = vlaneseq
  %v3602 = vshrl.u32 %v3601, 7
  %v3603 = vsub.s32 2, %v3602
  %v3604 = vrot.slane %v3591, %v3603
  %v3605 = vlaneseq
  %v3606 = vshrl.u32 %v3605, 7
  %v3607 = vsub.s32 3, %v3606
  %v3608 = vrot.slane %v3591, %v3607
  %v3609 = vlaneseq
  %v3610 = vshrl.u32 %v3609, 7
  %v3611 = vsub.s32 4, %v3610
  %v3612 = vrot.slane %v3591, %v3611
  %v3613 = vlaneseq
  %v3614 = vshrl.u32 %v3613, 7
  %v3615 = vsub.s32 5, %v3614
  %v3616 = vrot.slane %v3591, %v3615
  %v3617 = vlaneseq
  %v3618 = vshrl.u32 %v3617, 7
  %v3619 = vsub.s32 6, %v3618
  %v3620 = vrot.slane %v3591, %v3619
  %v3621 = vlaneseq
  %v3622 = vshrl.u32 %v3621, 7
  %v3623 = vsub.s32 7, %v3622
  %v3624 = vrot.slane %v3591, %v3623
  %v3633 = vmul.f32 %v3588, %v3596
  %v3634 = vmul.f32 %v3587, %v3600
  %v3635 = vmul.f32 %v3586, %v3604
  %v3636 = vmul.f32 %v3585, %v3608
  %v3637 = vmul.f32 %v3584, %v3612
  %v3638 = vmul.f32 %v3583, %v3616
  %v3639 = vmul.f32 %v3582, %v3620
  %v3640 = vmul.f32 %v3581, %v3624
  %v3649 = vrot.slane %v3633, 4
  %v3650 = vrot.slane %v3634, 4
  %v3651 = vrot.slane %v3635, 4
  %v3652 = vrot.slane %v3636, 4
  %v3653 = vrot.slane %v3637, 4
  %v3654 = vrot.slane %v3638, 4
  %v3655 = vrot.slane %v3639, 4
  %v3656 = vrot.slane %v3640, 4
  %3665 = vst [vmem:[#allocation2 + $0x80] sm:$0xf0] %v3649
  %3666 = vst [vmem:[#allocation2 + $0x88] sm:$0xf0] %v3650
  %3667 = vst [vmem:[#allocation2 + $0x90] sm:$0xf0] %v3651
  %3668 = vst [vmem:[#allocation2 + $0x98] sm:$0xf0] %v3652
  %3669 = vst [vmem:[#allocation2 + $0xa0] sm:$0xf0] %v3653
  %3670 = vst [vmem:[#allocation2 + $0xa8] sm:$0xf0] %v3654
  %3671 = vst [vmem:[#allocation2 + $0xb0] sm:$0xf0] %v3655
  %3672 = vst [vmem:[#allocation2 + $0xb8] sm:$0xf0] %v3656
  %3673 = vrot.lane.b32.xlu0 %v3089, 57
  %v3674 = vpop.permute.xlu0 %3673
  %3675 = vrot.lane.b32.xlu0 %v3090, 57
  %v3676 = vpop.permute.xlu0 %3675
  %3677 = vrot.lane.b32.xlu0 %v3091, 57
  %v3678 = vpop.permute.xlu0 %3677
  %3679 = vrot.lane.b32.xlu0 %v3092, 57
  %v3680 = vpop.permute.xlu0 %3679
  %3681 = vrot.lane.b32.xlu0 %v3093, 57
  %v3682 = vpop.permute.xlu0 %3681
  %3683 = vrot.lane.b32.xlu0 %v3094, 57
  %v3684 = vpop.permute.xlu0 %3683
  %3685 = vrot.lane.b32.xlu0 %v3095, 57
  %v3686 = vpop.permute.xlu0 %3685
  %3687 = vrot.lane.b32.xlu0 %v3096, 57
  %v3688 = vpop.permute.xlu0 %3687
  %v3689 = vsel %vm653, %v3686, %v3688
  %v3690 = vsel %vm653, %v3684, %v3686
  %v3691 = vsel %vm653, %v3682, %v3684
  %v3692 = vsel %vm653, %v3680, %v3682
  %v3693 = vsel %vm653, %v3678, %v3680
  %v3694 = vsel %vm653, %v3676, %v3678
  %v3695 = vsel %vm653, %v3674, %v3676
  %v3696 = vsel %vm653, %v3688, %v3674
  %v3697 = vld [vmem:[%s662] ss:$8 sm:$0xf]
  %v3698 = vld [vmem:[%s662] ss:$8 sm:$0xf0]
  %v3699 = vor.u32 %v3697, %v3698
  %v3701 = vlaneseq
  %v3702 = vshrl.u32 %v3701, 7
  %v3703 = vsub.s32 0, %v3702
  %v3704 = vrot.slane %v3699, %v3703
  %v3705 = vlaneseq
  %v3706 = vshrl.u32 %v3705, 7
  %v3707 = vsub.s32 1, %v3706
  %v3708 = vrot.slane %v3699, %v3707
  %v3709 = vlaneseq
  %v3710 = vshrl.u32 %v3709, 7
  %v3711 = vsub.s32 2, %v3710
  %v3712 = vrot.slane %v3699, %v3711
  %v3713 = vlaneseq
  %v3714 = vshrl.u32 %v3713, 7
  %v3715 = vsub.s32 3, %v3714
  %v3716 = vrot.slane %v3699, %v3715
  %v3717 = vlaneseq
  %v3718 = vshrl.u32 %v3717, 7
  %v3719 = vsub.s32 4, %v3718
  %v3720 = vrot.slane %v3699, %v3719
  %v3721 = vlaneseq
  %v3722 = vshrl.u32 %v3721, 7
  %v3723 = vsub.s32 5, %v3722
  %v3724 = vrot.slane %v3699, %v3723
  %v3725 = vlaneseq
  %v3726 = vshrl.u32 %v3725, 7
  %v3727 = vsub.s32 6, %v3726
  %v3728 = vrot.slane %v3699, %v3727
  %v3729 = vlaneseq
  %v3730 = vshrl.u32 %v3729, 7
  %v3731 = vsub.s32 7, %v3730
  %v3732 = vrot.slane %v3699, %v3731
  %v3741 = vmul.f32 %v3696, %v3704
  %v3742 = vmul.f32 %v3695, %v3708
  %v3743 = vmul.f32 %v3694, %v3712
  %v3744 = vmul.f32 %v3693, %v3716
  %v3745 = vmul.f32 %v3692, %v3720
  %v3746 = vmul.f32 %v3691, %v3724
  %v3747 = vmul.f32 %v3690, %v3728
  %v3748 = vmul.f32 %v3689, %v3732
  %3749 = vst [vmem:[#allocation2 + $0xc0] sm:$0xf] %v3741
  %3750 = vst [vmem:[#allocation2 + $0xc8] sm:$0xf] %v3742
  %3751 = vst [vmem:[#allocation2 + $0xd0] sm:$0xf] %v3743
  %3752 = vst [vmem:[#allocation2 + $0xd8] sm:$0xf] %v3744
  %3753 = vst [vmem:[#allocation2 + $0xe0] sm:$0xf] %v3745
  %3754 = vst [vmem:[#allocation2 + $0xe8] sm:$0xf] %v3746
  %3755 = vst [vmem:[#allocation2 + $0xf0] sm:$0xf] %v3747
  %3756 = vst [vmem:[#allocation2 + $0xf8] sm:$0xf] %v3748
  %3757 = vrot.lane.b32.xlu0 %v3089, 56
  %v3758 = vpop.permute.xlu0 %3757
  %3759 = vrot.lane.b32.xlu0 %v3090, 56
  %v3760 = vpop.permute.xlu0 %3759
  %3761 = vrot.lane.b32.xlu0 %v3091, 56
  %v3762 = vpop.permute.xlu0 %3761
  %3763 = vrot.lane.b32.xlu0 %v3092, 56
  %v3764 = vpop.permute.xlu0 %3763
  %3765 = vrot.lane.b32.xlu0 %v3093, 56
  %v3766 = vpop.permute.xlu0 %3765
  %3767 = vrot.lane.b32.xlu0 %v3094, 56
  %v3768 = vpop.permute.xlu0 %3767
  %3769 = vrot.lane.b32.xlu0 %v3095, 56
  %v3770 = vpop.permute.xlu0 %3769
  %3771 = vrot.lane.b32.xlu0 %v3096, 56
  %v3772 = vpop.permute.xlu0 %3771
  %v3773 = vsel %vm739, %v3770, %v3772
  %v3774 = vsel %vm739, %v3768, %v3770
  %v3775 = vsel %vm739, %v3766, %v3768
  %v3776 = vsel %vm739, %v3764, %v3766
  %v3777 = vsel %vm739, %v3762, %v3764
  %v3778 = vsel %vm739, %v3760, %v3762
  %v3779 = vsel %vm739, %v3758, %v3760
  %v3780 = vsel %vm739, %v3772, %v3758
  %v3781 = vld [vmem:[%s748] ss:$8 sm:$0xf]
  %v3782 = vld [vmem:[%s748] ss:$8 sm:$0xf0]
  %v3783 = vor.u32 %v3781, %v3782
  %v3785 = vlaneseq
  %v3786 = vshrl.u32 %v3785, 7
  %v3787 = vsub.s32 0, %v3786
  %v3788 = vrot.slane %v3783, %v3787
  %v3789 = vlaneseq
  %v3790 = vshrl.u32 %v3789, 7
  %v3791 = vsub.s32 1, %v3790
  %v3792 = vrot.slane %v3783, %v3791
  %v3793 = vlaneseq
  %v3794 = vshrl.u32 %v3793, 7
  %v3795 = vsub.s32 2, %v3794
  %v3796 = vrot.slane %v3783, %v3795
  %v3797 = vlaneseq
  %v3798 = vshrl.u32 %v3797, 7
  %v3799 = vsub.s32 3, %v3798
  %v3800 = vrot.slane %v3783, %v3799
  %v3801 = vlaneseq
  %v3802 = vshrl.u32 %v3801, 7
  %v3803 = vsub.s32 4, %v3802
  %v3804 = vrot.slane %v3783, %v3803
  %v3805 = vlaneseq
  %v3806 = vshrl.u32 %v3805, 7
  %v3807 = vsub.s32 5, %v3806
  %v3808 = vrot.slane %v3783, %v3807
  %v3809 = vlaneseq
  %v3810 = vshrl.u32 %v3809, 7
  %v3811 = vsub.s32 6, %v3810
  %v3812 = vrot.slane %v3783, %v3811
  %v3813 = vlaneseq
  %v3814 = vshrl.u32 %v3813, 7
  %v3815 = vsub.s32 7, %v3814
  %v3816 = vrot.slane %v3783, %v3815
  %v3825 = vmul.f32 %v3780, %v3788
  %v3826 = vmul.f32 %v3779, %v3792
  %v3827 = vmul.f32 %v3778, %v3796
  %v3828 = vmul.f32 %v3777, %v3800
  %v3829 = vmul.f32 %v3776, %v3804
  %v3830 = vmul.f32 %v3775, %v3808
  %v3831 = vmul.f32 %v3774, %v3812
  %v3832 = vmul.f32 %v3773, %v3816
  %v3841 = vrot.slane %v3825, 4
  %v3842 = vrot.slane %v3826, 4
  %v3843 = vrot.slane %v3827, 4
  %v3844 = vrot.slane %v3828, 4
  %v3845 = vrot.slane %v3829, 4
  %v3846 = vrot.slane %v3830, 4
  %v3847 = vrot.slane %v3831, 4
  %v3848 = vrot.slane %v3832, 4
  %3857 = vst [vmem:[#allocation2 + $0xc0] sm:$0xf0] %v3841
  %3858 = vst [vmem:[#allocation2 + $0xc8] sm:$0xf0] %v3842
  %3859 = vst [vmem:[#allocation2 + $0xd0] sm:$0xf0] %v3843
  %3860 = vst [vmem:[#allocation2 + $0xd8] sm:$0xf0] %v3844
  %3861 = vst [vmem:[#allocation2 + $0xe0] sm:$0xf0] %v3845
  %3862 = vst [vmem:[#allocation2 + $0xe8] sm:$0xf0] %v3846
  %3863 = vst [vmem:[#allocation2 + $0xf0] sm:$0xf0] %v3847
  %3864 = vst [vmem:[#allocation2 + $0xf8] sm:$0xf0] %v3848
  %3865 = vrot.lane.b32.xlu0 %v3089, 55
  %v3866 = vpop.permute.xlu0 %3865
  %3867 = vrot.lane.b32.xlu0 %v3090, 55
  %v3868 = vpop.permute.xlu0 %3867
  %3869 = vrot.lane.b32.xlu0 %v3091, 55
  %v3870 = vpop.permute.xlu0 %3869
  %3871 = vrot.lane.b32.xlu0 %v3092, 55
  %v3872 = vpop.permute.xlu0 %3871
  %3873 = vrot.lane.b32.xlu0 %v3093, 55
  %v3874 = vpop.permute.xlu0 %3873
  %3875 = vrot.lane.b32.xlu0 %v3094, 55
  %v3876 = vpop.permute.xlu0 %3875
  %3877 = vrot.lane.b32.xlu0 %v3095, 55
  %v3878 = vpop.permute.xlu0 %3877
  %3879 = vrot.lane.b32.xlu0 %v3096, 55
  %v3880 = vpop.permute.xlu0 %3879
  %v3881 = vsel %vm849, %v3878, %v3880
  %v3882 = vsel %vm849, %v3876, %v3878
  %v3883 = vsel %vm849, %v3874, %v3876
  %v3884 = vsel %vm849, %v3872, %v3874
  %v3885 = vsel %vm849, %v3870, %v3872
  %v3886 = vsel %vm849, %v3868, %v3870
  %v3887 = vsel %vm849, %v3866, %v3868
  %v3888 = vsel %vm849, %v3880, %v3866
  %v3889 = vld [vmem:[%s858] ss:$8 sm:$0xf]
  %v3890 = vld [vmem:[%s858] ss:$8 sm:$0xf0]
  %v3891 = vor.u32 %v3889, %v3890
  %v3893 = vlaneseq
  %v3894 = vshrl.u32 %v3893, 7
  %v3895 = vsub.s32 0, %v3894
  %v3896 = vrot.slane %v3891, %v3895
  %v3897 = vlaneseq
  %v3898 = vshrl.u32 %v3897, 7
  %v3899 = vsub.s32 1, %v3898
  %v3900 = vrot.slane %v3891, %v3899
  %v3901 = vlaneseq
  %v3902 = vshrl.u32 %v3901, 7
  %v3903 = vsub.s32 2, %v3902
  %v3904 = vrot.slane %v3891, %v3903
  %v3905 = vlaneseq
  %v3906 = vshrl.u32 %v3905, 7
  %v3907 = vsub.s32 3, %v3906
  %v3908 = vrot.slane %v3891, %v3907
  %v3909 = vlaneseq
  %v3910 = vshrl.u32 %v3909, 7
  %v3911 = vsub.s32 4, %v3910
  %v3912 = vrot.slane %v3891, %v3911
  %v3913 = vlaneseq
  %v3914 = vshrl.u32 %v3913, 7
  %v3915 = vsub.s32 5, %v3914
  %v3916 = vrot.slane %v3891, %v3915
  %v3917 = vlaneseq
  %v3918 = vshrl.u32 %v3917, 7
  %v3919 = vsub.s32 6, %v3918
  %v3920 = vrot.slane %v3891, %v3919
  %v3921 = vlaneseq
  %v3922 = vshrl.u32 %v3921, 7
  %v3923 = vsub.s32 7, %v3922
  %v3924 = vrot.slane %v3891, %v3923
  %v3933 = vmul.f32 %v3888, %v3896
  %v3934 = vmul.f32 %v3887, %v3900
  %v3935 = vmul.f32 %v3886, %v3904
  %v3936 = vmul.f32 %v3885, %v3908
  %v3937 = vmul.f32 %v3884, %v3912
  %v3938 = vmul.f32 %v3883, %v3916
  %v3939 = vmul.f32 %v3882, %v3920
  %v3940 = vmul.f32 %v3881, %v3924
  %3941 = vst [vmem:[#allocation2 + $0x100] sm:$0xf] %v3933
  %3942 = vst [vmem:[#allocation2 + $0x108] sm:$0xf] %v3934
  %3943 = vst [vmem:[#allocation2 + $0x110] sm:$0xf] %v3935
  %3944 = vst [vmem:[#allocation2 + $0x118] sm:$0xf] %v3936
  %3945 = vst [vmem:[#allocation2 + $0x120] sm:$0xf] %v3937
  %3946 = vst [vmem:[#allocation2 + $0x128] sm:$0xf] %v3938
  %3947 = vst [vmem:[#allocation2 + $0x130] sm:$0xf] %v3939
  %3948 = vst [vmem:[#allocation2 + $0x138] sm:$0xf] %v3940
  %3949 = vrot.lane.b32.xlu0 %v3089, 9
  %v3950 = vpop.permute.xlu0 %3949
  %3951 = vrot.lane.b32.xlu0 %v3090, 9
  %v3952 = vpop.permute.xlu0 %3951
  %3953 = vrot.lane.b32.xlu0 %v3091, 9
  %v3954 = vpop.permute.xlu0 %3953
  %3955 = vrot.lane.b32.xlu0 %v3092, 9
  %v3956 = vpop.permute.xlu0 %3955
  %3957 = vrot.lane.b32.xlu0 %v3093, 9
  %v3958 = vpop.permute.xlu0 %3957
  %3959 = vrot.lane.b32.xlu0 %v3094, 9
  %v3960 = vpop.permute.xlu0 %3959
  %3961 = vrot.lane.b32.xlu0 %v3095, 9
  %v3962 = vpop.permute.xlu0 %3961
  %3963 = vrot.lane.b32.xlu0 %v3096, 9
  %v3964 = vpop.permute.xlu0 %3963
  %v3965 = vsel %vm935, %v3962, %v3964
  %v3966 = vsel %vm935, %v3960, %v3962
  %v3967 = vsel %vm935, %v3958, %v3960
  %v3968 = vsel %vm935, %v3956, %v3958
  %v3969 = vsel %vm935, %v3954, %v3956
  %v3970 = vsel %vm935, %v3952, %v3954
  %v3971 = vsel %vm935, %v3950, %v3952
  %v3972 = vsel %vm935, %v3964, %v3950
  %v3973 = vld [vmem:[%s944] ss:$8 sm:$0xf]
  %v3974 = vld [vmem:[%s944] ss:$8 sm:$0xf0]
  %v3975 = vor.u32 %v3973, %v3974
  %v3977 = vlaneseq
  %v3978 = vshrl.u32 %v3977, 7
  %v3979 = vsub.s32 0, %v3978
  %v3980 = vrot.slane %v3975, %v3979
  %v3981 = vlaneseq
  %v3982 = vshrl.u32 %v3981, 7
  %v3983 = vsub.s32 1, %v3982
  %v3984 = vrot.slane %v3975, %v3983
  %v3985 = vlaneseq
  %v3986 = vshrl.u32 %v3985, 7
  %v3987 = vsub.s32 2, %v3986
  %v3988 = vrot.slane %v3975, %v3987
  %v3989 = vlaneseq
  %v3990 = vshrl.u32 %v3989, 7
  %v3991 = vsub.s32 3, %v3990
  %v3992 = vrot.slane %v3975, %v3991
  %v3993 = vlaneseq
  %v3994 = vshrl.u32 %v3993, 7
  %v3995 = vsub.s32 4, %v3994
  %v3996 = vrot.slane %v3975, %v3995
  %v3997 = vlaneseq
  %v3998 = vshrl.u32 %v3997, 7
  %v3999 = vsub.s32 5, %v3998
  %v4000 = vrot.slane %v3975, %v3999
  %v4001 = vlaneseq
  %v4002 = vshrl.u32 %v4001, 7
  %v4003 = vsub.s32 6, %v4002
  %v4004 = vrot.slane %v3975, %v4003
  %v4005 = vlaneseq
  %v4006 = vshrl.u32 %v4005, 7
  %v4007 = vsub.s32 7, %v4006
  %v4008 = vrot.slane %v3975, %v4007
  %v4017 = vmul.f32 %v3972, %v3980
  %v4018 = vmul.f32 %v3971, %v3984
  %v4019 = vmul.f32 %v3970, %v3988
  %v4020 = vmul.f32 %v3969, %v3992
  %v4021 = vmul.f32 %v3968, %v3996
  %v4022 = vmul.f32 %v3967, %v4000
  %v4023 = vmul.f32 %v3966, %v4004
  %v4024 = vmul.f32 %v3965, %v4008
  %v4033 = vrot.slane %v4017, 4
  %v4034 = vrot.slane %v4018, 4
  %v4035 = vrot.slane %v4019, 4
  %v4036 = vrot.slane %v4020, 4
  %v4037 = vrot.slane %v4021, 4
  %v4038 = vrot.slane %v4022, 4
  %v4039 = vrot.slane %v4023, 4
  %v4040 = vrot.slane %v4024, 4
  %4049 = vst [vmem:[#allocation2 + $0x100] sm:$0xf0] %v4033
  %4050 = vst [vmem:[#allocation2 + $0x108] sm:$0xf0] %v4034
  %4051 = vst [vmem:[#allocation2 + $0x110] sm:$0xf0] %v4035
  %4052 = vst [vmem:[#allocation2 + $0x118] sm:$0xf0] %v4036
  %4053 = vst [vmem:[#allocation2 + $0x120] sm:$0xf0] %v4037
  %4054 = vst [vmem:[#allocation2 + $0x128] sm:$0xf0] %v4038
  %4055 = vst [vmem:[#allocation2 + $0x130] sm:$0xf0] %v4039
  %4056 = vst [vmem:[#allocation2 + $0x138] sm:$0xf0] %v4040
  %4057 = vrot.lane.b32.xlu0 %v3089, 8
  %v4058 = vpop.permute.xlu0 %4057
  %4059 = vrot.lane.b32.xlu0 %v3090, 8
  %v4060 = vpop.permute.xlu0 %4059
  %4061 = vrot.lane.b32.xlu0 %v3091, 8
  %v4062 = vpop.permute.xlu0 %4061
  %4063 = vrot.lane.b32.xlu0 %v3092, 8
  %v4064 = vpop.permute.xlu0 %4063
  %4065 = vrot.lane.b32.xlu0 %v3093, 8
  %v4066 = vpop.permute.xlu0 %4065
  %4067 = vrot.lane.b32.xlu0 %v3094, 8
  %v4068 = vpop.permute.xlu0 %4067
  %4069 = vrot.lane.b32.xlu0 %v3095, 8
  %v4070 = vpop.permute.xlu0 %4069
  %4071 = vrot.lane.b32.xlu0 %v3096, 8
  %v4072 = vpop.permute.xlu0 %4071
  %v4073 = vsel %vm1045, %v4070, %v4072
  %v4074 = vsel %vm1045, %v4068, %v4070
  %v4075 = vsel %vm1045, %v4066, %v4068
  %v4076 = vsel %vm1045, %v4064, %v4066
  %v4077 = vsel %vm1045, %v4062, %v4064
  %v4078 = vsel %vm1045, %v4060, %v4062
  %v4079 = vsel %vm1045, %v4058, %v4060
  %v4080 = vsel %vm1045, %v4072, %v4058
  %v4081 = vld [vmem:[%s1054] ss:$8 sm:$0xf]
  %v4082 = vld [vmem:[%s1054] ss:$8 sm:$0xf0]
  %v4083 = vor.u32 %v4081, %v4082
  %v4085 = vlaneseq
  %v4086 = vshrl.u32 %v4085, 7
  %v4087 = vsub.s32 0, %v4086
  %v4088 = vrot.slane %v4083, %v4087
  %v4089 = vlaneseq
  %v4090 = vshrl.u32 %v4089, 7
  %v4091 = vsub.s32 1, %v4090
  %v4092 = vrot.slane %v4083, %v4091
  %v4093 = vlaneseq
  %v4094 = vshrl.u32 %v4093, 7
  %v4095 = vsub.s32 2, %v4094
  %v4096 = vrot.slane %v4083, %v4095
  %v4097 = vlaneseq
  %v4098 = vshrl.u32 %v4097, 7
  %v4099 = vsub.s32 3, %v4098
  %v4100 = vrot.slane %v4083, %v4099
  %v4101 = vlaneseq
  %v4102 = vshrl.u32 %v4101, 7
  %v4103 = vsub.s32 4, %v4102
  %v4104 = vrot.slane %v4083, %v4103
  %v4105 = vlaneseq
  %v4106 = vshrl.u32 %v4105, 7
  %v4107 = vsub.s32 5, %v4106
  %v4108 = vrot.slane %v4083, %v4107
  %v4109 = vlaneseq
  %v4110 = vshrl.u32 %v4109, 7
  %v4111 = vsub.s32 6, %v4110
  %v4112 = vrot.slane %v4083, %v4111
  %v4113 = vlaneseq
  %v4114 = vshrl.u32 %v4113, 7
  %v4115 = vsub.s32 7, %v4114
  %v4116 = vrot.slane %v4083, %v4115
  %v4125 = vmul.f32 %v4080, %v4088
  %v4126 = vmul.f32 %v4079, %v4092
  %v4127 = vmul.f32 %v4078, %v4096
  %v4128 = vmul.f32 %v4077, %v4100
  %v4129 = vmul.f32 %v4076, %v4104
  %v4130 = vmul.f32 %v4075, %v4108
  %v4131 = vmul.f32 %v4074, %v4112
  %v4132 = vmul.f32 %v4073, %v4116
  %4133 = vst [vmem:[#allocation2 + $0x140] sm:$0xf] %v4125
  %4134 = vst [vmem:[#allocation2 + $0x148] sm:$0xf] %v4126
  %4135 = vst [vmem:[#allocation2 + $0x150] sm:$0xf] %v4127
  %4136 = vst [vmem:[#allocation2 + $0x158] sm:$0xf] %v4128
  %4137 = vst [vmem:[#allocation2 + $0x160] sm:$0xf] %v4129
  %4138 = vst [vmem:[#allocation2 + $0x168] sm:$0xf] %v4130
  %4139 = vst [vmem:[#allocation2 + $0x170] sm:$0xf] %v4131
  %4140 = vst [vmem:[#allocation2 + $0x178] sm:$0xf] %v4132
  %4141 = vrot.lane.b32.xlu0 %v3089, 7
  %v4142 = vpop.permute.xlu0 %4141
  %4143 = vrot.lane.b32.xlu0 %v3090, 7
  %v4144 = vpop.permute.xlu0 %4143
  %4145 = vrot.lane.b32.xlu0 %v3091, 7
  %v4146 = vpop.permute.xlu0 %4145
  %4147 = vrot.lane.b32.xlu0 %v3092, 7
  %v4148 = vpop.permute.xlu0 %4147
  %4149 = vrot.lane.b32.xlu0 %v3093, 7
  %v4150 = vpop.permute.xlu0 %4149
  %4151 = vrot.lane.b32.xlu0 %v3094, 7
  %v4152 = vpop.permute.xlu0 %4151
  %4153 = vrot.lane.b32.xlu0 %v3095, 7
  %v4154 = vpop.permute.xlu0 %4153
  %4155 = vrot.lane.b32.xlu0 %v3096, 7
  %v4156 = vpop.permute.xlu0 %4155
  %v4157 = vsel %vm1131, %v4154, %v4156
  %v4158 = vsel %vm1131, %v4152, %v4154
  %v4159 = vsel %vm1131, %v4150, %v4152
  %v4160 = vsel %vm1131, %v4148, %v4150
  %v4161 = vsel %vm1131, %v4146, %v4148
  %v4162 = vsel %vm1131, %v4144, %v4146
  %v4163 = vsel %vm1131, %v4142, %v4144
  %v4164 = vsel %vm1131, %v4156, %v4142
  %v4165 = vld [vmem:[%s1140] ss:$8 sm:$0xf]
  %v4166 = vld [vmem:[%s1140] ss:$8 sm:$0xf0]
  %v4167 = vor.u32 %v4165, %v4166
  %v4169 = vlaneseq
  %v4170 = vshrl.u32 %v4169, 7
  %v4171 = vsub.s32 0, %v4170
  %v4172 = vrot.slane %v4167, %v4171
  %v4173 = vlaneseq
  %v4174 = vshrl.u32 %v4173, 7
  %v4175 = vsub.s32 1, %v4174
  %v4176 = vrot.slane %v4167, %v4175
  %v4177 = vlaneseq
  %v4178 = vshrl.u32 %v4177, 7
  %v4179 = vsub.s32 2, %v4178
  %v4180 = vrot.slane %v4167, %v4179
  %v4181 = vlaneseq
  %v4182 = vshrl.u32 %v4181, 7
  %v4183 = vsub.s32 3, %v4182
  %v4184 = vrot.slane %v4167, %v4183
  %v4185 = vlaneseq
  %v4186 = vshrl.u32 %v4185, 7
  %v4187 = vsub.s32 4, %v4186
  %v4188 = vrot.slane %v4167, %v4187
  %v4189 = vlaneseq
  %v4190 = vshrl.u32 %v4189, 7
  %v4191 = vsub.s32 5, %v4190
  %v4192 = vrot.slane %v4167, %v4191
  %v4193 = vlaneseq
  %v4194 = vshrl.u32 %v4193, 7
  %v4195 = vsub.s32 6, %v4194
  %v4196 = vrot.slane %v4167, %v4195
  %v4197 = vlaneseq
  %v4198 = vshrl.u32 %v4197, 7
  %v4199 = vsub.s32 7, %v4198
  %v4200 = vrot.slane %v4167, %v4199
  %v4209 = vmul.f32 %v4164, %v4172
  %v4210 = vmul.f32 %v4163, %v4176
  %v4211 = vmul.f32 %v4162, %v4180
  %v4212 = vmul.f32 %v4161, %v4184
  %v4213 = vmul.f32 %v4160, %v4188
  %v4214 = vmul.f32 %v4159, %v4192
  %v4215 = vmul.f32 %v4158, %v4196
  %v4216 = vmul.f32 %v4157, %v4200
  %v4225 = vrot.slane %v4209, 4
  %v4226 = vrot.slane %v4210, 4
  %v4227 = vrot.slane %v4211, 4
  %v4228 = vrot.slane %v4212, 4
  %v4229 = vrot.slane %v4213, 4
  %v4230 = vrot.slane %v4214, 4
  %v4231 = vrot.slane %v4215, 4
  %v4232 = vrot.slane %v4216, 4
  %4241 = vst [vmem:[#allocation2 + $0x140] sm:$0xf0] %v4225
  %4242 = vst [vmem:[#allocation2 + $0x148] sm:$0xf0] %v4226
  %4243 = vst [vmem:[#allocation2 + $0x150] sm:$0xf0] %v4227
  %4244 = vst [vmem:[#allocation2 + $0x158] sm:$0xf0] %v4228
  %4245 = vst [vmem:[#allocation2 + $0x160] sm:$0xf0] %v4229
  %4246 = vst [vmem:[#allocation2 + $0x168] sm:$0xf0] %v4230
  %4247 = vst [vmem:[#allocation2 + $0x170] sm:$0xf0] %v4231
  %4248 = vst [vmem:[#allocation2 + $0x178] sm:$0xf0] %v4232
  %4249 = vrot.lane.b32.xlu0 %v3089, 1
  %v4250 = vpop.permute.xlu0 %4249
  %4251 = vrot.lane.b32.xlu0 %v3090, 1
  %v4252 = vpop.permute.xlu0 %4251
  %4253 = vrot.lane.b32.xlu0 %v3091, 1
  %v4254 = vpop.permute.xlu0 %4253
  %4255 = vrot.lane.b32.xlu0 %v3092, 1
  %v4256 = vpop.permute.xlu0 %4255
  %4257 = vrot.lane.b32.xlu0 %v3093, 1
  %v4258 = vpop.permute.xlu0 %4257
  %4259 = vrot.lane.b32.xlu0 %v3094, 1
  %v4260 = vpop.permute.xlu0 %4259
  %4261 = vrot.lane.b32.xlu0 %v3095, 1
  %v4262 = vpop.permute.xlu0 %4261
  %4263 = vrot.lane.b32.xlu0 %v3096, 1
  %v4264 = vpop.permute.xlu0 %4263
  %v4265 = vsel %vm1241, %v4262, %v4264
  %v4266 = vsel %vm1241, %v4260, %v4262
  %v4267 = vsel %vm1241, %v4258, %v4260
  %v4268 = vsel %vm1241, %v4256, %v4258
  %v4269 = vsel %vm1241, %v4254, %v4256
  %v4270 = vsel %vm1241, %v4252, %v4254
  %v4271 = vsel %vm1241, %v4250, %v4252
  %v4272 = vsel %vm1241, %v4264, %v4250
  %v4273 = vld [vmem:[%s1250] ss:$8 sm:$0xf]
  %v4274 = vld [vmem:[%s1250] ss:$8 sm:$0xf0]
  %v4275 = vor.u32 %v4273, %v4274
  %v4277 = vlaneseq
  %v4278 = vshrl.u32 %v4277, 7
  %v4279 = vsub.s32 0, %v4278
  %v4280 = vrot.slane %v4275, %v4279
  %v4281 = vlaneseq
  %v4282 = vshrl.u32 %v4281, 7
  %v4283 = vsub.s32 1, %v4282
  %v4284 = vrot.slane %v4275, %v4283
  %v4285 = vlaneseq
  %v4286 = vshrl.u32 %v4285, 7
  %v4287 = vsub.s32 2, %v4286
  %v4288 = vrot.slane %v4275, %v4287
  %v4289 = vlaneseq
  %v4290 = vshrl.u32 %v4289, 7
  %v4291 = vsub.s32 3, %v4290
  %v4292 = vrot.slane %v4275, %v4291
  %v4293 = vlaneseq
  %v4294 = vshrl.u32 %v4293, 7
  %v4295 = vsub.s32 4, %v4294
  %v4296 = vrot.slane %v4275, %v4295
  %v4297 = vlaneseq
  %v4298 = vshrl.u32 %v4297, 7
  %v4299 = vsub.s32 5, %v4298
  %v4300 = vrot.slane %v4275, %v4299
  %v4301 = vlaneseq
  %v4302 = vshrl.u32 %v4301, 7
  %v4303 = vsub.s32 6, %v4302
  %v4304 = vrot.slane %v4275, %v4303
  %v4305 = vlaneseq
  %v4306 = vshrl.u32 %v4305, 7
  %v4307 = vsub.s32 7, %v4306
  %v4308 = vrot.slane %v4275, %v4307
  %v4317 = vmul.f32 %v4272, %v4280
  %v4318 = vmul.f32 %v4271, %v4284
  %v4319 = vmul.f32 %v4270, %v4288
  %v4320 = vmul.f32 %v4269, %v4292
  %v4321 = vmul.f32 %v4268, %v4296
  %v4322 = vmul.f32 %v4267, %v4300
  %v4323 = vmul.f32 %v4266, %v4304
  %v4324 = vmul.f32 %v4265, %v4308
  %4325 = vst [vmem:[#allocation2 + $0x180] sm:$0xf] %v4317
  %4326 = vst [vmem:[#allocation2 + $0x188] sm:$0xf] %v4318
  %4327 = vst [vmem:[#allocation2 + $0x190] sm:$0xf] %v4319
  %4328 = vst [vmem:[#allocation2 + $0x198] sm:$0xf] %v4320
  %4329 = vst [vmem:[#allocation2 + $0x1a0] sm:$0xf] %v4321
  %4330 = vst [vmem:[#allocation2 + $0x1a8] sm:$0xf] %v4322
  %4331 = vst [vmem:[#allocation2 + $0x1b0] sm:$0xf] %v4323
  %4332 = vst [vmem:[#allocation2 + $0x1b8] sm:$0xf] %v4324
  %v4341 = vrot.slane %v3089, 4
  %v4342 = vrot.slane %v3090, 4
  %v4343 = vrot.slane %v3091, 4
  %v4344 = vrot.slane %v3092, 4
  %v4345 = vrot.slane %v3093, 4
  %v4346 = vrot.slane %v3094, 4
  %v4347 = vrot.slane %v3095, 4
  %v4348 = vrot.slane %v3096, 4
  %4357 = vst [vmem:[#allocation2 + $0x180] sm:$0xf0] %v4341
  %4358 = vst [vmem:[#allocation2 + $0x188] sm:$0xf0] %v4342
  %4359 = vst [vmem:[#allocation2 + $0x190] sm:$0xf0] %v4343
  %4360 = vst [vmem:[#allocation2 + $0x198] sm:$0xf0] %v4344
  %4361 = vst [vmem:[#allocation2 + $0x1a0] sm:$0xf0] %v4345
  %4362 = vst [vmem:[#allocation2 + $0x1a8] sm:$0xf0] %v4346
  %4363 = vst [vmem:[#allocation2 + $0x1b0] sm:$0xf0] %v4347
  %4364 = vst [vmem:[#allocation2 + $0x1b8] sm:$0xf0] %v4348
  %4365 = vrot.lane.b32.xlu0 %v3089, 127
  %v4366 = vpop.permute.xlu0 %4365
  %4367 = vrot.lane.b32.xlu0 %v3090, 127
  %v4368 = vpop.permute.xlu0 %4367
  %4369 = vrot.lane.b32.xlu0 %v3091, 127
  %v4370 = vpop.permute.xlu0 %4369
  %4371 = vrot.lane.b32.xlu0 %v3092, 127
  %v4372 = vpop.permute.xlu0 %4371
  %4373 = vrot.lane.b32.xlu0 %v3093, 127
  %v4374 = vpop.permute.xlu0 %4373
  %4375 = vrot.lane.b32.xlu0 %v3094, 127
  %v4376 = vpop.permute.xlu0 %4375
  %4377 = vrot.lane.b32.xlu0 %v3095, 127
  %v4378 = vpop.permute.xlu0 %4377
  %4379 = vrot.lane.b32.xlu0 %v3096, 127
  %v4380 = vpop.permute.xlu0 %4379
  %v4381 = vsel %vm1343, %v4378, %v4380
  %v4382 = vsel %vm1343, %v4376, %v4378
  %v4383 = vsel %vm1343, %v4374, %v4376
  %v4384 = vsel %vm1343, %v4372, %v4374
  %v4385 = vsel %vm1343, %v4370, %v4372
  %v4386 = vsel %vm1343, %v4368, %v4370
  %v4387 = vsel %vm1343, %v4366, %v4368
  %v4388 = vsel %vm1343, %v4380, %v4366
  %v4389 = vld [vmem:[%s1352] ss:$8 sm:$0xf]
  %v4390 = vld [vmem:[%s1352] ss:$8 sm:$0xf0]
  %v4391 = vor.u32 %v4389, %v4390
  %v4393 = vlaneseq
  %v4394 = vshrl.u32 %v4393, 7
  %v4395 = vsub.s32 0, %v4394
  %v4396 = vrot.slane %v4391, %v4395
  %v4397 = vlaneseq
  %v4398 = vshrl.u32 %v4397, 7
  %v4399 = vsub.s32 1, %v4398
  %v4400 = vrot.slane %v4391, %v4399
  %v4401 = vlaneseq
  %v4402 = vshrl.u32 %v4401, 7
  %v4403 = vsub.s32 2, %v4402
  %v4404 = vrot.slane %v4391, %v4403
  %v4405 = vlaneseq
  %v4406 = vshrl.u32 %v4405, 7
  %v4407 = vsub.s32 3, %v4406
  %v4408 = vrot.slane %v4391, %v4407
  %v4409 = vlaneseq
  %v4410 = vshrl.u32 %v4409, 7
  %v4411 = vsub.s32 4, %v4410
  %v4412 = vrot.slane %v4391, %v4411
  %v4413 = vlaneseq
  %v4414 = vshrl.u32 %v4413, 7
  %v4415 = vsub.s32 5, %v4414
  %v4416 = vrot.slane %v4391, %v4415
  %v4417 = vlaneseq
  %v4418 = vshrl.u32 %v4417, 7
  %v4419 = vsub.s32 6, %v4418
  %v4420 = vrot.slane %v4391, %v4419
  %v4421 = vlaneseq
  %v4422 = vshrl.u32 %v4421, 7
  %v4423 = vsub.s32 7, %v4422
  %v4424 = vrot.slane %v4391, %v4423
  %v4433 = vmul.f32 %v4387, %v4396
  %v4434 = vmul.f32 %v4386, %v4400
  %v4435 = vmul.f32 %v4385, %v4404
  %v4436 = vmul.f32 %v4384, %v4408
  %v4437 = vmul.f32 %v4383, %v4412
  %v4438 = vmul.f32 %v4382, %v4416
  %v4439 = vmul.f32 %v4381, %v4420
  %v4440 = vmul.f32 %v4388, %v4424
  %4441 = vst [vmem:[#allocation2 + $0x1c0] sm:$0xf] %v4433
  %4442 = vst [vmem:[#allocation2 + $0x1c8] sm:$0xf] %v4434
  %4443 = vst [vmem:[#allocation2 + $0x1d0] sm:$0xf] %v4435
  %4444 = vst [vmem:[#allocation2 + $0x1d8] sm:$0xf] %v4436
  %4445 = vst [vmem:[#allocation2 + $0x1e0] sm:$0xf] %v4437
  %4446 = vst [vmem:[#allocation2 + $0x1e8] sm:$0xf] %v4438
  %4447 = vst [vmem:[#allocation2 + $0x1f0] sm:$0xf] %v4439
  %4448 = vst [vmem:[#allocation2 + $0x1f8] sm:$0xf] %v4440
  %4449 = vrot.lane.b32.xlu0 %v3089, 121
  %v4450 = vpop.permute.xlu0 %4449
  %4451 = vrot.lane.b32.xlu0 %v3090, 121
  %v4452 = vpop.permute.xlu0 %4451
  %4453 = vrot.lane.b32.xlu0 %v3091, 121
  %v4454 = vpop.permute.xlu0 %4453
  %4455 = vrot.lane.b32.xlu0 %v3092, 121
  %v4456 = vpop.permute.xlu0 %4455
  %4457 = vrot.lane.b32.xlu0 %v3093, 121
  %v4458 = vpop.permute.xlu0 %4457
  %4459 = vrot.lane.b32.xlu0 %v3094, 121
  %v4460 = vpop.permute.xlu0 %4459
  %4461 = vrot.lane.b32.xlu0 %v3095, 121
  %v4462 = vpop.permute.xlu0 %4461
  %4463 = vrot.lane.b32.xlu0 %v3096, 121
  %v4464 = vpop.permute.xlu0 %4463
  %v4465 = vsel %vm1429, %v4462, %v4464
  %v4466 = vsel %vm1429, %v4460, %v4462
  %v4467 = vsel %vm1429, %v4458, %v4460
  %v4468 = vsel %vm1429, %v4456, %v4458
  %v4469 = vsel %vm1429, %v4454, %v4456
  %v4470 = vsel %vm1429, %v4452, %v4454
  %v4471 = vsel %vm1429, %v4450, %v4452
  %v4472 = vsel %vm1429, %v4464, %v4450
  %v4473 = vld [vmem:[%s1438] ss:$8 sm:$0xf]
  %v4474 = vld [vmem:[%s1438] ss:$8 sm:$0xf0]
  %v4475 = vor.u32 %v4473, %v4474
  %v4477 = vlaneseq
  %v4478 = vshrl.u32 %v4477, 7
  %v4479 = vsub.s32 0, %v4478
  %v4480 = vrot.slane %v4475, %v4479
  %v4481 = vlaneseq
  %v4482 = vshrl.u32 %v4481, 7
  %v4483 = vsub.s32 1, %v4482
  %v4484 = vrot.slane %v4475, %v4483
  %v4485 = vlaneseq
  %v4486 = vshrl.u32 %v4485, 7
  %v4487 = vsub.s32 2, %v4486
  %v4488 = vrot.slane %v4475, %v4487
  %v4489 = vlaneseq
  %v4490 = vshrl.u32 %v4489, 7
  %v4491 = vsub.s32 3, %v4490
  %v4492 = vrot.slane %v4475, %v4491
  %v4493 = vlaneseq
  %v4494 = vshrl.u32 %v4493, 7
  %v4495 = vsub.s32 4, %v4494
  %v4496 = vrot.slane %v4475, %v4495
  %v4497 = vlaneseq
  %v4498 = vshrl.u32 %v4497, 7
  %v4499 = vsub.s32 5, %v4498
  %v4500 = vrot.slane %v4475, %v4499
  %v4501 = vlaneseq
  %v4502 = vshrl.u32 %v4501, 7
  %v4503 = vsub.s32 6, %v4502
  %v4504 = vrot.slane %v4475, %v4503
  %v4505 = vlaneseq
  %v4506 = vshrl.u32 %v4505, 7
  %v4507 = vsub.s32 7, %v4506
  %v4508 = vrot.slane %v4475, %v4507
  %v4517 = vmul.f32 %v4471, %v4480
  %v4518 = vmul.f32 %v4470, %v4484
  %v4519 = vmul.f32 %v4469, %v4488
  %v4520 = vmul.f32 %v4468, %v4492
  %v4521 = vmul.f32 %v4467, %v4496
  %v4522 = vmul.f32 %v4466, %v4500
  %v4523 = vmul.f32 %v4465, %v4504
  %v4524 = vmul.f32 %v4472, %v4508
  %v4533 = vrot.slane %v4517, 4
  %v4534 = vrot.slane %v4518, 4
  %v4535 = vrot.slane %v4519, 4
  %v4536 = vrot.slane %v4520, 4
  %v4537 = vrot.slane %v4521, 4
  %v4538 = vrot.slane %v4522, 4
  %v4539 = vrot.slane %v4523, 4
  %v4540 = vrot.slane %v4524, 4
  %4549 = vst [vmem:[#allocation2 + $0x1c0] sm:$0xf0] %v4533
  %4550 = vst [vmem:[#allocation2 + $0x1c8] sm:$0xf0] %v4534
  %4551 = vst [vmem:[#allocation2 + $0x1d0] sm:$0xf0] %v4535
  %4552 = vst [vmem:[#allocation2 + $0x1d8] sm:$0xf0] %v4536
  %4553 = vst [vmem:[#allocation2 + $0x1e0] sm:$0xf0] %v4537
  %4554 = vst [vmem:[#allocation2 + $0x1e8] sm:$0xf0] %v4538
  %4555 = vst [vmem:[#allocation2 + $0x1f0] sm:$0xf0] %v4539
  %4556 = vst [vmem:[#allocation2 + $0x1f8] sm:$0xf0] %v4540
  %4557 = vrot.lane.b32.xlu0 %v3089, 120
  %v4558 = vpop.permute.xlu0 %4557
  %4559 = vrot.lane.b32.xlu0 %v3090, 120
  %v4560 = vpop.permute.xlu0 %4559
  %4561 = vrot.lane.b32.xlu0 %v3091, 120
  %v4562 = vpop.permute.xlu0 %4561
  %4563 = vrot.lane.b32.xlu0 %v3092, 120
  %v4564 = vpop.permute.xlu0 %4563
  %4565 = vrot.lane.b32.xlu0 %v3093, 120
  %v4566 = vpop.permute.xlu0 %4565
  %4567 = vrot.lane.b32.xlu0 %v3094, 120
  %v4568 = vpop.permute.xlu0 %4567
  %4569 = vrot.lane.b32.xlu0 %v3095, 120
  %v4570 = vpop.permute.xlu0 %4569
  %4571 = vrot.lane.b32.xlu0 %v3096, 120
  %v4572 = vpop.permute.xlu0 %4571
  %v4573 = vsel %vm1539, %v4570, %v4572
  %v4574 = vsel %vm1539, %v4568, %v4570
  %v4575 = vsel %vm1539, %v4566, %v4568
  %v4576 = vsel %vm1539, %v4564, %v4566
  %v4577 = vsel %vm1539, %v4562, %v4564
  %v4578 = vsel %vm1539, %v4560, %v4562
  %v4579 = vsel %vm1539, %v4558, %v4560
  %v4580 = vsel %vm1539, %v4572, %v4558
  %v4581 = vld [vmem:[%s1548] ss:$8 sm:$0xf]
  %v4582 = vld [vmem:[%s1548] ss:$8 sm:$0xf0]
  %v4583 = vor.u32 %v4581, %v4582
  %v4585 = vlaneseq
  %v4586 = vshrl.u32 %v4585, 7
  %v4587 = vsub.s32 0, %v4586
  %v4588 = vrot.slane %v4583, %v4587
  %v4589 = vlaneseq
  %v4590 = vshrl.u32 %v4589, 7
  %v4591 = vsub.s32 1, %v4590
  %v4592 = vrot.slane %v4583, %v4591
  %v4593 = vlaneseq
  %v4594 = vshrl.u32 %v4593, 7
  %v4595 = vsub.s32 2, %v4594
  %v4596 = vrot.slane %v4583, %v4595
  %v4597 = vlaneseq
  %v4598 = vshrl.u32 %v4597, 7
  %v4599 = vsub.s32 3, %v4598
  %v4600 = vrot.slane %v4583, %v4599
  %v4601 = vlaneseq
  %v4602 = vshrl.u32 %v4601, 7
  %v4603 = vsub.s32 4, %v4602
  %v4604 = vrot.slane %v4583, %v4603
  %v4605 = vlaneseq
  %v4606 = vshrl.u32 %v4605, 7
  %v4607 = vsub.s32 5, %v4606
  %v4608 = vrot.slane %v4583, %v4607
  %v4609 = vlaneseq
  %v4610 = vshrl.u32 %v4609, 7
  %v4611 = vsub.s32 6, %v4610
  %v4612 = vrot.slane %v4583, %v4611
  %v4613 = vlaneseq
  %v4614 = vshrl.u32 %v4613, 7
  %v4615 = vsub.s32 7, %v4614
  %v4616 = vrot.slane %v4583, %v4615
  %v4625 = vmul.f32 %v4579, %v4588
  %v4626 = vmul.f32 %v4578, %v4592
  %v4627 = vmul.f32 %v4577, %v4596
  %v4628 = vmul.f32 %v4576, %v4600
  %v4629 = vmul.f32 %v4575, %v4604
  %v4630 = vmul.f32 %v4574, %v4608
  %v4631 = vmul.f32 %v4573, %v4612
  %v4632 = vmul.f32 %v4580, %v4616
  %4633 = vst [vmem:[#allocation2 + $0x200] sm:$0xf] %v4625
  %4634 = vst [vmem:[#allocation2 + $0x208] sm:$0xf] %v4626
  %4635 = vst [vmem:[#allocation2 + $0x210] sm:$0xf] %v4627
  %4636 = vst [vmem:[#allocation2 + $0x218] sm:$0xf] %v4628
  %4637 = vst [vmem:[#allocation2 + $0x220] sm:$0xf] %v4629
  %4638 = vst [vmem:[#allocation2 + $0x228] sm:$0xf] %v4630
  %4639 = vst [vmem:[#allocation2 + $0x230] sm:$0xf] %v4631
  %4640 = vst [vmem:[#allocation2 + $0x238] sm:$0xf] %v4632
  %4641 = vrot.lane.b32.xlu0 %v3089, 119
  %v4642 = vpop.permute.xlu0 %4641
  %4643 = vrot.lane.b32.xlu0 %v3090, 119
  %v4644 = vpop.permute.xlu0 %4643
  %4645 = vrot.lane.b32.xlu0 %v3091, 119
  %v4646 = vpop.permute.xlu0 %4645
  %4647 = vrot.lane.b32.xlu0 %v3092, 119
  %v4648 = vpop.permute.xlu0 %4647
  %4649 = vrot.lane.b32.xlu0 %v3093, 119
  %v4650 = vpop.permute.xlu0 %4649
  %4651 = vrot.lane.b32.xlu0 %v3094, 119
  %v4652 = vpop.permute.xlu0 %4651
  %4653 = vrot.lane.b32.xlu0 %v3095, 119
  %v4654 = vpop.permute.xlu0 %4653
  %4655 = vrot.lane.b32.xlu0 %v3096, 119
  %v4656 = vpop.permute.xlu0 %4655
  %v4657 = vsel %vm1625, %v4654, %v4656
  %v4658 = vsel %vm1625, %v4652, %v4654
  %v4659 = vsel %vm1625, %v4650, %v4652
  %v4660 = vsel %vm1625, %v4648, %v4650
  %v4661 = vsel %vm1625, %v4646, %v4648
  %v4662 = vsel %vm1625, %v4644, %v4646
  %v4663 = vsel %vm1625, %v4642, %v4644
  %v4664 = vsel %vm1625, %v4656, %v4642
  %v4665 = vld [vmem:[%s1634] ss:$8 sm:$0xf]
  %v4666 = vld [vmem:[%s1634] ss:$8 sm:$0xf0]
  %v4667 = vor.u32 %v4665, %v4666
  %v4669 = vlaneseq
  %v4670 = vshrl.u32 %v4669, 7
  %v4671 = vsub.s32 0, %v4670
  %v4672 = vrot.slane %v4667, %v4671
  %v4673 = vlaneseq
  %v4674 = vshrl.u32 %v4673, 7
  %v4675 = vsub.s32 1, %v4674
  %v4676 = vrot.slane %v4667, %v4675
  %v4677 = vlaneseq
  %v4678 = vshrl.u32 %v4677, 7
  %v4679 = vsub.s32 2, %v4678
  %v4680 = vrot.slane %v4667, %v4679
  %v4681 = vlaneseq
  %v4682 = vshrl.u32 %v4681, 7
  %v4683 = vsub.s32 3, %v4682
  %v4684 = vrot.slane %v4667, %v4683
  %v4685 = vlaneseq
  %v4686 = vshrl.u32 %v4685, 7
  %v4687 = vsub.s32 4, %v4686
  %v4688 = vrot.slane %v4667, %v4687
  %v4689 = vlaneseq
  %v4690 = vshrl.u32 %v4689, 7
  %v4691 = vsub.s32 5, %v4690
  %v4692 = vrot.slane %v4667, %v4691
  %v4693 = vlaneseq
  %v4694 = vshrl.u32 %v4693, 7
  %v4695 = vsub.s32 6, %v4694
  %v4696 = vrot.slane %v4667, %v4695
  %v4697 = vlaneseq
  %v4698 = vshrl.u32 %v4697, 7
  %v4699 = vsub.s32 7, %v4698
  %v4700 = vrot.slane %v4667, %v4699
  %v4709 = vmul.f32 %v4663, %v4672
  %v4710 = vmul.f32 %v4662, %v4676
  %v4711 = vmul.f32 %v4661, %v4680
  %v4712 = vmul.f32 %v4660, %v4684
  %v4713 = vmul.f32 %v4659, %v4688
  %v4714 = vmul.f32 %v4658, %v4692
  %v4715 = vmul.f32 %v4657, %v4696
  %v4716 = vmul.f32 %v4664, %v4700
  %v4725 = vrot.slane %v4709, 4
  %v4726 = vrot.slane %v4710, 4
  %v4727 = vrot.slane %v4711, 4
  %v4728 = vrot.slane %v4712, 4
  %v4729 = vrot.slane %v4713, 4
  %v4730 = vrot.slane %v4714, 4
  %v4731 = vrot.slane %v4715, 4
  %v4732 = vrot.slane %v4716, 4
  %4741 = vst [vmem:[#allocation2 + $0x200] sm:$0xf0] %v4725
  %4742 = vst [vmem:[#allocation2 + $0x208] sm:$0xf0] %v4726
  %4743 = vst [vmem:[#allocation2 + $0x210] sm:$0xf0] %v4727
  %4744 = vst [vmem:[#allocation2 + $0x218] sm:$0xf0] %v4728
  %4745 = vst [vmem:[#allocation2 + $0x220] sm:$0xf0] %v4729
  %4746 = vst [vmem:[#allocation2 + $0x228] sm:$0xf0] %v4730
  %4747 = vst [vmem:[#allocation2 + $0x230] sm:$0xf0] %v4731
  %4748 = vst [vmem:[#allocation2 + $0x238] sm:$0xf0] %v4732
  %v4749 = vld [vmem:[%s1719] ss:$8 sm:$0xf]
  %v4750 = vld [vmem:[%s1719] ss:$8 sm:$0xf0]
  %v4751 = vor.u32 %v4749, %v4750
  %v4753 = vlaneseq
  %v4754 = vshrl.u32 %v4753, 7
  %v4755 = vsub.s32 0, %v4754
  %v4756 = vrot.slane %v4751, %v4755
  %v4757 = vlaneseq
  %v4758 = vshrl.u32 %v4757, 7
  %v4759 = vsub.s32 1, %v4758
  %v4760 = vrot.slane %v4751, %v4759
  %v4761 = vlaneseq
  %v4762 = vshrl.u32 %v4761, 7
  %v4763 = vsub.s32 2, %v4762
  %v4764 = vrot.slane %v4751, %v4763
  %v4765 = vlaneseq
  %v4766 = vshrl.u32 %v4765, 7
  %v4767 = vsub.s32 3, %v4766
  %v4768 = vrot.slane %v4751, %v4767
  %v4769 = vlaneseq
  %v4770 = vshrl.u32 %v4769, 7
  %v4771 = vsub.s32 4, %v4770
  %v4772 = vrot.slane %v4751, %v4771
  %v4773 = vlaneseq
  %v4774 = vshrl.u32 %v4773, 7
  %v4775 = vsub.s32 5, %v4774
  %v4776 = vrot.slane %v4751, %v4775
  %v4777 = vlaneseq
  %v4778 = vshrl.u32 %v4777, 7
  %v4779 = vsub.s32 6, %v4778
  %v4780 = vrot.slane %v4751, %v4779
  %v4781 = vlaneseq
  %v4782 = vshrl.u32 %v4781, 7
  %v4783 = vsub.s32 7, %v4782
  %v4784 = vrot.slane %v4751, %v4783
  %v4793 = vmul.f32 %v3119, %v4756
  %v4794 = vmul.f32 %v3118, %v4760
  %v4795 = vmul.f32 %v3117, %v4764
  %v4796 = vmul.f32 %v3116, %v4768
  %v4797 = vmul.f32 %v3115, %v4772
  %v4798 = vmul.f32 %v3114, %v4776
  %v4799 = vmul.f32 %v3113, %v4780
  %v4800 = vmul.f32 %v3120, %v4784
  %4801 = vst [vmem:[#allocation2 + $0x240] sm:$0xf] %v4793
  %4802 = vst [vmem:[#allocation2 + $0x248] sm:$0xf] %v4794
  %4803 = vst [vmem:[#allocation2 + $0x250] sm:$0xf] %v4795
  %4804 = vst [vmem:[#allocation2 + $0x258] sm:$0xf] %v4796
  %4805 = vst [vmem:[#allocation2 + $0x260] sm:$0xf] %v4797
  %4806 = vst [vmem:[#allocation2 + $0x268] sm:$0xf] %v4798
  %4807 = vst [vmem:[#allocation2 + $0x270] sm:$0xf] %v4799
  %4808 = vst [vmem:[#allocation2 + $0x278] sm:$0xf] %v4800
  %v4809 = vld [vmem:[%s1780] ss:$8 sm:$0xf]
  %v4810 = vld [vmem:[%s1780] ss:$8 sm:$0xf0]
  %v4811 = vor.u32 %v4809, %v4810
  %v4813 = vlaneseq
  %v4814 = vshrl.u32 %v4813, 7
  %v4815 = vsub.s32 0, %v4814
  %v4816 = vrot.slane %v4811, %v4815
  %v4817 = vlaneseq
  %v4818 = vshrl.u32 %v4817, 7
  %v4819 = vsub.s32 1, %v4818
  %v4820 = vrot.slane %v4811, %v4819
  %v4821 = vlaneseq
  %v4822 = vshrl.u32 %v4821, 7
  %v4823 = vsub.s32 2, %v4822
  %v4824 = vrot.slane %v4811, %v4823
  %v4825 = vlaneseq
  %v4826 = vshrl.u32 %v4825, 7
  %v4827 = vsub.s32 3, %v4826
  %v4828 = vrot.slane %v4811, %v4827
  %v4829 = vlaneseq
  %v4830 = vshrl.u32 %v4829, 7
  %v4831 = vsub.s32 4, %v4830
  %v4832 = vrot.slane %v4811, %v4831
  %v4833 = vlaneseq
  %v4834 = vshrl.u32 %v4833, 7
  %v4835 = vsub.s32 5, %v4834
  %v4836 = vrot.slane %v4811, %v4835
  %v4837 = vlaneseq
  %v4838 = vshrl.u32 %v4837, 7
  %v4839 = vsub.s32 6, %v4838
  %v4840 = vrot.slane %v4811, %v4839
  %v4841 = vlaneseq
  %v4842 = vshrl.u32 %v4841, 7
  %v4843 = vsub.s32 7, %v4842
  %v4844 = vrot.slane %v4811, %v4843
  %v4853 = vmul.f32 %v3203, %v4816
  %v4854 = vmul.f32 %v3202, %v4820
  %v4855 = vmul.f32 %v3201, %v4824
  %v4856 = vmul.f32 %v3200, %v4828
  %v4857 = vmul.f32 %v3199, %v4832
  %v4858 = vmul.f32 %v3198, %v4836
  %v4859 = vmul.f32 %v3197, %v4840
  %v4860 = vmul.f32 %v3204, %v4844
  %v4869 = vrot.slane %v4853, 4
  %v4870 = vrot.slane %v4854, 4
  %v4871 = vrot.slane %v4855, 4
  %v4872 = vrot.slane %v4856, 4
  %v4873 = vrot.slane %v4857, 4
  %v4874 = vrot.slane %v4858, 4
  %v4875 = vrot.slane %v4859, 4
  %v4876 = vrot.slane %v4860, 4
  %4885 = vst [vmem:[#allocation2 + $0x240] sm:$0xf0] %v4869
  %4886 = vst [vmem:[#allocation2 + $0x248] sm:$0xf0] %v4870
  %4887 = vst [vmem:[#allocation2 + $0x250] sm:$0xf0] %v4871
  %4888 = vst [vmem:[#allocation2 + $0x258] sm:$0xf0] %v4872
  %4889 = vst [vmem:[#allocation2 + $0x260] sm:$0xf0] %v4873
  %4890 = vst [vmem:[#allocation2 + $0x268] sm:$0xf0] %v4874
  %4891 = vst [vmem:[#allocation2 + $0x270] sm:$0xf0] %v4875
  %4892 = vst [vmem:[#allocation2 + $0x278] sm:$0xf0] %v4876
  %v4893 = vld [vmem:[%s1865] ss:$8 sm:$0xf]
  %v4894 = vld [vmem:[%s1865] ss:$8 sm:$0xf0]
  %v4895 = vor.u32 %v4893, %v4894
  %v4897 = vlaneseq
  %v4898 = vshrl.u32 %v4897, 7
  %v4899 = vsub.s32 0, %v4898
  %v4900 = vrot.slane %v4895, %v4899
  %v4901 = vlaneseq
  %v4902 = vshrl.u32 %v4901, 7
  %v4903 = vsub.s32 1, %v4902
  %v4904 = vrot.slane %v4895, %v4903
  %v4905 = vlaneseq
  %v4906 = vshrl.u32 %v4905, 7
  %v4907 = vsub.s32 2, %v4906
  %v4908 = vrot.slane %v4895, %v4907
  %v4909 = vlaneseq
  %v4910 = vshrl.u32 %v4909, 7
  %v4911 = vsub.s32 3, %v4910
  %v4912 = vrot.slane %v4895, %v4911
  %v4913 = vlaneseq
  %v4914 = vshrl.u32 %v4913, 7
  %v4915 = vsub.s32 4, %v4914
  %v4916 = vrot.slane %v4895, %v4915
  %v4917 = vlaneseq
  %v4918 = vshrl.u32 %v4917, 7
  %v4919 = vsub.s32 5, %v4918
  %v4920 = vrot.slane %v4895, %v4919
  %v4921 = vlaneseq
  %v4922 = vshrl.u32 %v4921, 7
  %v4923 = vsub.s32 6, %v4922
  %v4924 = vrot.slane %v4895, %v4923
  %v4925 = vlaneseq
  %v4926 = vshrl.u32 %v4925, 7
  %v4927 = vsub.s32 7, %v4926
  %v4928 = vrot.slane %v4895, %v4927
  %v4937 = vmul.f32 %v3311, %v4900
  %v4938 = vmul.f32 %v3310, %v4904
  %v4939 = vmul.f32 %v3309, %v4908
  %v4940 = vmul.f32 %v3308, %v4912
  %v4941 = vmul.f32 %v3307, %v4916
  %v4942 = vmul.f32 %v3306, %v4920
  %v4943 = vmul.f32 %v3305, %v4924
  %v4944 = vmul.f32 %v3312, %v4928
  %4945 = vst [vmem:[#allocation2 + $0x280] sm:$0xf] %v4937
  %4946 = vst [vmem:[#allocation2 + $0x288] sm:$0xf] %v4938
  %4947 = vst [vmem:[#allocation2 + $0x290] sm:$0xf] %v4939
  %4948 = vst [vmem:[#allocation2 + $0x298] sm:$0xf] %v4940
  %4949 = vst [vmem:[#allocation2 + $0x2a0] sm:$0xf] %v4941
  %4950 = vst [vmem:[#allocation2 + $0x2a8] sm:$0xf] %v4942
  %4951 = vst [vmem:[#allocation2 + $0x2b0] sm:$0xf] %v4943
  %4952 = vst [vmem:[#allocation2 + $0x2b8] sm:$0xf] %v4944
  %v4953 = vld [vmem:[%s1926] ss:$8 sm:$0xf]
  %v4954 = vld [vmem:[%s1926] ss:$8 sm:$0xf0]
  %v4955 = vor.u32 %v4953, %v4954
  %v4957 = vlaneseq
  %v4958 = vshrl.u32 %v4957, 7
  %v4959 = vsub.s32 0, %v4958
  %v4960 = vrot.slane %v4955, %v4959
  %v4961 = vlaneseq
  %v4962 = vshrl.u32 %v4961, 7
  %v4963 = vsub.s32 1, %v4962
  %v4964 = vrot.slane %v4955, %v4963
  %v4965 = vlaneseq
  %v4966 = vshrl.u32 %v4965, 7
  %v4967 = vsub.s32 2, %v4966
  %v4968 = vrot.slane %v4955, %v4967
  %v4969 = vlaneseq
  %v4970 = vshrl.u32 %v4969, 7
  %v4971 = vsub.s32 3, %v4970
  %v4972 = vrot.slane %v4955, %v4971
  %v4973 = vlaneseq
  %v4974 = vshrl.u32 %v4973, 7
  %v4975 = vsub.s32 4, %v4974
  %v4976 = vrot.slane %v4955, %v4975
  %v4977 = vlaneseq
  %v4978 = vshrl.u32 %v4977, 7
  %v4979 = vsub.s32 5, %v4978
  %v4980 = vrot.slane %v4955, %v4979
  %v4981 = vlaneseq
  %v4982 = vshrl.u32 %v4981, 7
  %v4983 = vsub.s32 6, %v4982
  %v4984 = vrot.slane %v4955, %v4983
  %v4985 = vlaneseq
  %v4986 = vshrl.u32 %v4985, 7
  %v4987 = vsub.s32 7, %v4986
  %v4988 = vrot.slane %v4955, %v4987
  %v4997 = vmul.f32 %v3395, %v4960
  %v4998 = vmul.f32 %v3394, %v4964
  %v4999 = vmul.f32 %v3393, %v4968
  %v5000 = vmul.f32 %v3392, %v4972
  %v5001 = vmul.f32 %v3391, %v4976
  %v5002 = vmul.f32 %v3390, %v4980
  %v5003 = vmul.f32 %v3389, %v4984
  %v5004 = vmul.f32 %v3396, %v4988
  %v5013 = vrot.slane %v4997, 4
  %v5014 = vrot.slane %v4998, 4
  %v5015 = vrot.slane %v4999, 4
  %v5016 = vrot.slane %v5000, 4
  %v5017 = vrot.slane %v5001, 4
  %v5018 = vrot.slane %v5002, 4
  %v5019 = vrot.slane %v5003, 4
  %v5020 = vrot.slane %v5004, 4
  %5029 = vst [vmem:[#allocation2 + $0x280] sm:$0xf0] %v5013
  %5030 = vst [vmem:[#allocation2 + $0x288] sm:$0xf0] %v5014
  %5031 = vst [vmem:[#allocation2 + $0x290] sm:$0xf0] %v5015
  %5032 = vst [vmem:[#allocation2 + $0x298] sm:$0xf0] %v5016
  %5033 = vst [vmem:[#allocation2 + $0x2a0] sm:$0xf0] %v5017
  %5034 = vst [vmem:[#allocation2 + $0x2a8] sm:$0xf0] %v5018
  %5035 = vst [vmem:[#allocation2 + $0x2b0] sm:$0xf0] %v5019
  %5036 = vst [vmem:[#allocation2 + $0x2b8] sm:$0xf0] %v5020
  %v5037 = vld [vmem:[%s2011] ss:$8 sm:$0xf]
  %v5038 = vld [vmem:[%s2011] ss:$8 sm:$0xf0]
  %v5039 = vor.u32 %v5037, %v5038
  %v5041 = vlaneseq
  %v5042 = vshrl.u32 %v5041, 7
  %v5043 = vsub.s32 0, %v5042
  %v5044 = vrot.slane %v5039, %v5043
  %v5045 = vlaneseq
  %v5046 = vshrl.u32 %v5045, 7
  %v5047 = vsub.s32 1, %v5046
  %v5048 = vrot.slane %v5039, %v5047
  %v5049 = vlaneseq
  %v5050 = vshrl.u32 %v5049, 7
  %v5051 = vsub.s32 2, %v5050
  %v5052 = vrot.slane %v5039, %v5051
  %v5053 = vlaneseq
  %v5054 = vshrl.u32 %v5053, 7
  %v5055 = vsub.s32 3, %v5054
  %v5056 = vrot.slane %v5039, %v5055
  %v5057 = vlaneseq
  %v5058 = vshrl.u32 %v5057, 7
  %v5059 = vsub.s32 4, %v5058
  %v5060 = vrot.slane %v5039, %v5059
  %v5061 = vlaneseq
  %v5062 = vshrl.u32 %v5061, 7
  %v5063 = vsub.s32 5, %v5062
  %v5064 = vrot.slane %v5039, %v5063
  %v5065 = vlaneseq
  %v5066 = vshrl.u32 %v5065, 7
  %v5067 = vsub.s32 6, %v5066
  %v5068 = vrot.slane %v5039, %v5067
  %v5069 = vlaneseq
  %v5070 = vshrl.u32 %v5069, 7
  %v5071 = vsub.s32 7, %v5070
  %v5072 = vrot.slane %v5039, %v5071
  %v5081 = vmul.f32 %v3503, %v5044
  %v5082 = vmul.f32 %v3502, %v5048
  %v5083 = vmul.f32 %v3501, %v5052
  %v5084 = vmul.f32 %v3500, %v5056
  %v5085 = vmul.f32 %v3499, %v5060
  %v5086 = vmul.f32 %v3498, %v5064
  %v5087 = vmul.f32 %v3497, %v5068
  %v5088 = vmul.f32 %v3504, %v5072
  %5089 = vst [vmem:[#allocation2 + $0x2c0] sm:$0xf] %v5081
  %5090 = vst [vmem:[#allocation2 + $0x2c8] sm:$0xf] %v5082
  %5091 = vst [vmem:[#allocation2 + $0x2d0] sm:$0xf] %v5083
  %5092 = vst [vmem:[#allocation2 + $0x2d8] sm:$0xf] %v5084
  %5093 = vst [vmem:[#allocation2 + $0x2e0] sm:$0xf] %v5085
  %5094 = vst [vmem:[#allocation2 + $0x2e8] sm:$0xf] %v5086
  %5095 = vst [vmem:[#allocation2 + $0x2f0] sm:$0xf] %v5087
  %5096 = vst [vmem:[#allocation2 + $0x2f8] sm:$0xf] %v5088
  %v5097 = vld [vmem:[%s2072] ss:$8 sm:$0xf]
  %v5098 = vld [vmem:[%s2072] ss:$8 sm:$0xf0]
  %v5099 = vor.u32 %v5097, %v5098
  %v5101 = vlaneseq
  %v5102 = vshrl.u32 %v5101, 7
  %v5103 = vsub.s32 0, %v5102
  %v5104 = vrot.slane %v5099, %v5103
  %v5105 = vlaneseq
  %v5106 = vshrl.u32 %v5105, 7
  %v5107 = vsub.s32 1, %v5106
  %v5108 = vrot.slane %v5099, %v5107
  %v5109 = vlaneseq
  %v5110 = vshrl.u32 %v5109, 7
  %v5111 = vsub.s32 2, %v5110
  %v5112 = vrot.slane %v5099, %v5111
  %v5113 = vlaneseq
  %v5114 = vshrl.u32 %v5113, 7
  %v5115 = vsub.s32 3, %v5114
  %v5116 = vrot.slane %v5099, %v5115
  %v5117 = vlaneseq
  %v5118 = vshrl.u32 %v5117, 7
  %v5119 = vsub.s32 4, %v5118
  %v5120 = vrot.slane %v5099, %v5119
  %v5121 = vlaneseq
  %v5122 = vshrl.u32 %v5121, 7
  %v5123 = vsub.s32 5, %v5122
  %v5124 = vrot.slane %v5099, %v5123
  %v5125 = vlaneseq
  %v5126 = vshrl.u32 %v5125, 7
  %v5127 = vsub.s32 6, %v5126
  %v5128 = vrot.slane %v5099, %v5127
  %v5129 = vlaneseq
  %v5130 = vshrl.u32 %v5129, 7
  %v5131 = vsub.s32 7, %v5130
  %v5132 = vrot.slane %v5099, %v5131
  %v5141 = vmul.f32 %v3587, %v5104
  %v5142 = vmul.f32 %v3586, %v5108
  %v5143 = vmul.f32 %v3585, %v5112
  %v5144 = vmul.f32 %v3584, %v5116
  %v5145 = vmul.f32 %v3583, %v5120
  %v5146 = vmul.f32 %v3582, %v5124
  %v5147 = vmul.f32 %v3581, %v5128
  %v5148 = vmul.f32 %v3588, %v5132
  %v5157 = vrot.slane %v5141, 4
  %v5158 = vrot.slane %v5142, 4
  %v5159 = vrot.slane %v5143, 4
  %v5160 = vrot.slane %v5144, 4
  %v5161 = vrot.slane %v5145, 4
  %v5162 = vrot.slane %v5146, 4
  %v5163 = vrot.slane %v5147, 4
  %v5164 = vrot.slane %v5148, 4
  %5173 = vst [vmem:[#allocation2 + $0x2c0] sm:$0xf0] %v5157
  %5174 = vst [vmem:[#allocation2 + $0x2c8] sm:$0xf0] %v5158
  %5175 = vst [vmem:[#allocation2 + $0x2d0] sm:$0xf0] %v5159
  %5176 = vst [vmem:[#allocation2 + $0x2d8] sm:$0xf0] %v5160
  %5177 = vst [vmem:[#allocation2 + $0x2e0] sm:$0xf0] %v5161
  %5178 = vst [vmem:[#allocation2 + $0x2e8] sm:$0xf0] %v5162
  %5179 = vst [vmem:[#allocation2 + $0x2f0] sm:$0xf0] %v5163
  %5180 = vst [vmem:[#allocation2 + $0x2f8] sm:$0xf0] %v5164
  %v5181 = vld [vmem:[%s2157] ss:$8 sm:$0xf]
  %v5182 = vld [vmem:[%s2157] ss:$8 sm:$0xf0]
  %v5183 = vor.u32 %v5181, %v5182
  %v5185 = vlaneseq
  %v5186 = vshrl.u32 %v5185, 7
  %v5187 = vsub.s32 0, %v5186
  %v5188 = vrot.slane %v5183, %v5187
  %v5189 = vlaneseq
  %v5190 = vshrl.u32 %v5189, 7
  %v5191 = vsub.s32 1, %v5190
  %v5192 = vrot.slane %v5183, %v5191
  %v5193 = vlaneseq
  %v5194 = vshrl.u32 %v5193, 7
  %v5195 = vsub.s32 2, %v5194
  %v5196 = vrot.slane %v5183, %v5195
  %v5197 = vlaneseq
  %v5198 = vshrl.u32 %v5197, 7
  %v5199 = vsub.s32 3, %v5198
  %v5200 = vrot.slane %v5183, %v5199
  %v5201 = vlaneseq
  %v5202 = vshrl.u32 %v5201, 7
  %v5203 = vsub.s32 4, %v5202
  %v5204 = vrot.slane %v5183, %v5203
  %v5205 = vlaneseq
  %v5206 = vshrl.u32 %v5205, 7
  %v5207 = vsub.s32 5, %v5206
  %v5208 = vrot.slane %v5183, %v5207
  %v5209 = vlaneseq
  %v5210 = vshrl.u32 %v5209, 7
  %v5211 = vsub.s32 6, %v5210
  %v5212 = vrot.slane %v5183, %v5211
  %v5213 = vlaneseq
  %v5214 = vshrl.u32 %v5213, 7
  %v5215 = vsub.s32 7, %v5214
  %v5216 = vrot.slane %v5183, %v5215
  %v5225 = vmul.f32 %v3695, %v5188
  %v5226 = vmul.f32 %v3694, %v5192
  %v5227 = vmul.f32 %v3693, %v5196
  %v5228 = vmul.f32 %v3692, %v5200
  %v5229 = vmul.f32 %v3691, %v5204
  %v5230 = vmul.f32 %v3690, %v5208
  %v5231 = vmul.f32 %v3689, %v5212
  %v5232 = vmul.f32 %v3696, %v5216
  %5233 = vst [vmem:[#allocation2 + $0x300] sm:$0xf] %v5225
  %5234 = vst [vmem:[#allocation2 + $0x308] sm:$0xf] %v5226
  %5235 = vst [vmem:[#allocation2 + $0x310] sm:$0xf] %v5227
  %5236 = vst [vmem:[#allocation2 + $0x318] sm:$0xf] %v5228
  %5237 = vst [vmem:[#allocation2 + $0x320] sm:$0xf] %v5229
  %5238 = vst [vmem:[#allocation2 + $0x328] sm:$0xf] %v5230
  %5239 = vst [vmem:[#allocation2 + $0x330] sm:$0xf] %v5231
  %5240 = vst [vmem:[#allocation2 + $0x338] sm:$0xf] %v5232
  %v5241 = vld [vmem:[%s2218] ss:$8 sm:$0xf]
  %v5242 = vld [vmem:[%s2218] ss:$8 sm:$0xf0]
  %v5243 = vor.u32 %v5241, %v5242
  %v5245 = vlaneseq
  %v5246 = vshrl.u32 %v5245, 7
  %v5247 = vsub.s32 0, %v5246
  %v5248 = vrot.slane %v5243, %v5247
  %v5249 = vlaneseq
  %v5250 = vshrl.u32 %v5249, 7
  %v5251 = vsub.s32 1, %v5250
  %v5252 = vrot.slane %v5243, %v5251
  %v5253 = vlaneseq
  %v5254 = vshrl.u32 %v5253, 7
  %v5255 = vsub.s32 2, %v5254
  %v5256 = vrot.slane %v5243, %v5255
  %v5257 = vlaneseq
  %v5258 = vshrl.u32 %v5257, 7
  %v5259 = vsub.s32 3, %v5258
  %v5260 = vrot.slane %v5243, %v5259
  %v5261 = vlaneseq
  %v5262 = vshrl.u32 %v5261, 7
  %v5263 = vsub.s32 4, %v5262
  %v5264 = vrot.slane %v5243, %v5263
  %v5265 = vlaneseq
  %v5266 = vshrl.u32 %v5265, 7
  %v5267 = vsub.s32 5, %v5266
  %v5268 = vrot.slane %v5243, %v5267
  %v5269 = vlaneseq
  %v5270 = vshrl.u32 %v5269, 7
  %v5271 = vsub.s32 6, %v5270
  %v5272 = vrot.slane %v5243, %v5271
  %v5273 = vlaneseq
  %v5274 = vshrl.u32 %v5273, 7
  %v5275 = vsub.s32 7, %v5274
  %v5276 = vrot.slane %v5243, %v5275
  %v5285 = vmul.f32 %v3779, %v5248
  %v5286 = vmul.f32 %v3778, %v5252
  %v5287 = vmul.f32 %v3777, %v5256
  %v5288 = vmul.f32 %v3776, %v5260
  %v5289 = vmul.f32 %v3775, %v5264
  %v5290 = vmul.f32 %v3774, %v5268
  %v5291 = vmul.f32 %v3773, %v5272
  %v5292 = vmul.f32 %v3780, %v5276
  %v5301 = vrot.slane %v5285, 4
  %v5302 = vrot.slane %v5286, 4
  %v5303 = vrot.slane %v5287, 4
  %v5304 = vrot.slane %v5288, 4
  %v5305 = vrot.slane %v5289, 4
  %v5306 = vrot.slane %v5290, 4
  %v5307 = vrot.slane %v5291, 4
  %v5308 = vrot.slane %v5292, 4
  %5317 = vst [vmem:[#allocation2 + $0x300] sm:$0xf0] %v5301
  %5318 = vst [vmem:[#allocation2 + $0x308] sm:$0xf0] %v5302
  %5319 = vst [vmem:[#allocation2 + $0x310] sm:$0xf0] %v5303
  %5320 = vst [vmem:[#allocation2 + $0x318] sm:$0xf0] %v5304
  %5321 = vst [vmem:[#allocation2 + $0x320] sm:$0xf0] %v5305
  %5322 = vst [vmem:[#allocation2 + $0x328] sm:$0xf0] %v5306
  %5323 = vst [vmem:[#allocation2 + $0x330] sm:$0xf0] %v5307
  %5324 = vst [vmem:[#allocation2 + $0x338] sm:$0xf0] %v5308
  %v5325 = vld [vmem:[%s2303] ss:$8 sm:$0xf]
  %v5326 = vld [vmem:[%s2303] ss:$8 sm:$0xf0]
  %v5327 = vor.u32 %v5325, %v5326
  %v5329 = vlaneseq
  %v5330 = vshrl.u32 %v5329, 7
  %v5331 = vsub.s32 0, %v5330
  %v5332 = vrot.slane %v5327, %v5331
  %v5333 = vlaneseq
  %v5334 = vshrl.u32 %v5333, 7
  %v5335 = vsub.s32 1, %v5334
  %v5336 = vrot.slane %v5327, %v5335
  %v5337 = vlaneseq
  %v5338 = vshrl.u32 %v5337, 7
  %v5339 = vsub.s32 2, %v5338
  %v5340 = vrot.slane %v5327, %v5339
  %v5341 = vlaneseq
  %v5342 = vshrl.u32 %v5341, 7
  %v5343 = vsub.s32 3, %v5342
  %v5344 = vrot.slane %v5327, %v5343
  %v5345 = vlaneseq
  %v5346 = vshrl.u32 %v5345, 7
  %v5347 = vsub.s32 4, %v5346
  %v5348 = vrot.slane %v5327, %v5347
  %v5349 = vlaneseq
  %v5350 = vshrl.u32 %v5349, 7
  %v5351 = vsub.s32 5, %v5350
  %v5352 = vrot.slane %v5327, %v5351
  %v5353 = vlaneseq
  %v5354 = vshrl.u32 %v5353, 7
  %v5355 = vsub.s32 6, %v5354
  %v5356 = vrot.slane %v5327, %v5355
  %v5357 = vlaneseq
  %v5358 = vshrl.u32 %v5357, 7
  %v5359 = vsub.s32 7, %v5358
  %v5360 = vrot.slane %v5327, %v5359
  %v5369 = vmul.f32 %v3887, %v5332
  %v5370 = vmul.f32 %v3886, %v5336
  %v5371 = vmul.f32 %v3885, %v5340
  %v5372 = vmul.f32 %v3884, %v5344
  %v5373 = vmul.f32 %v3883, %v5348
  %v5374 = vmul.f32 %v3882, %v5352
  %v5375 = vmul.f32 %v3881, %v5356
  %v5376 = vmul.f32 %v3888, %v5360
  %5377 = vst [vmem:[#allocation2 + $0x340] sm:$0xf] %v5369
  %5378 = vst [vmem:[#allocation2 + $0x348] sm:$0xf] %v5370
  %5379 = vst [vmem:[#allocation2 + $0x350] sm:$0xf] %v5371
  %5380 = vst [vmem:[#allocation2 + $0x358] sm:$0xf] %v5372
  %5381 = vst [vmem:[#allocation2 + $0x360] sm:$0xf] %v5373
  %5382 = vst [vmem:[#allocation2 + $0x368] sm:$0xf] %v5374
  %5383 = vst [vmem:[#allocation2 + $0x370] sm:$0xf] %v5375
  %5384 = vst [vmem:[#allocation2 + $0x378] sm:$0xf] %v5376
  %5385 = vst [vmem:[#allocation2 + $0x340] sm:$0xf0] 0.0
  %5386 = vst [vmem:[#allocation2 + $0x348] sm:$0xf0] 0.0
  %5387 = vst [vmem:[#allocation2 + $0x350] sm:$0xf0] 0.0
  %5388 = vst [vmem:[#allocation2 + $0x358] sm:$0xf0] 0.0
  %5389 = vst [vmem:[#allocation2 + $0x360] sm:$0xf0] 0.0
  %5390 = vst [vmem:[#allocation2 + $0x368] sm:$0xf0] 0.0
  %5391 = vst [vmem:[#allocation2 + $0x370] sm:$0xf0] 0.0
  %5392 = vst [vmem:[#allocation2 + $0x378] sm:$0xf0] 0.0
  %v5393 = vld [vmem:[%s6] sm:$0xff]
  %v5394 = vld [vmem:[#allocation2] sm:$0xff]
  %v5395 = vld [vmem:[#allocation2 + $0x8] sm:$0xff]
  %v5396 = vld [vmem:[#allocation2 + $0x10] sm:$0xff]
  %v5397 = vld [vmem:[#allocation2 + $0x18] sm:$0xff]
  %v5398 = vld [vmem:[#allocation2 + $0x20] sm:$0xff]
  %v5399 = vld [vmem:[#allocation2 + $0x28] sm:$0xff]
  %v5400 = vld [vmem:[#allocation2 + $0x30] sm:$0xff]
  %v5401 = vld [vmem:[#allocation2 + $0x38] sm:$0xff]
  %v5402 = vld [vmem:[#allocation2 + $0x40] sm:$0xff]
  %v5403 = vld [vmem:[#allocation2 + $0x48] sm:$0xff]
  %v5404 = vld [vmem:[#allocation2 + $0x50] sm:$0xff]
  %v5405 = vld [vmem:[#allocation2 + $0x58] sm:$0xff]
  %v5406 = vld [vmem:[#allocation2 + $0x60] sm:$0xff]
  %v5407 = vld [vmem:[#allocation2 + $0x68] sm:$0xff]
  %v5408 = vld [vmem:[#allocation2 + $0x70] sm:$0xff]
  %v5409 = vld [vmem:[#allocation2 + $0x78] sm:$0xff]
  %v5410 = vld [vmem:[#allocation2 + $0x80] sm:$0xff]
  %v5411 = vld [vmem:[#allocation2 + $0x88] sm:$0xff]
  %v5412 = vld [vmem:[#allocation2 + $0x90] sm:$0xff]
  %v5413 = vld [vmem:[#allocation2 + $0x98] sm:$0xff]
  %v5414 = vld [vmem:[#allocation2 + $0xa0] sm:$0xff]
  %v5415 = vld [vmem:[#allocation2 + $0xa8] sm:$0xff]
  %v5416 = vld [vmem:[#allocation2 + $0xb0] sm:$0xff]
  %v5417 = vld [vmem:[#allocation2 + $0xb8] sm:$0xff]
  %v5418 = vld [vmem:[#allocation2 + $0xc0] sm:$0xff]
  %v5419 = vld [vmem:[#allocation2 + $0xc8] sm:$0xff]
  %v5420 = vld [vmem:[#allocation2 + $0xd0] sm:$0xff]
  %v5421 = vld [vmem:[#allocation2 + $0xd8] sm:$0xff]
  %v5422 = vld [vmem:[#allocation2 + $0xe0] sm:$0xff]
  %v5423 = vld [vmem:[#allocation2 + $0xe8] sm:$0xff]
  %v5424 = vld [vmem:[#allocation2 + $0xf0] sm:$0xff]
  %v5425 = vld [vmem:[#allocation2 + $0xf8] sm:$0xff]
  %v5426 = vld [vmem:[#allocation2 + $0x100] sm:$0xff]
  %v5427 = vld [vmem:[#allocation2 + $0x108] sm:$0xff]
  %v5428 = vld [vmem:[#allocation2 + $0x110] sm:$0xff]
  %v5429 = vld [vmem:[#allocation2 + $0x118] sm:$0xff]
  %v5430 = vld [vmem:[#allocation2 + $0x120] sm:$0xff]
  %v5431 = vld [vmem:[#allocation2 + $0x128] sm:$0xff]
  %v5432 = vld [vmem:[#allocation2 + $0x130] sm:$0xff]
  %v5433 = vld [vmem:[#allocation2 + $0x138] sm:$0xff]
  %v5434 = vld [vmem:[#allocation2 + $0x140] sm:$0xff]
  %v5435 = vld [vmem:[#allocation2 + $0x148] sm:$0xff]
  %v5436 = vld [vmem:[#allocation2 + $0x150] sm:$0xff]
  %v5437 = vld [vmem:[#allocation2 + $0x158] sm:$0xff]
  %v5438 = vld [vmem:[#allocation2 + $0x160] sm:$0xff]
  %v5439 = vld [vmem:[#allocation2 + $0x168] sm:$0xff]
  %v5440 = vld [vmem:[#allocation2 + $0x170] sm:$0xff]
  %v5441 = vld [vmem:[#allocation2 + $0x178] sm:$0xff]
  %v5442 = vld [vmem:[#allocation2 + $0x180] sm:$0xff]
  %v5443 = vld [vmem:[#allocation2 + $0x188] sm:$0xff]
  %v5444 = vld [vmem:[#allocation2 + $0x190] sm:$0xff]
  %v5445 = vld [vmem:[#allocation2 + $0x198] sm:$0xff]
  %v5446 = vld [vmem:[#allocation2 + $0x1a0] sm:$0xff]
  %v5447 = vld [vmem:[#allocation2 + $0x1a8] sm:$0xff]
  %v5448 = vld [vmem:[#allocation2 + $0x1b0] sm:$0xff]
  %v5449 = vld [vmem:[#allocation2 + $0x1b8] sm:$0xff]
  %v5450 = vld [vmem:[#allocation2 + $0x1c0] sm:$0xff]
  %v5451 = vld [vmem:[#allocation2 + $0x1c8] sm:$0xff]
  %v5452 = vld [vmem:[#allocation2 + $0x1d0] sm:$0xff]
  %v5453 = vld [vmem:[#allocation2 + $0x1d8] sm:$0xff]
  %v5454 = vld [vmem:[#allocation2 + $0x1e0] sm:$0xff]
  %v5455 = vld [vmem:[#allocation2 + $0x1e8] sm:$0xff]
  %v5456 = vld [vmem:[#allocation2 + $0x1f0] sm:$0xff]
  %v5457 = vld [vmem:[#allocation2 + $0x1f8] sm:$0xff]
  %v5458 = vld [vmem:[#allocation2 + $0x200] sm:$0xff]
  %v5459 = vld [vmem:[#allocation2 + $0x208] sm:$0xff]
  %v5460 = vld [vmem:[#allocation2 + $0x210] sm:$0xff]
  %v5461 = vld [vmem:[#allocation2 + $0x218] sm:$0xff]
  %v5462 = vld [vmem:[#allocation2 + $0x220] sm:$0xff]
  %v5463 = vld [vmem:[#allocation2 + $0x228] sm:$0xff]
  %v5464 = vld [vmem:[#allocation2 + $0x230] sm:$0xff]
  %v5465 = vld [vmem:[#allocation2 + $0x238] sm:$0xff]
  %v5466 = vld [vmem:[#allocation2 + $0x240] sm:$0xff]
  %v5467 = vld [vmem:[#allocation2 + $0x248] sm:$0xff]
  %v5468 = vld [vmem:[#allocation2 + $0x250] sm:$0xff]
  %v5469 = vld [vmem:[#allocation2 + $0x258] sm:$0xff]
  %v5470 = vld [vmem:[#allocation2 + $0x260] sm:$0xff]
  %v5471 = vld [vmem:[#allocation2 + $0x268] sm:$0xff]
  %v5472 = vld [vmem:[#allocation2 + $0x270] sm:$0xff]
  %v5473 = vld [vmem:[#allocation2 + $0x278] sm:$0xff]
  %v5474 = vld [vmem:[#allocation2 + $0x280] sm:$0xff]
  %v5475 = vld [vmem:[#allocation2 + $0x288] sm:$0xff]
  %v5476 = vld [vmem:[#allocation2 + $0x290] sm:$0xff]
  %v5477 = vld [vmem:[#allocation2 + $0x298] sm:$0xff]
  %v5478 = vld [vmem:[#allocation2 + $0x2a0] sm:$0xff]
  %v5479 = vld [vmem:[#allocation2 + $0x2a8] sm:$0xff]
  %v5480 = vld [vmem:[#allocation2 + $0x2b0] sm:$0xff]
  %v5481 = vld [vmem:[#allocation2 + $0x2b8] sm:$0xff]
  %v5482 = vld [vmem:[#allocation2 + $0x2c0] sm:$0xff]
  %v5483 = vld [vmem:[#allocation2 + $0x2c8] sm:$0xff]
  %v5484 = vld [vmem:[#allocation2 + $0x2d0] sm:$0xff]
  %v5485 = vld [vmem:[#allocation2 + $0x2d8] sm:$0xff]
  %v5486 = vld [vmem:[#allocation2 + $0x2e0] sm:$0xff]
  %v5487 = vld [vmem:[#allocation2 + $0x2e8] sm:$0xff]
  %v5488 = vld [vmem:[#allocation2 + $0x2f0] sm:$0xff]
  %v5489 = vld [vmem:[#allocation2 + $0x2f8] sm:$0xff]
  %v5490 = vld [vmem:[#allocation2 + $0x300] sm:$0xff]
  %v5491 = vld [vmem:[#allocation2 + $0x308] sm:$0xff]
  %v5492 = vld [vmem:[#allocation2 + $0x310] sm:$0xff]
  %v5493 = vld [vmem:[#allocation2 + $0x318] sm:$0xff]
  %v5494 = vld [vmem:[#allocation2 + $0x320] sm:$0xff]
  %v5495 = vld [vmem:[#allocation2 + $0x328] sm:$0xff]
  %v5496 = vld [vmem:[#allocation2 + $0x330] sm:$0xff]
  %v5497 = vld [vmem:[#allocation2 + $0x338] sm:$0xff]
  %v5498 = vld [vmem:[#allocation2 + $0x340] sm:$0xff]
  %v5499 = vld [vmem:[#allocation2 + $0x348] sm:$0xff]
  %v5500 = vld [vmem:[#allocation2 + $0x350] sm:$0xff]
  %v5501 = vld [vmem:[#allocation2 + $0x358] sm:$0xff]
  %v5502 = vld [vmem:[#allocation2 + $0x360] sm:$0xff]
  %v5503 = vld [vmem:[#allocation2 + $0x368] sm:$0xff]
  %v5504 = vld [vmem:[#allocation2 + $0x370] sm:$0xff]
  %v5505 = vld [vmem:[#allocation2 + $0x378] sm:$0xff]
  %v5507 = vsel %vm2485, %v5393, 0
  %5509 = vmatprep.subr.mxu0 0.0
  %5510 = vmatpush1.msra.mxu0 0.0
  %5511 = vmatprep.subr.mxu0 0.0
  %5512 = vmatpush1.msra.mxu0 0.0
  %5513 = vmatprep.subr.mxu0 %v5499
  %5514 = vmatpush1.msra.mxu0 %v5498
  %5515 = vmatprep.subr.mxu0 %v5491
  %5516 = vmatpush1.msra.mxu0 %v5490
  %5517 = vmatprep.subr.mxu0 %v5483
  %5518 = vmatpush1.msra.mxu0 %v5482
  %5519 = vmatprep.subr.mxu0 %v5475
  %5520 = vmatpush1.msra.mxu0 %v5474
  %5521 = vmatprep.subr.mxu0 %v5467
  %5522 = vmatpush1.msra.mxu0 %v5466
  %5523 = vmatprep.subr.mxu0 %v5459
  %5524 = vmatpush1.msra.mxu0 %v5458
  %5525 = vmatprep.subr.mxu0 %v5451
  %5526 = vmatpush1.msra.mxu0 %v5450
  %5527 = vmatprep.subr.mxu0 %v5443
  %5528 = vmatpush1.msra.mxu0 %v5442
  %5529 = vmatprep.subr.mxu0 %v5435
  %5530 = vmatpush1.msra.mxu0 %v5434
  %5531 = vmatprep.subr.mxu0 %v5427
  %5532 = vmatpush1.msra.mxu0 %v5426
  %5533 = vmatprep.subr.mxu0 %v5419
  %5534 = vmatpush1.msra.mxu0 %v5418
  %5535 = vmatprep.subr.mxu0 %v5411
  %5536 = vmatpush1.msra.mxu0 %v5410
  %5537 = vmatprep.subr.mxu0 %v5403
  %5538 = vmatpush1.msra.mxu0 %v5402
  %5539 = vmatprep.subr.mxu0 %v5395
  %5540 = vmatpush1.msra.mxu0 %v5394
  %5541 = vmatprep.subr.mxu0 0.0
  %5542 = vmatpush2.msra.mxu0 0.0
  %5543 = vmatprep.subr.mxu0 0.0
  %5544 = vmatpush2.msra.mxu0 0.0
  %5545 = vmatprep.subr.mxu0 0.0
  %5546 = vmatpush2.msra.mxu0 0.0
  %5547 = vmatprep.subr.mxu0 0.0
  %5548 = vmatpush2.msra.mxu0 0.0
  %5549 = vmatprep.subr.mxu0 0.0
  %5550 = vmatpush2.msra.mxu0 0.0
  %5551 = vmatprep.subr.mxu0 0.0
  %5552 = vmatpush2.msra.mxu0 0.0
  %5553 = vmatprep.subr.mxu0 0.0
  %5554 = vmatpush2.msra.mxu0 0.0
  %5555 = vmatprep.subr.mxu0 0.0
  %5556 = vmatpush2.msra.mxu0 0.0
  %5557 = vmatprep.subr.mxu0 0.0
  %5558 = vmatpush2.msra.mxu0 0.0
  %5559 = vmatprep.subr.mxu0 0.0
  %5560 = vmatpush2.msra.mxu0 0.0
  %5561 = vmatprep.subr.mxu0 0.0
  %5562 = vmatpush2.msra.mxu0 0.0
  %5563 = vmatprep.subr.mxu0 0.0
  %5564 = vmatpush2.msra.mxu0 0.0
  %5565 = vmatprep.subr.mxu0 0.0
  %5566 = vmatpush2.msra.mxu0 0.0
  %5567 = vmatprep.subr.mxu0 0.0
  %5568 = vmatpush2.msra.mxu0 0.0
  %5569 = vmatprep.subr.mxu0 0.0
  %5570 = vmatpush2.msra.mxu0 0.0
  %5571 = vmatprep.subr.mxu0 0.0
  %5572 = vmatpush2.msra.mxu0 0.0
  %5573 = vmatprep.mubr.f32.mxu0 0.0
  %5574 = vmatmul.mubr.f32.gmra.mxu0 %v5507
  %v5575 = vpop.f32.mrf.mxu0
  %v5576 = vadd.f32 0.0, %v5575
  %v5577 = vpop.f32.mrf.mxu0
  %v5578 = vadd.f32 0.0, %v5577
  %5579 = vdwg.mxu0
  %5580 = vmatprep.subr.mxu0 0.0
  %5581 = vmatpush1.msra.mxu0 0.0
  %5582 = vmatprep.subr.mxu0 0.0
  %5583 = vmatpush1.msra.mxu0 0.0
  %5584 = vmatprep.subr.mxu0 %v5501
  %5585 = vmatpush1.msra.mxu0 %v5500
  %5586 = vmatprep.subr.mxu0 %v5493
  %5587 = vmatpush1.msra.mxu0 %v5492
  %5588 = vmatprep.subr.mxu0 %v5485
  %5589 = vmatpush1.msra.mxu0 %v5484
  %5590 = vmatprep.subr.mxu0 %v5477
  %5591 = vmatpush1.msra.mxu0 %v5476
  %5592 = vmatprep.subr.mxu0 %v5469
  %5593 = vmatpush1.msra.mxu0 %v5468
  %5594 = vmatprep.subr.mxu0 %v5461
  %5595 = vmatpush1.msra.mxu0 %v5460
  %5596 = vmatprep.subr.mxu0 %v5453
  %5597 = vmatpush1.msra.mxu0 %v5452
  %5598 = vmatprep.subr.mxu0 %v5445
  %5599 = vmatpush1.msra.mxu0 %v5444
  %5600 = vmatprep.subr.mxu0 %v5437
  %5601 = vmatpush1.msra.mxu0 %v5436
  %5602 = vmatprep.subr.mxu0 %v5429
  %5603 = vmatpush1.msra.mxu0 %v5428
  %5604 = vmatprep.subr.mxu0 %v5421
  %5605 = vmatpush1.msra.mxu0 %v5420
  %5606 = vmatprep.subr.mxu0 %v5413
  %5607 = vmatpush1.msra.mxu0 %v5412
  %5608 = vmatprep.subr.mxu0 %v5405
  %5609 = vmatpush1.msra.mxu0 %v5404
  %5610 = vmatprep.subr.mxu0 %v5397
  %5611 = vmatpush1.msra.mxu0 %v5396
  %5612 = vmatprep.subr.mxu0 0.0
  %5613 = vmatpush2.msra.mxu0 0.0
  %5614 = vmatprep.subr.mxu0 0.0
  %5615 = vmatpush2.msra.mxu0 0.0
  %5616 = vmatprep.subr.mxu0 0.0
  %5617 = vmatpush2.msra.mxu0 0.0
  %5618 = vmatprep.subr.mxu0 0.0
  %5619 = vmatpush2.msra.mxu0 0.0
  %5620 = vmatprep.subr.mxu0 0.0
  %5621 = vmatpush2.msra.mxu0 0.0
  %5622 = vmatprep.subr.mxu0 0.0
  %5623 = vmatpush2.msra.mxu0 0.0
  %5624 = vmatprep.subr.mxu0 0.0
  %5625 = vmatpush2.msra.mxu0 0.0
  %5626 = vmatprep.subr.mxu0 0.0
  %5627 = vmatpush2.msra.mxu0 0.0
  %5628 = vmatprep.subr.mxu0 0.0
  %5629 = vmatpush2.msra.mxu0 0.0
  %5630 = vmatprep.subr.mxu0 0.0
  %5631 = vmatpush2.msra.mxu0 0.0
  %5632 = vmatprep.subr.mxu0 0.0
  %5633 = vmatpush2.msra.mxu0 0.0
  %5634 = vmatprep.subr.mxu0 0.0
  %5635 = vmatpush2.msra.mxu0 0.0
  %5636 = vmatprep.subr.mxu0 0.0
  %5637 = vmatpush2.msra.mxu0 0.0
  %5638 = vmatprep.subr.mxu0 0.0
  %5639 = vmatpush2.msra.mxu0 0.0
  %5640 = vmatprep.subr.mxu0 0.0
  %5641 = vmatpush2.msra.mxu0 0.0
  %5642 = vmatprep.subr.mxu0 0.0
  %5643 = vmatpush2.msra.mxu0 0.0
  %5644 = vmatprep.mubr.f32.mxu0 0.0
  %5645 = vmatmul.mubr.f32.gmra.mxu0 %v5507
  %v5646 = vpop.f32.mrf.mxu0
  %v5647 = vadd.f32 0.0, %v5646
  %v5648 = vpop.f32.mrf.mxu0
  %v5649 = vadd.f32 0.0, %v5648
  %5650 = vdwg.mxu0
  %5651 = vmatprep.subr.mxu0 0.0
  %5652 = vmatpush1.msra.mxu0 0.0
  %5653 = vmatprep.subr.mxu0 0.0
  %5654 = vmatpush1.msra.mxu0 0.0
  %5655 = vmatprep.subr.mxu0 %v5503
  %5656 = vmatpush1.msra.mxu0 %v5502
  %5657 = vmatprep.subr.mxu0 %v5495
  %5658 = vmatpush1.msra.mxu0 %v5494
  %5659 = vmatprep.subr.mxu0 %v5487
  %5660 = vmatpush1.msra.mxu0 %v5486
  %5661 = vmatprep.subr.mxu0 %v5479
  %5662 = vmatpush1.msra.mxu0 %v5478
  %5663 = vmatprep.subr.mxu0 %v5471
  %5664 = vmatpush1.msra.mxu0 %v5470
  %5665 = vmatprep.subr.mxu0 %v5463
  %5666 = vmatpush1.msra.mxu0 %v5462
  %5667 = vmatprep.subr.mxu0 %v5455
  %5668 = vmatpush1.msra.mxu0 %v5454
  %5669 = vmatprep.subr.mxu0 %v5447
  %5670 = vmatpush1.msra.mxu0 %v5446
  %5671 = vmatprep.subr.mxu0 %v5439
  %5672 = vmatpush1.msra.mxu0 %v5438
  %5673 = vmatprep.subr.mxu0 %v5431
  %5674 = vmatpush1.msra.mxu0 %v5430
  %5675 = vmatprep.subr.mxu0 %v5423
  %5676 = vmatpush1.msra.mxu0 %v5422
  %5677 = vmatprep.subr.mxu0 %v5415
  %5678 = vmatpush1.msra.mxu0 %v5414
  %5679 = vmatprep.subr.mxu0 %v5407
  %5680 = vmatpush1.msra.mxu0 %v5406
  %5681 = vmatprep.subr.mxu0 %v5399
  %5682 = vmatpush1.msra.mxu0 %v5398
  %5683 = vmatprep.subr.mxu0 0.0
  %5684 = vmatpush2.msra.mxu0 0.0
  %5685 = vmatprep.subr.mxu0 0.0
  %5686 = vmatpush2.msra.mxu0 0.0
  %5687 = vmatprep.subr.mxu0 0.0
  %5688 = vmatpush2.msra.mxu0 0.0
  %5689 = vmatprep.subr.mxu0 0.0
  %5690 = vmatpush2.msra.mxu0 0.0
  %5691 = vmatprep.subr.mxu0 0.0
  %5692 = vmatpush2.msra.mxu0 0.0
  %5693 = vmatprep.subr.mxu0 0.0
  %5694 = vmatpush2.msra.mxu0 0.0
  %5695 = vmatprep.subr.mxu0 0.0
  %5696 = vmatpush2.msra.mxu0 0.0
  %5697 = vmatprep.subr.mxu0 0.0
  %5698 = vmatpush2.msra.mxu0 0.0
  %5699 = vmatprep.subr.mxu0 0.0
  %5700 = vmatpush2.msra.mxu0 0.0
  %5701 = vmatprep.subr.mxu0 0.0
  %5702 = vmatpush2.msra.mxu0 0.0
  %5703 = vmatprep.subr.mxu0 0.0
  %5704 = vmatpush2.msra.mxu0 0.0
  %5705 = vmatprep.subr.mxu0 0.0
  %5706 = vmatpush2.msra.mxu0 0.0
  %5707 = vmatprep.subr.mxu0 0.0
  %5708 = vmatpush2.msra.mxu0 0.0
  %5709 = vmatprep.subr.mxu0 0.0
  %5710 = vmatpush2.msra.mxu0 0.0
  %5711 = vmatprep.subr.mxu0 0.0
  %5712 = vmatpush2.msra.mxu0 0.0
  %5713 = vmatprep.subr.mxu0 0.0
  %5714 = vmatpush2.msra.mxu0 0.0
  %5715 = vmatprep.mubr.f32.mxu0 0.0
  %5716 = vmatmul.mubr.f32.gmra.mxu0 %v5507
  %v5717 = vpop.f32.mrf.mxu0
  %v5718 = vadd.f32 0.0, %v5717
  %v5719 = vpop.f32.mrf.mxu0
  %v5720 = vadd.f32 0.0, %v5719
  %5721 = vdwg.mxu0
  %5722 = vmatprep.subr.mxu0 0.0
  %5723 = vmatpush1.msra.mxu0 0.0
  %5724 = vmatprep.subr.mxu0 0.0
  %5725 = vmatpush1.msra.mxu0 0.0
  %5726 = vmatprep.subr.mxu0 %v5505
  %5727 = vmatpush1.msra.mxu0 %v5504
  %5728 = vmatprep.subr.mxu0 %v5497
  %5729 = vmatpush1.msra.mxu0 %v5496
  %5730 = vmatprep.subr.mxu0 %v5489
  %5731 = vmatpush1.msra.mxu0 %v5488
  %5732 = vmatprep.subr.mxu0 %v5481
  %5733 = vmatpush1.msra.mxu0 %v5480
  %5734 = vmatprep.subr.mxu0 %v5473
  %5735 = vmatpush1.msra.mxu0 %v5472
  %5736 = vmatprep.subr.mxu0 %v5465
  %5737 = vmatpush1.msra.mxu0 %v5464
  %5738 = vmatprep.subr.mxu0 %v5457
  %5739 = vmatpush1.msra.mxu0 %v5456
  %5740 = vmatprep.subr.mxu0 %v5449
  %5741 = vmatpush1.msra.mxu0 %v5448
  %5742 = vmatprep.subr.mxu0 %v5441
  %5743 = vmatpush1.msra.mxu0 %v5440
  %5744 = vmatprep.subr.mxu0 %v5433
  %5745 = vmatpush1.msra.mxu0 %v5432
  %5746 = vmatprep.subr.mxu0 %v5425
  %5747 = vmatpush1.msra.mxu0 %v5424
  %5748 = vmatprep.subr.mxu0 %v5417
  %5749 = vmatpush1.msra.mxu0 %v5416
  %5750 = vmatprep.subr.mxu0 %v5409
  %5751 = vmatpush1.msra.mxu0 %v5408
  %5752 = vmatprep.subr.mxu0 %v5401
  %5753 = vmatpush1.msra.mxu0 %v5400
  %5754 = vmatprep.subr.mxu0 0.0
  %5755 = vmatpush2.msra.mxu0 0.0
  %5756 = vmatprep.subr.mxu0 0.0
  %5757 = vmatpush2.msra.mxu0 0.0
  %5758 = vmatprep.subr.mxu0 0.0
  %5759 = vmatpush2.msra.mxu0 0.0
  %5760 = vmatprep.subr.mxu0 0.0
  %5761 = vmatpush2.msra.mxu0 0.0
  %5762 = vmatprep.subr.mxu0 0.0
  %5763 = vmatpush2.msra.mxu0 0.0
  %5764 = vmatprep.subr.mxu0 0.0
  %5765 = vmatpush2.msra.mxu0 0.0
  %5766 = vmatprep.subr.mxu0 0.0
  %5767 = vmatpush2.msra.mxu0 0.0
  %5768 = vmatprep.subr.mxu0 0.0
  %5769 = vmatpush2.msra.mxu0 0.0
  %5770 = vmatprep.subr.mxu0 0.0
  %5771 = vmatpush2.msra.mxu0 0.0
  %5772 = vmatprep.subr.mxu0 0.0
  %5773 = vmatpush2.msra.mxu0 0.0
  %5774 = vmatprep.subr.mxu0 0.0
  %5775 = vmatpush2.msra.mxu0 0.0
  %5776 = vmatprep.subr.mxu0 0.0
  %5777 = vmatpush2.msra.mxu0 0.0
  %5778 = vmatprep.subr.mxu0 0.0
  %5779 = vmatpush2.msra.mxu0 0.0
  %5780 = vmatprep.subr.mxu0 0.0
  %5781 = vmatpush2.msra.mxu0 0.0
  %5782 = vmatprep.subr.mxu0 0.0
  %5783 = vmatpush2.msra.mxu0 0.0
  %5784 = vmatprep.subr.mxu0 0.0
  %5785 = vmatpush2.msra.mxu0 0.0
  %5786 = vmatprep.mubr.f32.mxu0 0.0
  %5787 = vmatmul.mubr.f32.gmra.mxu0 %v5507
  %v5788 = vpop.f32.mrf.mxu0
  %v5789 = vadd.f32 0.0, %v5788
  %v5790 = vpop.f32.mrf.mxu0
  %v5791 = vadd.f32 0.0, %v5790
  %5792 = vdwg.mxu0
  %v5793 = vmax.f32 %v5576, 0.0
  %v5794 = vmax.f32 %v5578, 0.0
  %v5795 = vmax.f32 %v5647, 0.0
  %v5796 = vmax.f32 %v5649, 0.0
  %v5797 = vmax.f32 %v5718, 0.0
  %v5798 = vmax.f32 %v5720, 0.0
  %v5799 = vmax.f32 %v5789, 0.0
  %v5800 = vmax.f32 %v5791, 0.0
  %v5801 = vmul.f32 %v5793, %v5793
  %v5802 = vmul.f32 %v5794, %v5794
  %v5803 = vmul.f32 %v5795, %v5795
  %v5804 = vmul.f32 %v5796, %v5796
  %v5805 = vmul.f32 %v5797, %v5797
  %v5806 = vmul.f32 %v5798, %v5798
  %v5807 = vmul.f32 %v5799, %v5799
  %v5808 = vmul.f32 %v5800, %v5800
  %v5809 = vld [vmem:[%s7] sm:$0xff]
  %v5810 = vld [vmem:[%s8] sm:$0xff]
  %v5811 = vld [vmem:[%s2] ss:$2 sm:$0xff]
  %v5813 = vlaneseq
  %v5814 = vshrl.u32 %v5813, 7
  %v5815 = vsub.s32 0, %v5814
  %v5816 = vrot.slane %v5811, %v5815
  %v5817 = vlaneseq
  %v5818 = vshrl.u32 %v5817, 7
  %v5819 = vsub.s32 1, %v5818
  %v5820 = vrot.slane %v5811, %v5819
  %v5821 = vlaneseq
  %v5822 = vshrl.u32 %v5821, 7
  %v5823 = vsub.s32 2, %v5822
  %v5824 = vrot.slane %v5811, %v5823
  %v5825 = vlaneseq
  %v5826 = vshrl.u32 %v5825, 7
  %v5827 = vsub.s32 3, %v5826
  %v5828 = vrot.slane %v5811, %v5827
  %v5829 = vlaneseq
  %v5830 = vshrl.u32 %v5829, 7
  %v5831 = vsub.s32 4, %v5830
  %v5832 = vrot.slane %v5811, %v5831
  %v5833 = vlaneseq
  %v5834 = vshrl.u32 %v5833, 7
  %v5835 = vsub.s32 5, %v5834
  %v5836 = vrot.slane %v5811, %v5835
  %v5837 = vlaneseq
  %v5838 = vshrl.u32 %v5837, 7
  %v5839 = vsub.s32 6, %v5838
  %v5840 = vrot.slane %v5811, %v5839
  %v5841 = vlaneseq
  %v5842 = vshrl.u32 %v5841, 7
  %v5843 = vsub.s32 7, %v5842
  %v5844 = vrot.slane %v5811, %v5843
  %v5853 = vmul.f32 %v5793, %v5816
  %v5854 = vmul.f32 %v5794, %v5820
  %v5855 = vmul.f32 %v5795, %v5824
  %v5856 = vmul.f32 %v5796, %v5828
  %v5857 = vmul.f32 %v5797, %v5832
  %v5858 = vmul.f32 %v5798, %v5836
  %v5859 = vmul.f32 %v5799, %v5840
  %v5860 = vmul.f32 %v5800, %v5844
  %v5861 = vadd.f32 %v5853, %v5854
  %v5862 = vadd.f32 %v5861, %v5855
  %v5863 = vadd.f32 %v5862, %v5856
  %v5864 = vadd.f32 %v5863, %v5857
  %v5865 = vadd.f32 %v5864, %v5858
  %v5866 = vadd.f32 %v5865, %v5859
  %v5867 = vadd.f32 %v5866, %v5860
  %5868 = vadd.xlane.f32.xlu0 %v5867
  %v5869 = vpop.xlane.xlu0 %5868
  %v5870 = vmul.f32 %v5801, %v5816
  %v5871 = vmul.f32 %v5802, %v5820
  %v5872 = vmul.f32 %v5803, %v5824
  %v5873 = vmul.f32 %v5804, %v5828
  %v5874 = vmul.f32 %v5805, %v5832
  %v5875 = vmul.f32 %v5806, %v5836
  %v5876 = vmul.f32 %v5807, %v5840
  %v5877 = vmul.f32 %v5808, %v5844
  %v5878 = vadd.f32 %v5870, %v5871
  %v5879 = vadd.f32 %v5878, %v5872
  %v5880 = vadd.f32 %v5879, %v5873
  %v5881 = vadd.f32 %v5880, %v5874
  %v5882 = vadd.f32 %v5881, %v5875
  %v5883 = vadd.f32 %v5882, %v5876
  %v5884 = vadd.f32 %v5883, %v5877
  %5885 = vadd.xlane.f32.xlu0 %v5884
  %v5886 = vpop.xlane.xlu0 %5885
  %v5887 = vmul.f32 %v5869, 0.001953125
  %v5888 = vmul.f32 %v5886, 0.001953125
  %v5889 = vmul.f32 %v5887, %v5887
  %v5890 = vsub.f32 %v5888, %v5889
  %v5891 = vmax.f32 %v5890, 0.0
  %v5892 = vadd.f32 %v5891, 1e-05
  %v5893 = vrsqrt.pop %v5892
  %v5894 = vmul.f32 %v5893, %v5809
  %5896 = vset.pattern.permute.xlu0 0
  %5897 = vperm.xlu0 %5896, %v5894
  %v5898 = vpop.permute.xlu0 %5897
  %v5900 = vmul.f32 %v5898, %v5816
  %v5901 = vmul.f32 %v5898, %v5820
  %v5902 = vmul.f32 %v5898, %v5824
  %v5903 = vmul.f32 %v5898, %v5828
  %v5904 = vmul.f32 %v5898, %v5832
  %v5905 = vmul.f32 %v5898, %v5836
  %v5906 = vmul.f32 %v5898, %v5840
  %v5907 = vmul.f32 %v5898, %v5844
  %v5908 = vadd.f32 %v5900, 0.0
  %v5909 = vadd.f32 %v5901, 0.0
  %v5910 = vadd.f32 %v5902, 0.0
  %v5911 = vadd.f32 %v5903, 0.0
  %v5912 = vadd.f32 %v5904, 0.0
  %v5913 = vadd.f32 %v5905, 0.0
  %v5914 = vadd.f32 %v5906, 0.0
  %v5915 = vadd.f32 %v5907, 0.0
  %v5916 = vmul.f32 %v5887, %v5894
  %v5917 = vsub.f32 %v5810, %v5916
  %5919 = vset.pattern.permute.xlu0 0
  %5920 = vperm.xlu0 %5919, %v5917
  %v5921 = vpop.permute.xlu0 %5920
  %v5923 = vmul.f32 %v5921, %v5816
  %v5924 = vmul.f32 %v5921, %v5820
  %v5925 = vmul.f32 %v5921, %v5824
  %v5926 = vmul.f32 %v5921, %v5828
  %v5927 = vmul.f32 %v5921, %v5832
  %v5928 = vmul.f32 %v5921, %v5836
  %v5929 = vmul.f32 %v5921, %v5840
  %v5930 = vmul.f32 %v5921, %v5844
  %v5931 = vadd.f32 %v5923, 0.0
  %v5932 = vadd.f32 %v5924, 0.0
  %v5933 = vadd.f32 %v5925, 0.0
  %v5934 = vadd.f32 %v5926, 0.0
  %v5935 = vadd.f32 %v5927, 0.0
  %v5936 = vadd.f32 %v5928, 0.0
  %v5937 = vadd.f32 %v5929, 0.0
  %v5938 = vadd.f32 %v5930, 0.0
  %v5939 = vld [vmem:[%s2936] ss:$2 sm:$0xff]
  %v5941 = vlaneseq
  %v5942 = vshrl.u32 %v5941, 7
  %v5943 = vsub.s32 0, %v5942
  %v5944 = vrot.slane %v5939, %v5943
  %v5945 = vlaneseq
  %v5946 = vshrl.u32 %v5945, 7
  %v5947 = vsub.s32 1, %v5946
  %v5948 = vrot.slane %v5939, %v5947
  %v5949 = vlaneseq
  %v5950 = vshrl.u32 %v5949, 7
  %v5951 = vsub.s32 2, %v5950
  %v5952 = vrot.slane %v5939, %v5951
  %v5953 = vlaneseq
  %v5954 = vshrl.u32 %v5953, 7
  %v5955 = vsub.s32 3, %v5954
  %v5956 = vrot.slane %v5939, %v5955
  %v5957 = vlaneseq
  %v5958 = vshrl.u32 %v5957, 7
  %v5959 = vsub.s32 4, %v5958
  %v5960 = vrot.slane %v5939, %v5959
  %v5961 = vlaneseq
  %v5962 = vshrl.u32 %v5961, 7
  %v5963 = vsub.s32 5, %v5962
  %v5964 = vrot.slane %v5939, %v5963
  %v5965 = vlaneseq
  %v5966 = vshrl.u32 %v5965, 7
  %v5967 = vsub.s32 6, %v5966
  %v5968 = vrot.slane %v5939, %v5967
  %v5969 = vlaneseq
  %v5970 = vshrl.u32 %v5969, 7
  %v5971 = vsub.s32 7, %v5970
  %v5972 = vrot.slane %v5939, %v5971
  %v5981 = vmul.f32 %v5793, %v5944
  %v5982 = vmul.f32 %v5794, %v5948
  %v5983 = vmul.f32 %v5795, %v5952
  %v5984 = vmul.f32 %v5796, %v5956
  %v5985 = vmul.f32 %v5797, %v5960
  %v5986 = vmul.f32 %v5798, %v5964
  %v5987 = vmul.f32 %v5799, %v5968
  %v5988 = vmul.f32 %v5800, %v5972
  %v5989 = vadd.f32 %v5981, %v5982
  %v5990 = vadd.f32 %v5989, %v5983
  %v5991 = vadd.f32 %v5990, %v5984
  %v5992 = vadd.f32 %v5991, %v5985
  %v5993 = vadd.f32 %v5992, %v5986
  %v5994 = vadd.f32 %v5993, %v5987
  %v5995 = vadd.f32 %v5994, %v5988
  %5996 = vadd.xlane.f32.xlu0 %v5995
  %v5997 = vpop.xlane.xlu0 %5996
  %v5998 = vmul.f32 %v5801, %v5944
  %v5999 = vmul.f32 %v5802, %v5948
  %v6000 = vmul.f32 %v5803, %v5952
  %v6001 = vmul.f32 %v5804, %v5956
  %v6002 = vmul.f32 %v5805, %v5960
  %v6003 = vmul.f32 %v5806, %v5964
  %v6004 = vmul.f32 %v5807, %v5968
  %v6005 = vmul.f32 %v5808, %v5972
  %v6006 = vadd.f32 %v5998, %v5999
  %v6007 = vadd.f32 %v6006, %v6000
  %v6008 = vadd.f32 %v6007, %v6001
  %v6009 = vadd.f32 %v6008, %v6002
  %v6010 = vadd.f32 %v6009, %v6003
  %v6011 = vadd.f32 %v6010, %v6004
  %v6012 = vadd.f32 %v6011, %v6005
  %6013 = vadd.xlane.f32.xlu0 %v6012
  %v6014 = vpop.xlane.xlu0 %6013
  %v6015 = vmul.f32 %v5997, 0.001953125
  %v6016 = vmul.f32 %v6014, 0.001953125
  %v6017 = vmul.f32 %v6015, %v6015
  %v6018 = vsub.f32 %v6016, %v6017
  %v6019 = vmax.f32 %v6018, 0.0
  %v6020 = vadd.f32 %v6019, 1e-05
  %v6021 = vrsqrt.pop %v6020
  %v6022 = vmul.f32 %v6021, %v5809
  %6024 = vset.pattern.permute.xlu0 0
  %6025 = vperm.xlu0 %6024, %v6022
  %v6026 = vpop.permute.xlu0 %6025
  %v6028 = vmul.f32 %v6026, %v5944
  %v6029 = vmul.f32 %v6026, %v5948
  %v6030 = vmul.f32 %v6026, %v5952
  %v6031 = vmul.f32 %v6026, %v5956
  %v6032 = vmul.f32 %v6026, %v5960
  %v6033 = vmul.f32 %v6026, %v5964
  %v6034 = vmul.f32 %v6026, %v5968
  %v6035 = vmul.f32 %v6026, %v5972
  %v6036 = vadd.f32 %v5908, %v6028
  %v6037 = vadd.f32 %v5909, %v6029
  %v6038 = vadd.f32 %v5910, %v6030
  %v6039 = vadd.f32 %v5911, %v6031
  %v6040 = vadd.f32 %v5912, %v6032
  %v6041 = vadd.f32 %v5913, %v6033
  %v6042 = vadd.f32 %v5914, %v6034
  %v6043 = vadd.f32 %v5915, %v6035
  %v6044 = vmul.f32 %v6015, %v6022
  %v6045 = vsub.f32 %v5810, %v6044
  %6047 = vset.pattern.permute.xlu0 0
  %6048 = vperm.xlu0 %6047, %v6045
  %v6049 = vpop.permute.xlu0 %6048
  %v6051 = vmul.f32 %v6049, %v5944
  %v6052 = vmul.f32 %v6049, %v5948
  %v6053 = vmul.f32 %v6049, %v5952
  %v6054 = vmul.f32 %v6049, %v5956
  %v6055 = vmul.f32 %v6049, %v5960
  %v6056 = vmul.f32 %v6049, %v5964
  %v6057 = vmul.f32 %v6049, %v5968
  %v6058 = vmul.f32 %v6049, %v5972
  %v6059 = vadd.f32 %v5931, %v6051
  %v6060 = vadd.f32 %v5932, %v6052
  %v6061 = vadd.f32 %v5933, %v6053
  %v6062 = vadd.f32 %v5934, %v6054
  %v6063 = vadd.f32 %v5935, %v6055
  %v6064 = vadd.f32 %v5936, %v6056
  %v6065 = vadd.f32 %v5937, %v6057
  %v6066 = vadd.f32 %v5938, %v6058
  %v6067 = vmul.f32 %v5793, %v6036
  %v6068 = vmul.f32 %v5794, %v6037
  %v6069 = vmul.f32 %v5795, %v6038
  %v6070 = vmul.f32 %v5796, %v6039
  %v6071 = vmul.f32 %v5797, %v6040
  %v6072 = vmul.f32 %v5798, %v6041
  %v6073 = vmul.f32 %v5799, %v6042
  %v6074 = vmul.f32 %v5800, %v6043
  %v6075 = vadd.f32 %v6067, %v6059
  %v6076 = vadd.f32 %v6068, %v6060
  %v6077 = vadd.f32 %v6069, %v6061
  %v6078 = vadd.f32 %v6070, %v6062
  %v6079 = vadd.f32 %v6071, %v6063
  %v6080 = vadd.f32 %v6072, %v6064
  %v6081 = vadd.f32 %v6073, %v6065
  %v6082 = vadd.f32 %v6074, %v6066
  %6083 = vst [vmem:[%s9] sm:$0xff] %v6075
  %6084 = vst [vmem:[%s9 + $0x8] sm:$0xff] %v6076
  %6085 = vst [vmem:[%s9 + $0x10] sm:$0xff] %v6077
  %6086 = vst [vmem:[%s9 + $0x18] sm:$0xff] %v6078
  %6087 = vst [vmem:[%s9 + $0x20] sm:$0xff] %v6079
  %6088 = vst [vmem:[%s9 + $0x28] sm:$0xff] %v6080
  %6089 = vst [vmem:[%s9 + $0x30] sm:$0xff] %v6081
  %6090 = vst [vmem:[%s9 + $0x38] sm:$0xff] %v6082
  // Predicated region
  $region38: #{_encoder_impl.1} parent=0 // pred_check
    _
  $region39: #{_encoder_impl.1} parent=0 // pred_check_branch
    %6092 = sbr.rel (0) target = $region41
  $region40: #{_encoder_impl.1} parent=0 // pred_region
    _
  $region41: #{_encoder_impl.1} parent=0 // pred_fallthru
    _
  // Predicated region
  $region42: #{_encoder_impl.1} parent=0 // pred_check
    _
  $region43: #{_encoder_impl.1} parent=0 // pred_check_branch
    %6094 = sbr.rel (0) target = $region45
  $region44: #{_encoder_impl.1} parent=0 // pred_region
    _
  $region45: #{_encoder_impl.1} parent=0 // pred_fallthru
    _

</llo_original>
